<compile_context>
chip_gen: v7x
topology: tpu7x:2x2x1
jax: 0.10.0
libtpu: 0.0.40
codegen_flags: <defaults>
</compile_context>

<pallas_src>
import functools

import jax
import jax.numpy as jnp
from jax.experimental import pallas as pl
from jax.experimental.pallas import tpu as pltpu

D_MODEL = 32
NHEAD = 4
DH = D_MODEL // NHEAD
DIM_FF = 64
EPS = 1e-5                              # nn.LayerNorm default eps
ATTN_SCALE = 1.0 / float(DH) ** 0.5     # python float -> inlined literal, never captured
LANE = 128


# ---------------------------------------------------------------------------
# Packed-parameter layout: every segment starts on a 128-lane boundary.
# ---------------------------------------------------------------------------
def _offsets(layout, align=LANE):
    offs, cur = {}, 0
    for name, width in layout:
        offs[name] = (cur, width)
        cur += -(-width // align) * align   # next segment starts lane-aligned
    return offs, cur


_E, _F = D_MODEL, DIM_FF
W_LAYOUT = (("sa_qkv", 3 * _E), ("ca_q", _E), ("ca_kv", 2 * _E),
            ("sa_out", _E), ("ca_out", _E), ("w1", _F))
B_LAYOUT = (("sa_qkv", 3 * _E), ("ca_q", _E), ("ca_kv", 2 * _E),
            ("sa_out", _E), ("ca_out", _E), ("b1", _F), ("b2", _E),
            ("g1", _E), ("bt1", _E), ("g2", _E), ("bt2", _E), ("g3", _E), ("bt3", _E))
W_OFF, W_COLS = _offsets(W_LAYOUT)   # (32, 768)  weight slab
B_OFF, B_COLS = _offsets(B_LAYOUT)   # (1, 1664)  bias / LayerNorm slab


# ---------------------------------------------------------------------------
# Shared math helpers (used by both kernel and pure-JAX reference)
# ---------------------------------------------------------------------------
def _layer_norm(x, gamma, beta):
    mu = jnp.mean(x, axis=-1, keepdims=True)
    var = jnp.mean((x - mu) ** 2, axis=-1, keepdims=True)
    return (x - mu) * jax.lax.rsqrt(var + EPS) * gamma + beta


# TODO(synk): torch F.gelu defaults to the exact erf GELU; the tanh approximation
# (max abs err ~3e-4 vs erf) is used to stay on ops guaranteed to lower in Mosaic.
def _gelu_tanh(x):
    c = 0.7978845608028654   # sqrt(2/pi)
    return 0.5 * x * (1.0 + jnp.tanh(c * (x + 0.044715 * (x * x * x))))


# ---------------------------------------------------------------------------
# Pallas kernel (single grid-less invocation over the whole problem)
# ---------------------------------------------------------------------------
def _decoder_kernel(kv_ref, q_ref, qpos_ref, w_ref, w2_ref, b_ref, out_ref, *, seq, batch):
    f32 = jnp.float32
    E, L, B = D_MODEL, seq, batch

    def wcol(name):                       # lane-aligned static ref slice -> (E, width)
        lo, width = W_OFF[name]
        return w_ref[:, lo:lo + width]

    def brow(name):                       # -> (1, width)
        lo, width = B_OFF[name]
        return b_ref[:, lo:lo + width]

    def block_attention(q_lin, k_lin, v_lin):
        """Block-diagonal (per-batch) multi-head attention on batch-major rows.

        q_lin/k_lin/v_lin: (B*L, E); rows [b*L, (b+1)*L) belong to batch b; q_lin is
        already scaled by 1/sqrt(DH).  Only same-batch attention is computed (no mask,
        no cross-batch score FLOPs).  B*NHEAD = 8 here, so the static Python loops
        unroll into a handful of tiny 2-D MXU dots (all slices are contiguous 2-D).
        """
        batch_outs = []
        for b in range(B):
            qb = q_lin[b * L:(b + 1) * L, :]
            kb = k_lin[b * L:(b + 1) * L, :]
            vb = v_lin[b * L:(b + 1) * L, :]
            head_outs = []
            for h in range(NHEAD):
                sl = slice(h * DH, (h + 1) * DH)
                s = jnp.dot(qb[:, sl], kb[:, sl].T, preferred_element_type=f32)
                s = s - jnp.max(s, axis=-1, keepdims=True)
                p = jnp.exp(s)
                p = p * pl.reciprocal(jnp.sum(p, axis=-1, keepdims=True), approx=True)
                head_outs.append(jnp.dot(p, vb[:, sl], preferred_element_type=f32))
            batch_outs.append(jnp.concatenate(head_outs, axis=-1))   # (L, E)
        return jnp.concatenate(batch_outs, axis=0)                    # (B*L, E)

    # Batch-major (B*L, E) activations, built once from the (L, B, E) inputs via
    # middle-index ref loads + sublane concat (no wrapper transposes, no 4-D ops).
    kv = jnp.concatenate([kv_ref[:, b, :] for b in range(B)], axis=0)
    q_in = jnp.concatenate([q_ref[:, b, :] + qpos_ref[:, b, :] for b in range(B)], axis=0)

    # ---- self-attention block (q = k = v = key_value), fused QKV projection ----
    qkv = jnp.dot(kv, wcol("sa_qkv"), preferred_element_type=f32) + brow("sa_qkv")
    attn = block_attention(qkv[:, :E] * ATTN_SCALE, qkv[:, E:2 * E], qkv[:, 2 * E:3 * E])
    tgt2 = jnp.dot(attn, wcol("sa_out"), preferred_element_type=f32) + brow("sa_out")
    kv = _layer_norm(kv + tgt2, brow("g1"), brow("bt1"))

    # ---- cross-attention block (query = query + query_pos, key = value = kv) ----
    q_ca = (jnp.dot(q_in, wcol("ca_q"), preferred_element_type=f32) + brow("ca_q")) * ATTN_SCALE
    kv_ca = jnp.dot(kv, wcol("ca_kv"), preferred_element_type=f32) + brow("ca_kv")
    attn = block_attention(q_ca, kv_ca[:, :E], kv_ca[:, E:2 * E])
    tgt2 = jnp.dot(attn, wcol("ca_out"), preferred_element_type=f32) + brow("ca_out")
    kv = _layer_norm(kv + tgt2, brow("g2"), brow("bt2"))

    # ---- feed-forward block ----
    h = _gelu_tanh(jnp.dot(kv, wcol("w1"), preferred_element_type=f32) + brow("b1"))
    tgt2 = jnp.dot(h, w2_ref[...], preferred_element_type=f32) + brow("b2")
    kv = _layer_norm(kv + tgt2, brow("g3"), brow("bt3"))

    # Scatter batch-major rows back to the (L, B, E) output.
    # TODO(synk): a lane-dense (4,128) output view would need an in-kernel relayout
    # that costs more than the masked 32-lane stores it saves at this size.
    for b in range(B):
        out_ref[:, b, :] = kv[b * L:(b + 1) * L, :]


# ---------------------------------------------------------------------------
# Host-side parameter packing -- run ONCE at init, not per forward.
# ---------------------------------------------------------------------------
def _pack_slab(pieces, offsets, total_cols, rows):
    slab = jnp.zeros((rows, total_cols), jnp.float32)
    for name, arr in pieces:
        lo, width = offsets[name]
        assert arr.shape == (rows, width), (name, arr.shape)
        slab = slab.at[:, lo:lo + width].set(arr.astype(jnp.float32))
    return slab


def pack_params(p):
    """Pre-transpose weights to (in, out) layout and place every segment at a
    128-lane-aligned column offset.  Hoisted out of the forward path."""
    E = D_MODEL
    w_pack = _pack_slab([
        ("sa_qkv", p["sa_w"].T),          # (E, 3E)  self-attn Wq|Wk|Wv
        ("ca_q",   p["ca_w"][:E, :].T),   # (E, E)   cross-attn Wq
        ("ca_kv",  p["ca_w"][E:, :].T),   # (E, 2E)  cross-attn Wk|Wv
        ("sa_out", p["sa_wo"].T),         # (E, E)
        ("ca_out", p["ca_wo"].T),         # (E, E)
        ("w1",     p["w1"].T),            # (E, F)
    ], W_OFF, W_COLS, E)
    b_pack = _pack_slab([
        ("sa_qkv", p["sa_b"]), ("ca_q", p["ca_b"][:, :E]), ("ca_kv", p["ca_b"][:, E:]),
        ("sa_out", p["sa_bo"]), ("ca_out", p["ca_bo"]),
        ("b1", p["b1"]), ("b2", p["b2"]),
        ("g1", p["g1"]), ("bt1", p["bt1"]), ("g2", p["g2"]), ("bt2", p["bt2"]),
        ("g3", p["g3"]), ("bt3", p["bt3"]),
    ], B_OFF, B_COLS, 1)
    w2_pack = p["w2"].T                   # (F, E)
    return w_pack, w2_pack, b_pack


def transformer_decoder_layer(key_value, query, query_pos, packed):
    """key_value/query/query_pos: (L, B, E) float32 -> (L, B, E) float32.
    `packed` = pack_params(params), computed once at init."""
    w_pack, w2_pack, b_pack = packed
    L, B, E = key_value.shape
    assert E == D_MODEL and query.shape == key_value.shape == query_pos.shape

    vmem = pl.BlockSpec(memory_space=pltpu.MemorySpace.VMEM)
    # Grid-less call: single invocation with all operands (~0.3 MB) resident in VMEM,
    # so there is no 1-trip pipeline scaffolding and no pointless double-buffering.
    return pl.pallas_call(
        functools.partial(_decoder_kernel, seq=L, batch=B),
        out_shape=jax.ShapeDtypeStruct((L, B, E), jnp.float32),
        in_specs=[vmem] * 6,
        out_specs=vmem,
    )(key_value, query, query_pos, w_pack, w2_pack, b_pack)


# ---------------------------------------------------------------------------
# Deterministic parameter init (shapes follow the nn.Module __init__, torch layout).
# ---------------------------------------------------------------------------
def init_params(key):
    ks = jax.random.split(key, 12)

    def init(k, shape, scale=0.05):
        return scale * jax.random.normal(k, shape, jnp.float32)

    E, F = D_MODEL, DIM_FF
    return {
        # self_attn: in_proj (3E, E) + bias, out_proj (E, E) + bias
        "sa_w": init(ks[0], (3 * E, E)), "sa_b": init(ks[1], (1, 3 * E)),
        "sa_wo": init(ks[2], (E, E)), "sa_bo": init(ks[3], (1, E)),
        # multihead_attn (cross attention)
        "ca_w": init(ks[4], (3 * E, E)), "ca_b": init(ks[5], (1, 3 * E)),
        "ca_wo": init(ks[6], (E, E)), "ca_bo": init(ks[7], (1, E)),
        # FFN
        "w1": init(ks[8], (F, E)), "b1": init(ks[9], (1, F)),
        "w2": init(ks[10], (E, F)), "b2": init(ks[11], (1, E)),
        # LayerNorms (weight=1, bias=0)
        "g1": jnp.ones((1, E), jnp.float32), "bt1": jnp.zeros((1, E), jnp.float32),
        "g2": jnp.ones((1, E), jnp.float32), "bt2": jnp.zeros((1, E), jnp.float32),
        "g3": jnp.ones((1, E), jnp.float32), "bt3": jnp.zeros((1, E), jnp.float32),
    }


# ---------------------------------------------------------------------------
# Pure-JAX reference (torch-style math, no Pallas, no packing)
# ---------------------------------------------------------------------------
def _mha_ref(q_in, k_in, v_in, w_qkv, b_qkv, w_o, b_o, nhead):
    L, E = q_in.shape
    dh = E // nhead
    wq, wk, wv = w_qkv[:E], w_qkv[E:2 * E], w_qkv[2 * E:]
    bq, bk, bv = b_qkv[:, :E], b_qkv[:, E:2 * E], b_qkv[:, 2 * E:]
    q = q_in @ wq.T + bq
    k = k_in @ wk.T + bk
    v = v_in @ wv.T + bv
    outs = []
    for h in range(nhead):
        qh = q[:, h * dh:(h + 1) * dh] * (dh ** -0.5)
        kh = k[:, h * dh:(h + 1) * dh]
        vh = v[:, h * dh:(h + 1) * dh]
        p = jax.nn.softmax(qh @ kh.T, axis=-1)
        outs.append(p @ vh)
    o = jnp.concatenate(outs, axis=-1)
    return o @ w_o.T + b_o


def _decoder_layer_single_ref(kv, q, qpos, p):
    tgt2 = _mha_ref(kv, kv, kv, p["sa_w"], p["sa_b"], p["sa_wo"], p["sa_bo"], NHEAD)
    kv = _layer_norm(kv + tgt2, p["g1"], p["bt1"])
    tgt2 = _mha_ref(q + qpos, kv, kv, p["ca_w"], p["ca_b"], p["ca_wo"], p["ca_bo"], NHEAD)
    kv = _layer_norm(kv + tgt2, p["g2"], p["bt2"])
    h = _gelu_tanh(kv @ p["w1"].T + p["b1"])
    tgt2 = h @ p["w2"].T + p["b2"]
    kv = _layer_norm(kv + tgt2, p["g3"], p["bt3"])
    return kv


def reference_forward(key_value, query, query_pos, params):
    kv = jnp.transpose(key_value, (1, 0, 2))
    q = jnp.transpose(query, (1, 0, 2))
    qp = jnp.transpose(query_pos, (1, 0, 2))
    out = jax.vmap(lambda a, b_, c: _decoder_layer_single_ref(a, b_, c, params))(kv, q, qp)
    return jnp.transpose(out, (1, 0, 2))


if __name__ == "__main__":
    L, B = 8, 2  # seq=8, batch=2, d_model=32, nhead=4, dim_feedforward=64

    key = jax.random.PRNGKey(0)
    k_kv, k_q, k_qp, k_param = jax.random.split(key, 4)
    key_value = jax.random.normal(k_kv, (L, B, D_MODEL), jnp.float32)
    query = jax.random.normal(k_q, (L, B, D_MODEL), jnp.float32)
    query_pos = jax.random.normal(k_qp, (L, B, D_MODEL), jnp.float32)

    params = init_params(k_param)
    packed = pack_params(params)            # hoisted out of the forward path (runs once)
    packed = jax.block_until_ready(packed)

    out = transformer_decoder_layer(key_value, query, query_pos, packed)
    out = jax.block_until_ready(out)

    ref = reference_forward(key_value, query, query_pos, params)
    ref = jax.block_until_ready(ref)

    assert out.shape == (L, B, D_MODEL)
    max_diff = float(jnp.max(jnp.abs(out - ref)))
    assert max_diff < 1e-3, f"max abs diff = {max_diff}"

    print("KERNEL_OK")
</pallas_src>

<mosaic_0001>
module attributes {stable_mosaic.version = 11 : i64} {
  func.func @_decoder_kernel(%arg0: memref<8x2x32xf32, #tpu.memory_space<vmem>>, %arg1: memref<8x2x32xf32, #tpu.memory_space<vmem>>, %arg2: memref<8x2x32xf32, #tpu.memory_space<vmem>>, %arg3: memref<32x768xf32, #tpu.memory_space<vmem>>, %arg4: memref<64x32xf32, #tpu.memory_space<vmem>>, %arg5: memref<1x1664xf32, #tpu.memory_space<vmem>>, %arg6: memref<8x2x32xf32, #tpu.memory_space<vmem>>) attributes {dimension_semantics = [], scalar_prefetch = 0 : i64, scratch_operands = 0 : i64, tpu.core_type = #tpu.core_type<tc>} {
    %c0 = arith.constant 0 : index
    %c0_0 = arith.constant 0 : index
    %c0_1 = arith.constant 0 : index
    %0 = vector.load %arg0[%c0, %c0_0, %c0_1] : memref<8x2x32xf32, #tpu.memory_space<vmem>>, vector<8x1x32xf32>
    %1 = vector.shape_cast %0 : vector<8x1x32xf32> to vector<8x32xf32>
    %c0_2 = arith.constant 0 : index
    %c1 = arith.constant 1 : index
    %c0_3 = arith.constant 0 : index
    %2 = vector.load %arg0[%c0_2, %c1, %c0_3] : memref<8x2x32xf32, #tpu.memory_space<vmem>>, vector<8x1x32xf32>
    %3 = vector.shape_cast %2 : vector<8x1x32xf32> to vector<8x32xf32>
    %4 = tpu.concatenate %1, %3 in 0 : vector<8x32xf32>, vector<8x32xf32> -> vector<16x32xf32>
    %c0_4 = arith.constant 0 : index
    %c0_5 = arith.constant 0 : index
    %c0_6 = arith.constant 0 : index
    %5 = vector.load %arg1[%c0_4, %c0_5, %c0_6] : memref<8x2x32xf32, #tpu.memory_space<vmem>>, vector<8x1x32xf32>
    %6 = vector.shape_cast %5 : vector<8x1x32xf32> to vector<8x32xf32>
    %c0_7 = arith.constant 0 : index
    %c0_8 = arith.constant 0 : index
    %c0_9 = arith.constant 0 : index
    %7 = vector.load %arg2[%c0_7, %c0_8, %c0_9] : memref<8x2x32xf32, #tpu.memory_space<vmem>>, vector<8x1x32xf32>
    %8 = vector.shape_cast %7 : vector<8x1x32xf32> to vector<8x32xf32>
    %9 = arith.addf %6, %8 : vector<8x32xf32>
    %c0_10 = arith.constant 0 : index
    %c1_11 = arith.constant 1 : index
    %c0_12 = arith.constant 0 : index
    %10 = vector.load %arg1[%c0_10, %c1_11, %c0_12] : memref<8x2x32xf32, #tpu.memory_space<vmem>>, vector<8x1x32xf32>
    %11 = vector.shape_cast %10 : vector<8x1x32xf32> to vector<8x32xf32>
    %c0_13 = arith.constant 0 : index
    %c1_14 = arith.constant 1 : index
    %c0_15 = arith.constant 0 : index
    %12 = vector.load %arg2[%c0_13, %c1_14, %c0_15] : memref<8x2x32xf32, #tpu.memory_space<vmem>>, vector<8x1x32xf32>
    %13 = vector.shape_cast %12 : vector<8x1x32xf32> to vector<8x32xf32>
    %14 = arith.addf %11, %13 : vector<8x32xf32>
    %15 = tpu.concatenate %9, %14 in 0 : vector<8x32xf32>, vector<8x32xf32> -> vector<16x32xf32>
    %c0_16 = arith.constant 0 : index
    %c0_17 = arith.constant 0 : index
    %16 = vector.load %arg3[%c0_16, %c0_17] : memref<32x768xf32, #tpu.memory_space<vmem>>, vector<32x96xf32>
    %cst = arith.constant dense<0.000000e+00> : vector<16x96xf32>
    %17 = tpu.matmul %4, %16, %cst {dimension_numbers = #tpu.dot_dimension_numbers<[1], [0], [0], [1], [0, 0, 1, 1], [], []>} : vector<16x32xf32>, vector<32x96xf32>, vector<16x96xf32> -> vector<16x96xf32>
    %c0_18 = arith.constant 0 : index
    %c0_19 = arith.constant 0 : index
    %18 = vector.load %arg5[%c0_18, %c0_19] : memref<1x1664xf32, #tpu.memory_space<vmem>>, vector<1x96xf32>
    %19 = vector.broadcast %18 : vector<1x96xf32> to vector<16x96xf32>
    %20 = arith.addf %17, %19 : vector<16x96xf32>
    %21 = vector.extract_strided_slice %20 {offsets = [0, 0], sizes = [16, 32], strides = [1, 1]} : vector<16x96xf32> to vector<16x32xf32>
    %cst_20 = arith.constant 0.353553385 : f32
    %22 = vector.broadcast %cst_20 : f32 to vector<16x32xf32>
    %23 = arith.mulf %21, %22 : vector<16x32xf32>
    %24 = vector.extract_strided_slice %20 {offsets = [0, 32], sizes = [16, 32], strides = [1, 1]} : vector<16x96xf32> to vector<16x32xf32>
    %25 = vector.extract_strided_slice %20 {offsets = [0, 64], sizes = [16, 32], strides = [1, 1]} : vector<16x96xf32> to vector<16x32xf32>
    %26 = vector.extract_strided_slice %23 {offsets = [0, 0], sizes = [8, 32], strides = [1, 1]} : vector<16x32xf32> to vector<8x32xf32>
    %27 = vector.extract_strided_slice %24 {offsets = [0, 0], sizes = [8, 32], strides = [1, 1]} : vector<16x32xf32> to vector<8x32xf32>
    %28 = vector.extract_strided_slice %25 {offsets = [0, 0], sizes = [8, 32], strides = [1, 1]} : vector<16x32xf32> to vector<8x32xf32>
    %29 = vector.extract_strided_slice %26 {offsets = [0, 0], sizes = [8, 8], strides = [1, 1]} : vector<8x32xf32> to vector<8x8xf32>
    %30 = vector.extract_strided_slice %27 {offsets = [0, 0], sizes = [8, 8], strides = [1, 1]} : vector<8x32xf32> to vector<8x8xf32>
    %31 = tpu.transpose %30, [1, 0] : vector<8x8xf32> -> vector<8x8xf32>
    %cst_21 = arith.constant dense<0.000000e+00> : vector<8x8xf32>
    %32 = tpu.matmul %29, %31, %cst_21 {dimension_numbers = #tpu.dot_dimension_numbers<[1], [0], [0], [1], [0, 0, 1, 1], [], []>} : vector<8x8xf32>, vector<8x8xf32>, vector<8x8xf32> -> vector<8x8xf32>
    %cst_22 = arith.constant dense<0xFF800000> : vector<8xf32>
    %33 = vector.multi_reduction <maximumf>, %32, %cst_22 [1] : vector<8x8xf32> to vector<8xf32>
    %34 = vector.shape_cast %33 : vector<8xf32> to vector<8x1xf32>
    %35 = vector.broadcast %34 : vector<8x1xf32> to vector<8x8xf32>
    %36 = arith.subf %32, %35 : vector<8x8xf32>
    %37 = math.exp %36 : vector<8x8xf32>
    %cst_23 = arith.constant dense<0.000000e+00> : vector<8xf32>
    %38 = vector.multi_reduction <add>, %37, %cst_23 [1] : vector<8x8xf32> to vector<8xf32>
    %39 = vector.shape_cast %38 : vector<8xf32> to vector<8x1xf32>
    %40 = tpu.reciprocal %39 {approx = true} : vector<8x1xf32> -> vector<8x1xf32>
    %41 = vector.broadcast %40 : vector<8x1xf32> to vector<8x8xf32>
    %42 = arith.mulf %37, %41 : vector<8x8xf32>
    %43 = vector.extract_strided_slice %28 {offsets = [0, 0], sizes = [8, 8], strides = [1, 1]} : vector<8x32xf32> to vector<8x8xf32>
    %cst_24 = arith.constant dense<0.000000e+00> : vector<8x8xf32>
    %44 = tpu.matmul %42, %43, %cst_24 {dimension_numbers = #tpu.dot_dimension_numbers<[1], [0], [0], [1], [0, 0, 1, 1], [], []>} : vector<8x8xf32>, vector<8x8xf32>, vector<8x8xf32> -> vector<8x8xf32>
    %45 = vector.extract_strided_slice %26 {offsets = [0, 8], sizes = [8, 8], strides = [1, 1]} : vector<8x32xf32> to vector<8x8xf32>
    %46 = vector.extract_strided_slice %27 {offsets = [0, 8], sizes = [8, 8], strides = [1, 1]} : vector<8x32xf32> to vector<8x8xf32>
    %47 = tpu.transpose %46, [1, 0] : vector<8x8xf32> -> vector<8x8xf32>
    %cst_25 = arith.constant dense<0.000000e+00> : vector<8x8xf32>
    %48 = tpu.matmul %45, %47, %cst_25 {dimension_numbers = #tpu.dot_dimension_numbers<[1], [0], [0], [1], [0, 0, 1, 1], [], []>} : vector<8x8xf32>, vector<8x8xf32>, vector<8x8xf32> -> vector<8x8xf32>
    %cst_26 = arith.constant dense<0xFF800000> : vector<8xf32>
    %49 = vector.multi_reduction <maximumf>, %48, %cst_26 [1] : vector<8x8xf32> to vector<8xf32>
    %50 = vector.shape_cast %49 : vector<8xf32> to vector<8x1xf32>
    %51 = vector.broadcast %50 : vector<8x1xf32> to vector<8x8xf32>
    %52 = arith.subf %48, %51 : vector<8x8xf32>
    %53 = math.exp %52 : vector<8x8xf32>
    %cst_27 = arith.constant dense<0.000000e+00> : vector<8xf32>
    %54 = vector.multi_reduction <add>, %53, %cst_27 [1] : vector<8x8xf32> to vector<8xf32>
    %55 = vector.shape_cast %54 : vector<8xf32> to vector<8x1xf32>
    %56 = tpu.reciprocal %55 {approx = true} : vector<8x1xf32> -> vector<8x1xf32>
    %57 = vector.broadcast %56 : vector<8x1xf32> to vector<8x8xf32>
    %58 = arith.mulf %53, %57 : vector<8x8xf32>
    %59 = vector.extract_strided_slice %28 {offsets = [0, 8], sizes = [8, 8], strides = [1, 1]} : vector<8x32xf32> to vector<8x8xf32>
    %cst_28 = arith.constant dense<0.000000e+00> : vector<8x8xf32>
    %60 = tpu.matmul %58, %59, %cst_28 {dimension_numbers = #tpu.dot_dimension_numbers<[1], [0], [0], [1], [0, 0, 1, 1], [], []>} : vector<8x8xf32>, vector<8x8xf32>, vector<8x8xf32> -> vector<8x8xf32>
    %61 = vector.extract_strided_slice %26 {offsets = [0, 16], sizes = [8, 8], strides = [1, 1]} : vector<8x32xf32> to vector<8x8xf32>
    %62 = vector.extract_strided_slice %27 {offsets = [0, 16], sizes = [8, 8], strides = [1, 1]} : vector<8x32xf32> to vector<8x8xf32>
    %63 = tpu.transpose %62, [1, 0] : vector<8x8xf32> -> vector<8x8xf32>
    %cst_29 = arith.constant dense<0.000000e+00> : vector<8x8xf32>
    %64 = tpu.matmul %61, %63, %cst_29 {dimension_numbers = #tpu.dot_dimension_numbers<[1], [0], [0], [1], [0, 0, 1, 1], [], []>} : vector<8x8xf32>, vector<8x8xf32>, vector<8x8xf32> -> vector<8x8xf32>
    %cst_30 = arith.constant dense<0xFF800000> : vector<8xf32>
    %65 = vector.multi_reduction <maximumf>, %64, %cst_30 [1] : vector<8x8xf32> to vector<8xf32>
    %66 = vector.shape_cast %65 : vector<8xf32> to vector<8x1xf32>
    %67 = vector.broadcast %66 : vector<8x1xf32> to vector<8x8xf32>
    %68 = arith.subf %64, %67 : vector<8x8xf32>
    %69 = math.exp %68 : vector<8x8xf32>
    %cst_31 = arith.constant dense<0.000000e+00> : vector<8xf32>
    %70 = vector.multi_reduction <add>, %69, %cst_31 [1] : vector<8x8xf32> to vector<8xf32>
    %71 = vector.shape_cast %70 : vector<8xf32> to vector<8x1xf32>
    %72 = tpu.reciprocal %71 {approx = true} : vector<8x1xf32> -> vector<8x1xf32>
    %73 = vector.broadcast %72 : vector<8x1xf32> to vector<8x8xf32>
    %74 = arith.mulf %69, %73 : vector<8x8xf32>
    %75 = vector.extract_strided_slice %28 {offsets = [0, 16], sizes = [8, 8], strides = [1, 1]} : vector<8x32xf32> to vector<8x8xf32>
    %cst_32 = arith.constant dense<0.000000e+00> : vector<8x8xf32>
    %76 = tpu.matmul %74, %75, %cst_32 {dimension_numbers = #tpu.dot_dimension_numbers<[1], [0], [0], [1], [0, 0, 1, 1], [], []>} : vector<8x8xf32>, vector<8x8xf32>, vector<8x8xf32> -> vector<8x8xf32>
    %77 = vector.extract_strided_slice %26 {offsets = [0, 24], sizes = [8, 8], strides = [1, 1]} : vector<8x32xf32> to vector<8x8xf32>
    %78 = vector.extract_strided_slice %27 {offsets = [0, 24], sizes = [8, 8], strides = [1, 1]} : vector<8x32xf32> to vector<8x8xf32>
    %79 = tpu.transpose %78, [1, 0] : vector<8x8xf32> -> vector<8x8xf32>
    %cst_33 = arith.constant dense<0.000000e+00> : vector<8x8xf32>
    %80 = tpu.matmul %77, %79, %cst_33 {dimension_numbers = #tpu.dot_dimension_numbers<[1], [0], [0], [1], [0, 0, 1, 1], [], []>} : vector<8x8xf32>, vector<8x8xf32>, vector<8x8xf32> -> vector<8x8xf32>
    %cst_34 = arith.constant dense<0xFF800000> : vector<8xf32>
    %81 = vector.multi_reduction <maximumf>, %80, %cst_34 [1] : vector<8x8xf32> to vector<8xf32>
    %82 = vector.shape_cast %81 : vector<8xf32> to vector<8x1xf32>
    %83 = vector.broadcast %82 : vector<8x1xf32> to vector<8x8xf32>
    %84 = arith.subf %80, %83 : vector<8x8xf32>
    %85 = math.exp %84 : vector<8x8xf32>
    %cst_35 = arith.constant dense<0.000000e+00> : vector<8xf32>
    %86 = vector.multi_reduction <add>, %85, %cst_35 [1] : vector<8x8xf32> to vector<8xf32>
    %87 = vector.shape_cast %86 : vector<8xf32> to vector<8x1xf32>
    %88 = tpu.reciprocal %87 {approx = true} : vector<8x1xf32> -> vector<8x1xf32>
    %89 = vector.broadcast %88 : vector<8x1xf32> to vector<8x8xf32>
    %90 = arith.mulf %85, %89 : vector<8x8xf32>
    %91 = vector.extract_strided_slice %28 {offsets = [0, 24], sizes = [8, 8], strides = [1, 1]} : vector<8x32xf32> to vector<8x8xf32>
    %cst_36 = arith.constant dense<0.000000e+00> : vector<8x8xf32>
    %92 = tpu.matmul %90, %91, %cst_36 {dimension_numbers = #tpu.dot_dimension_numbers<[1], [0], [0], [1], [0, 0, 1, 1], [], []>} : vector<8x8xf32>, vector<8x8xf32>, vector<8x8xf32> -> vector<8x8xf32>
    %93 = tpu.concatenate %44, %60, %76, %92 in 1 : vector<8x8xf32>, vector<8x8xf32>, vector<8x8xf32>, vector<8x8xf32> -> vector<8x32xf32>
    %94 = vector.extract_strided_slice %23 {offsets = [8, 0], sizes = [8, 32], strides = [1, 1]} : vector<16x32xf32> to vector<8x32xf32>
    %95 = vector.extract_strided_slice %24 {offsets = [8, 0], sizes = [8, 32], strides = [1, 1]} : vector<16x32xf32> to vector<8x32xf32>
    %96 = vector.extract_strided_slice %25 {offsets = [8, 0], sizes = [8, 32], strides = [1, 1]} : vector<16x32xf32> to vector<8x32xf32>
    %97 = vector.extract_strided_slice %94 {offsets = [0, 0], sizes = [8, 8], strides = [1, 1]} : vector<8x32xf32> to vector<8x8xf32>
    %98 = vector.extract_strided_slice %95 {offsets = [0, 0], sizes = [8, 8], strides = [1, 1]} : vector<8x32xf32> to vector<8x8xf32>
    %99 = tpu.transpose %98, [1, 0] : vector<8x8xf32> -> vector<8x8xf32>
    %cst_37 = arith.constant dense<0.000000e+00> : vector<8x8xf32>
    %100 = tpu.matmul %97, %99, %cst_37 {dimension_numbers = #tpu.dot_dimension_numbers<[1], [0], [0], [1], [0, 0, 1, 1], [], []>} : vector<8x8xf32>, vector<8x8xf32>, vector<8x8xf32> -> vector<8x8xf32>
    %cst_38 = arith.constant dense<0xFF800000> : vector<8xf32>
    %101 = vector.multi_reduction <maximumf>, %100, %cst_38 [1] : vector<8x8xf32> to vector<8xf32>
    %102 = vector.shape_cast %101 : vector<8xf32> to vector<8x1xf32>
    %103 = vector.broadcast %102 : vector<8x1xf32> to vector<8x8xf32>
    %104 = arith.subf %100, %103 : vector<8x8xf32>
    %105 = math.exp %104 : vector<8x8xf32>
    %cst_39 = arith.constant dense<0.000000e+00> : vector<8xf32>
    %106 = vector.multi_reduction <add>, %105, %cst_39 [1] : vector<8x8xf32> to vector<8xf32>
    %107 = vector.shape_cast %106 : vector<8xf32> to vector<8x1xf32>
    %108 = tpu.reciprocal %107 {approx = true} : vector<8x1xf32> -> vector<8x1xf32>
    %109 = vector.broadcast %108 : vector<8x1xf32> to vector<8x8xf32>
    %110 = arith.mulf %105, %109 : vector<8x8xf32>
    %111 = vector.extract_strided_slice %96 {offsets = [0, 0], sizes = [8, 8], strides = [1, 1]} : vector<8x32xf32> to vector<8x8xf32>
    %cst_40 = arith.constant dense<0.000000e+00> : vector<8x8xf32>
    %112 = tpu.matmul %110, %111, %cst_40 {dimension_numbers = #tpu.dot_dimension_numbers<[1], [0], [0], [1], [0, 0, 1, 1], [], []>} : vector<8x8xf32>, vector<8x8xf32>, vector<8x8xf32> -> vector<8x8xf32>
    %113 = vector.extract_strided_slice %94 {offsets = [0, 8], sizes = [8, 8], strides = [1, 1]} : vector<8x32xf32> to vector<8x8xf32>
    %114 = vector.extract_strided_slice %95 {offsets = [0, 8], sizes = [8, 8], strides = [1, 1]} : vector<8x32xf32> to vector<8x8xf32>
    %115 = tpu.transpose %114, [1, 0] : vector<8x8xf32> -> vector<8x8xf32>
    %cst_41 = arith.constant dense<0.000000e+00> : vector<8x8xf32>
    %116 = tpu.matmul %113, %115, %cst_41 {dimension_numbers = #tpu.dot_dimension_numbers<[1], [0], [0], [1], [0, 0, 1, 1], [], []>} : vector<8x8xf32>, vector<8x8xf32>, vector<8x8xf32> -> vector<8x8xf32>
    %cst_42 = arith.constant dense<0xFF800000> : vector<8xf32>
    %117 = vector.multi_reduction <maximumf>, %116, %cst_42 [1] : vector<8x8xf32> to vector<8xf32>
    %118 = vector.shape_cast %117 : vector<8xf32> to vector<8x1xf32>
    %119 = vector.broadcast %118 : vector<8x1xf32> to vector<8x8xf32>
    %120 = arith.subf %116, %119 : vector<8x8xf32>
    %121 = math.exp %120 : vector<8x8xf32>
    %cst_43 = arith.constant dense<0.000000e+00> : vector<8xf32>
    %122 = vector.multi_reduction <add>, %121, %cst_43 [1] : vector<8x8xf32> to vector<8xf32>
    %123 = vector.shape_cast %122 : vector<8xf32> to vector<8x1xf32>
    %124 = tpu.reciprocal %123 {approx = true} : vector<8x1xf32> -> vector<8x1xf32>
    %125 = vector.broadcast %124 : vector<8x1xf32> to vector<8x8xf32>
    %126 = arith.mulf %121, %125 : vector<8x8xf32>
    %127 = vector.extract_strided_slice %96 {offsets = [0, 8], sizes = [8, 8], strides = [1, 1]} : vector<8x32xf32> to vector<8x8xf32>
    %cst_44 = arith.constant dense<0.000000e+00> : vector<8x8xf32>
    %128 = tpu.matmul %126, %127, %cst_44 {dimension_numbers = #tpu.dot_dimension_numbers<[1], [0], [0], [1], [0, 0, 1, 1], [], []>} : vector<8x8xf32>, vector<8x8xf32>, vector<8x8xf32> -> vector<8x8xf32>
    %129 = vector.extract_strided_slice %94 {offsets = [0, 16], sizes = [8, 8], strides = [1, 1]} : vector<8x32xf32> to vector<8x8xf32>
    %130 = vector.extract_strided_slice %95 {offsets = [0, 16], sizes = [8, 8], strides = [1, 1]} : vector<8x32xf32> to vector<8x8xf32>
    %131 = tpu.transpose %130, [1, 0] : vector<8x8xf32> -> vector<8x8xf32>
    %cst_45 = arith.constant dense<0.000000e+00> : vector<8x8xf32>
    %132 = tpu.matmul %129, %131, %cst_45 {dimension_numbers = #tpu.dot_dimension_numbers<[1], [0], [0], [1], [0, 0, 1, 1], [], []>} : vector<8x8xf32>, vector<8x8xf32>, vector<8x8xf32> -> vector<8x8xf32>
    %cst_46 = arith.constant dense<0xFF800000> : vector<8xf32>
    %133 = vector.multi_reduction <maximumf>, %132, %cst_46 [1] : vector<8x8xf32> to vector<8xf32>
    %134 = vector.shape_cast %133 : vector<8xf32> to vector<8x1xf32>
    %135 = vector.broadcast %134 : vector<8x1xf32> to vector<8x8xf32>
    %136 = arith.subf %132, %135 : vector<8x8xf32>
    %137 = math.exp %136 : vector<8x8xf32>
    %cst_47 = arith.constant dense<0.000000e+00> : vector<8xf32>
    %138 = vector.multi_reduction <add>, %137, %cst_47 [1] : vector<8x8xf32> to vector<8xf32>
    %139 = vector.shape_cast %138 : vector<8xf32> to vector<8x1xf32>
    %140 = tpu.reciprocal %139 {approx = true} : vector<8x1xf32> -> vector<8x1xf32>
    %141 = vector.broadcast %140 : vector<8x1xf32> to vector<8x8xf32>
    %142 = arith.mulf %137, %141 : vector<8x8xf32>
    %143 = vector.extract_strided_slice %96 {offsets = [0, 16], sizes = [8, 8], strides = [1, 1]} : vector<8x32xf32> to vector<8x8xf32>
    %cst_48 = arith.constant dense<0.000000e+00> : vector<8x8xf32>
    %144 = tpu.matmul %142, %143, %cst_48 {dimension_numbers = #tpu.dot_dimension_numbers<[1], [0], [0], [1], [0, 0, 1, 1], [], []>} : vector<8x8xf32>, vector<8x8xf32>, vector<8x8xf32> -> vector<8x8xf32>
    %145 = vector.extract_strided_slice %94 {offsets = [0, 24], sizes = [8, 8], strides = [1, 1]} : vector<8x32xf32> to vector<8x8xf32>
    %146 = vector.extract_strided_slice %95 {offsets = [0, 24], sizes = [8, 8], strides = [1, 1]} : vector<8x32xf32> to vector<8x8xf32>
    %147 = tpu.transpose %146, [1, 0] : vector<8x8xf32> -> vector<8x8xf32>
    %cst_49 = arith.constant dense<0.000000e+00> : vector<8x8xf32>
    %148 = tpu.matmul %145, %147, %cst_49 {dimension_numbers = #tpu.dot_dimension_numbers<[1], [0], [0], [1], [0, 0, 1, 1], [], []>} : vector<8x8xf32>, vector<8x8xf32>, vector<8x8xf32> -> vector<8x8xf32>
    %cst_50 = arith.constant dense<0xFF800000> : vector<8xf32>
    %149 = vector.multi_reduction <maximumf>, %148, %cst_50 [1] : vector<8x8xf32> to vector<8xf32>
    %150 = vector.shape_cast %149 : vector<8xf32> to vector<8x1xf32>
    %151 = vector.broadcast %150 : vector<8x1xf32> to vector<8x8xf32>
    %152 = arith.subf %148, %151 : vector<8x8xf32>
    %153 = math.exp %152 : vector<8x8xf32>
    %cst_51 = arith.constant dense<0.000000e+00> : vector<8xf32>
    %154 = vector.multi_reduction <add>, %153, %cst_51 [1] : vector<8x8xf32> to vector<8xf32>
    %155 = vector.shape_cast %154 : vector<8xf32> to vector<8x1xf32>
    %156 = tpu.reciprocal %155 {approx = true} : vector<8x1xf32> -> vector<8x1xf32>
    %157 = vector.broadcast %156 : vector<8x1xf32> to vector<8x8xf32>
    %158 = arith.mulf %153, %157 : vector<8x8xf32>
    %159 = vector.extract_strided_slice %96 {offsets = [0, 24], sizes = [8, 8], strides = [1, 1]} : vector<8x32xf32> to vector<8x8xf32>
    %cst_52 = arith.constant dense<0.000000e+00> : vector<8x8xf32>
    %160 = tpu.matmul %158, %159, %cst_52 {dimension_numbers = #tpu.dot_dimension_numbers<[1], [0], [0], [1], [0, 0, 1, 1], [], []>} : vector<8x8xf32>, vector<8x8xf32>, vector<8x8xf32> -> vector<8x8xf32>
    %161 = tpu.concatenate %112, %128, %144, %160 in 1 : vector<8x8xf32>, vector<8x8xf32>, vector<8x8xf32>, vector<8x8xf32> -> vector<8x32xf32>
    %162 = tpu.concatenate %93, %161 in 0 : vector<8x32xf32>, vector<8x32xf32> -> vector<16x32xf32>
    %c0_53 = arith.constant 0 : index
    %c384 = arith.constant 384 : index
    %163 = vector.load %arg3[%c0_53, %c384] : memref<32x768xf32, #tpu.memory_space<vmem>>, vector<32x32xf32>
    %cst_54 = arith.constant dense<0.000000e+00> : vector<16x32xf32>
    %164 = tpu.matmul %162, %163, %cst_54 {dimension_numbers = #tpu.dot_dimension_numbers<[1], [0], [0], [1], [0, 0, 1, 1], [], []>} : vector<16x32xf32>, vector<32x32xf32>, vector<16x32xf32> -> vector<16x32xf32>
    %c0_55 = arith.constant 0 : index
    %c384_56 = arith.constant 384 : index
    %165 = vector.load %arg5[%c0_55, %c384_56] : memref<1x1664xf32, #tpu.memory_space<vmem>>, vector<1x32xf32>
    %166 = vector.broadcast %165 : vector<1x32xf32> to vector<16x32xf32>
    %167 = arith.addf %164, %166 : vector<16x32xf32>
    %168 = arith.addf %4, %167 : vector<16x32xf32>
    %c0_57 = arith.constant 0 : index
    %c896 = arith.constant 896 : index
    %169 = vector.load %arg5[%c0_57, %c896] : memref<1x1664xf32, #tpu.memory_space<vmem>>, vector<1x32xf32>
    %c0_58 = arith.constant 0 : index
    %c1024 = arith.constant 1024 : index
    %170 = vector.load %arg5[%c0_58, %c1024] : memref<1x1664xf32, #tpu.memory_space<vmem>>, vector<1x32xf32>
    %cst_59 = arith.constant dense<0.000000e+00> : vector<16xf32>
    %171 = vector.multi_reduction <add>, %168, %cst_59 [1] : vector<16x32xf32> to vector<16xf32>
    %172 = vector.shape_cast %171 : vector<16xf32> to vector<16x1xf32>
    %cst_60 = arith.constant 3.200000e+01 : f32
    %173 = vector.broadcast %cst_60 : f32 to vector<16x1xf32>
    %174 = arith.divf %172, %173 : vector<16x1xf32>
    %175 = vector.broadcast %174 : vector<16x1xf32> to vector<16x32xf32>
    %176 = arith.subf %168, %175 : vector<16x32xf32>
    %177 = arith.mulf %176, %176 : vector<16x32xf32>
    %cst_61 = arith.constant dense<0.000000e+00> : vector<16xf32>
    %178 = vector.multi_reduction <add>, %177, %cst_61 [1] : vector<16x32xf32> to vector<16xf32>
    %179 = vector.shape_cast %178 : vector<16xf32> to vector<16x1xf32>
    %cst_62 = arith.constant 3.200000e+01 : f32
    %180 = vector.broadcast %cst_62 : f32 to vector<16x1xf32>
    %181 = arith.divf %179, %180 : vector<16x1xf32>
    %182 = vector.broadcast %174 : vector<16x1xf32> to vector<16x32xf32>
    %183 = arith.subf %168, %182 : vector<16x32xf32>
    %cst_63 = arith.constant 9.99999974E-6 : f32
    %184 = vector.broadcast %cst_63 : f32 to vector<16x1xf32>
    %185 = arith.addf %181, %184 : vector<16x1xf32>
    %186 = math.rsqrt %185 : vector<16x1xf32>
    %187 = vector.broadcast %186 : vector<16x1xf32> to vector<16x32xf32>
    %188 = arith.mulf %183, %187 : vector<16x32xf32>
    %189 = vector.broadcast %169 : vector<1x32xf32> to vector<16x32xf32>
    %190 = arith.mulf %188, %189 : vector<16x32xf32>
    %191 = vector.broadcast %170 : vector<1x32xf32> to vector<16x32xf32>
    %192 = arith.addf %190, %191 : vector<16x32xf32>
    %c0_64 = arith.constant 0 : index
    %c128 = arith.constant 128 : index
    %193 = vector.load %arg3[%c0_64, %c128] : memref<32x768xf32, #tpu.memory_space<vmem>>, vector<32x32xf32>
    %cst_65 = arith.constant dense<0.000000e+00> : vector<16x32xf32>
    %194 = tpu.matmul %15, %193, %cst_65 {dimension_numbers = #tpu.dot_dimension_numbers<[1], [0], [0], [1], [0, 0, 1, 1], [], []>} : vector<16x32xf32>, vector<32x32xf32>, vector<16x32xf32> -> vector<16x32xf32>
    %c0_66 = arith.constant 0 : index
    %c128_67 = arith.constant 128 : index
    %195 = vector.load %arg5[%c0_66, %c128_67] : memref<1x1664xf32, #tpu.memory_space<vmem>>, vector<1x32xf32>
    %196 = vector.broadcast %195 : vector<1x32xf32> to vector<16x32xf32>
    %197 = arith.addf %194, %196 : vector<16x32xf32>
    %cst_68 = arith.constant 0.353553385 : f32
    %198 = vector.broadcast %cst_68 : f32 to vector<16x32xf32>
    %199 = arith.mulf %197, %198 : vector<16x32xf32>
    %c0_69 = arith.constant 0 : index
    %c256 = arith.constant 256 : index
    %200 = vector.load %arg3[%c0_69, %c256] : memref<32x768xf32, #tpu.memory_space<vmem>>, vector<32x64xf32>
    %cst_70 = arith.constant dense<0.000000e+00> : vector<16x64xf32>
    %201 = tpu.matmul %192, %200, %cst_70 {dimension_numbers = #tpu.dot_dimension_numbers<[1], [0], [0], [1], [0, 0, 1, 1], [], []>} : vector<16x32xf32>, vector<32x64xf32>, vector<16x64xf32> -> vector<16x64xf32>
    %c0_71 = arith.constant 0 : index
    %c256_72 = arith.constant 256 : index
    %202 = vector.load %arg5[%c0_71, %c256_72] : memref<1x1664xf32, #tpu.memory_space<vmem>>, vector<1x64xf32>
    %203 = vector.broadcast %202 : vector<1x64xf32> to vector<16x64xf32>
    %204 = arith.addf %201, %203 : vector<16x64xf32>
    %205 = vector.extract_strided_slice %204 {offsets = [0, 0], sizes = [16, 32], strides = [1, 1]} : vector<16x64xf32> to vector<16x32xf32>
    %206 = vector.extract_strided_slice %204 {offsets = [0, 32], sizes = [16, 32], strides = [1, 1]} : vector<16x64xf32> to vector<16x32xf32>
    %207 = vector.extract_strided_slice %199 {offsets = [0, 0], sizes = [8, 32], strides = [1, 1]} : vector<16x32xf32> to vector<8x32xf32>
    %208 = vector.extract_strided_slice %205 {offsets = [0, 0], sizes = [8, 32], strides = [1, 1]} : vector<16x32xf32> to vector<8x32xf32>
    %209 = vector.extract_strided_slice %206 {offsets = [0, 0], sizes = [8, 32], strides = [1, 1]} : vector<16x32xf32> to vector<8x32xf32>
    %210 = vector.extract_strided_slice %207 {offsets = [0, 0], sizes = [8, 8], strides = [1, 1]} : vector<8x32xf32> to vector<8x8xf32>
    %211 = vector.extract_strided_slice %208 {offsets = [0, 0], sizes = [8, 8], strides = [1, 1]} : vector<8x32xf32> to vector<8x8xf32>
    %212 = tpu.transpose %211, [1, 0] : vector<8x8xf32> -> vector<8x8xf32>
    %cst_73 = arith.constant dense<0.000000e+00> : vector<8x8xf32>
    %213 = tpu.matmul %210, %212, %cst_73 {dimension_numbers = #tpu.dot_dimension_numbers<[1], [0], [0], [1], [0, 0, 1, 1], [], []>} : vector<8x8xf32>, vector<8x8xf32>, vector<8x8xf32> -> vector<8x8xf32>
    %cst_74 = arith.constant dense<0xFF800000> : vector<8xf32>
    %214 = vector.multi_reduction <maximumf>, %213, %cst_74 [1] : vector<8x8xf32> to vector<8xf32>
    %215 = vector.shape_cast %214 : vector<8xf32> to vector<8x1xf32>
    %216 = vector.broadcast %215 : vector<8x1xf32> to vector<8x8xf32>
    %217 = arith.subf %213, %216 : vector<8x8xf32>
    %218 = math.exp %217 : vector<8x8xf32>
    %cst_75 = arith.constant dense<0.000000e+00> : vector<8xf32>
    %219 = vector.multi_reduction <add>, %218, %cst_75 [1] : vector<8x8xf32> to vector<8xf32>
    %220 = vector.shape_cast %219 : vector<8xf32> to vector<8x1xf32>
    %221 = tpu.reciprocal %220 {approx = true} : vector<8x1xf32> -> vector<8x1xf32>
    %222 = vector.broadcast %221 : vector<8x1xf32> to vector<8x8xf32>
    %223 = arith.mulf %218, %222 : vector<8x8xf32>
    %224 = vector.extract_strided_slice %209 {offsets = [0, 0], sizes = [8, 8], strides = [1, 1]} : vector<8x32xf32> to vector<8x8xf32>
    %cst_76 = arith.constant dense<0.000000e+00> : vector<8x8xf32>
    %225 = tpu.matmul %223, %224, %cst_76 {dimension_numbers = #tpu.dot_dimension_numbers<[1], [0], [0], [1], [0, 0, 1, 1], [], []>} : vector<8x8xf32>, vector<8x8xf32>, vector<8x8xf32> -> vector<8x8xf32>
    %226 = vector.extract_strided_slice %207 {offsets = [0, 8], sizes = [8, 8], strides = [1, 1]} : vector<8x32xf32> to vector<8x8xf32>
    %227 = vector.extract_strided_slice %208 {offsets = [0, 8], sizes = [8, 8], strides = [1, 1]} : vector<8x32xf32> to vector<8x8xf32>
    %228 = tpu.transpose %227, [1, 0] : vector<8x8xf32> -> vector<8x8xf32>
    %cst_77 = arith.constant dense<0.000000e+00> : vector<8x8xf32>
    %229 = tpu.matmul %226, %228, %cst_77 {dimension_numbers = #tpu.dot_dimension_numbers<[1], [0], [0], [1], [0, 0, 1, 1], [], []>} : vector<8x8xf32>, vector<8x8xf32>, vector<8x8xf32> -> vector<8x8xf32>
    %cst_78 = arith.constant dense<0xFF800000> : vector<8xf32>
    %230 = vector.multi_reduction <maximumf>, %229, %cst_78 [1] : vector<8x8xf32> to vector<8xf32>
    %231 = vector.shape_cast %230 : vector<8xf32> to vector<8x1xf32>
    %232 = vector.broadcast %231 : vector<8x1xf32> to vector<8x8xf32>
    %233 = arith.subf %229, %232 : vector<8x8xf32>
    %234 = math.exp %233 : vector<8x8xf32>
    %cst_79 = arith.constant dense<0.000000e+00> : vector<8xf32>
    %235 = vector.multi_reduction <add>, %234, %cst_79 [1] : vector<8x8xf32> to vector<8xf32>
    %236 = vector.shape_cast %235 : vector<8xf32> to vector<8x1xf32>
    %237 = tpu.reciprocal %236 {approx = true} : vector<8x1xf32> -> vector<8x1xf32>
    %238 = vector.broadcast %237 : vector<8x1xf32> to vector<8x8xf32>
    %239 = arith.mulf %234, %238 : vector<8x8xf32>
    %240 = vector.extract_strided_slice %209 {offsets = [0, 8], sizes = [8, 8], strides = [1, 1]} : vector<8x32xf32> to vector<8x8xf32>
    %cst_80 = arith.constant dense<0.000000e+00> : vector<8x8xf32>
    %241 = tpu.matmul %239, %240, %cst_80 {dimension_numbers = #tpu.dot_dimension_numbers<[1], [0], [0], [1], [0, 0, 1, 1], [], []>} : vector<8x8xf32>, vector<8x8xf32>, vector<8x8xf32> -> vector<8x8xf32>
    %242 = vector.extract_strided_slice %207 {offsets = [0, 16], sizes = [8, 8], strides = [1, 1]} : vector<8x32xf32> to vector<8x8xf32>
    %243 = vector.extract_strided_slice %208 {offsets = [0, 16], sizes = [8, 8], strides = [1, 1]} : vector<8x32xf32> to vector<8x8xf32>
    %244 = tpu.transpose %243, [1, 0] : vector<8x8xf32> -> vector<8x8xf32>
    %cst_81 = arith.constant dense<0.000000e+00> : vector<8x8xf32>
    %245 = tpu.matmul %242, %244, %cst_81 {dimension_numbers = #tpu.dot_dimension_numbers<[1], [0], [0], [1], [0, 0, 1, 1], [], []>} : vector<8x8xf32>, vector<8x8xf32>, vector<8x8xf32> -> vector<8x8xf32>
    %cst_82 = arith.constant dense<0xFF800000> : vector<8xf32>
    %246 = vector.multi_reduction <maximumf>, %245, %cst_82 [1] : vector<8x8xf32> to vector<8xf32>
    %247 = vector.shape_cast %246 : vector<8xf32> to vector<8x1xf32>
    %248 = vector.broadcast %247 : vector<8x1xf32> to vector<8x8xf32>
    %249 = arith.subf %245, %248 : vector<8x8xf32>
    %250 = math.exp %249 : vector<8x8xf32>
    %cst_83 = arith.constant dense<0.000000e+00> : vector<8xf32>
    %251 = vector.multi_reduction <add>, %250, %cst_83 [1] : vector<8x8xf32> to vector<8xf32>
    %252 = vector.shape_cast %251 : vector<8xf32> to vector<8x1xf32>
    %253 = tpu.reciprocal %252 {approx = true} : vector<8x1xf32> -> vector<8x1xf32>
    %254 = vector.broadcast %253 : vector<8x1xf32> to vector<8x8xf32>
    %255 = arith.mulf %250, %254 : vector<8x8xf32>
    %256 = vector.extract_strided_slice %209 {offsets = [0, 16], sizes = [8, 8], strides = [1, 1]} : vector<8x32xf32> to vector<8x8xf32>
    %cst_84 = arith.constant dense<0.000000e+00> : vector<8x8xf32>
    %257 = tpu.matmul %255, %256, %cst_84 {dimension_numbers = #tpu.dot_dimension_numbers<[1], [0], [0], [1], [0, 0, 1, 1], [], []>} : vector<8x8xf32>, vector<8x8xf32>, vector<8x8xf32> -> vector<8x8xf32>
    %258 = vector.extract_strided_slice %207 {offsets = [0, 24], sizes = [8, 8], strides = [1, 1]} : vector<8x32xf32> to vector<8x8xf32>
    %259 = vector.extract_strided_slice %208 {offsets = [0, 24], sizes = [8, 8], strides = [1, 1]} : vector<8x32xf32> to vector<8x8xf32>
    %260 = tpu.transpose %259, [1, 0] : vector<8x8xf32> -> vector<8x8xf32>
    %cst_85 = arith.constant dense<0.000000e+00> : vector<8x8xf32>
    %261 = tpu.matmul %258, %260, %cst_85 {dimension_numbers = #tpu.dot_dimension_numbers<[1], [0], [0], [1], [0, 0, 1, 1], [], []>} : vector<8x8xf32>, vector<8x8xf32>, vector<8x8xf32> -> vector<8x8xf32>
    %cst_86 = arith.constant dense<0xFF800000> : vector<8xf32>
    %262 = vector.multi_reduction <maximumf>, %261, %cst_86 [1] : vector<8x8xf32> to vector<8xf32>
    %263 = vector.shape_cast %262 : vector<8xf32> to vector<8x1xf32>
    %264 = vector.broadcast %263 : vector<8x1xf32> to vector<8x8xf32>
    %265 = arith.subf %261, %264 : vector<8x8xf32>
    %266 = math.exp %265 : vector<8x8xf32>
    %cst_87 = arith.constant dense<0.000000e+00> : vector<8xf32>
    %267 = vector.multi_reduction <add>, %266, %cst_87 [1] : vector<8x8xf32> to vector<8xf32>
    %268 = vector.shape_cast %267 : vector<8xf32> to vector<8x1xf32>
    %269 = tpu.reciprocal %268 {approx = true} : vector<8x1xf32> -> vector<8x1xf32>
    %270 = vector.broadcast %269 : vector<8x1xf32> to vector<8x8xf32>
    %271 = arith.mulf %266, %270 : vector<8x8xf32>
    %272 = vector.extract_strided_slice %209 {offsets = [0, 24], sizes = [8, 8], strides = [1, 1]} : vector<8x32xf32> to vector<8x8xf32>
    %cst_88 = arith.constant dense<0.000000e+00> : vector<8x8xf32>
    %273 = tpu.matmul %271, %272, %cst_88 {dimension_numbers = #tpu.dot_dimension_numbers<[1], [0], [0], [1], [0, 0, 1, 1], [], []>} : vector<8x8xf32>, vector<8x8xf32>, vector<8x8xf32> -> vector<8x8xf32>
    %274 = tpu.concatenate %225, %241, %257, %273 in 1 : vector<8x8xf32>, vector<8x8xf32>, vector<8x8xf32>, vector<8x8xf32> -> vector<8x32xf32>
    %275 = vector.extract_strided_slice %199 {offsets = [8, 0], sizes = [8, 32], strides = [1, 1]} : vector<16x32xf32> to vector<8x32xf32>
    %276 = vector.extract_strided_slice %205 {offsets = [8, 0], sizes = [8, 32], strides = [1, 1]} : vector<16x32xf32> to vector<8x32xf32>
    %277 = vector.extract_strided_slice %206 {offsets = [8, 0], sizes = [8, 32], strides = [1, 1]} : vector<16x32xf32> to vector<8x32xf32>
    %278 = vector.extract_strided_slice %275 {offsets = [0, 0], sizes = [8, 8], strides = [1, 1]} : vector<8x32xf32> to vector<8x8xf32>
    %279 = vector.extract_strided_slice %276 {offsets = [0, 0], sizes = [8, 8], strides = [1, 1]} : vector<8x32xf32> to vector<8x8xf32>
    %280 = tpu.transpose %279, [1, 0] : vector<8x8xf32> -> vector<8x8xf32>
    %cst_89 = arith.constant dense<0.000000e+00> : vector<8x8xf32>
    %281 = tpu.matmul %278, %280, %cst_89 {dimension_numbers = #tpu.dot_dimension_numbers<[1], [0], [0], [1], [0, 0, 1, 1], [], []>} : vector<8x8xf32>, vector<8x8xf32>, vector<8x8xf32> -> vector<8x8xf32>
    %cst_90 = arith.constant dense<0xFF800000> : vector<8xf32>
    %282 = vector.multi_reduction <maximumf>, %281, %cst_90 [1] : vector<8x8xf32> to vector<8xf32>
    %283 = vector.shape_cast %282 : vector<8xf32> to vector<8x1xf32>
    %284 = vector.broadcast %283 : vector<8x1xf32> to vector<8x8xf32>
    %285 = arith.subf %281, %284 : vector<8x8xf32>
    %286 = math.exp %285 : vector<8x8xf32>
    %cst_91 = arith.constant dense<0.000000e+00> : vector<8xf32>
    %287 = vector.multi_reduction <add>, %286, %cst_91 [1] : vector<8x8xf32> to vector<8xf32>
    %288 = vector.shape_cast %287 : vector<8xf32> to vector<8x1xf32>
    %289 = tpu.reciprocal %288 {approx = true} : vector<8x1xf32> -> vector<8x1xf32>
    %290 = vector.broadcast %289 : vector<8x1xf32> to vector<8x8xf32>
    %291 = arith.mulf %286, %290 : vector<8x8xf32>
    %292 = vector.extract_strided_slice %277 {offsets = [0, 0], sizes = [8, 8], strides = [1, 1]} : vector<8x32xf32> to vector<8x8xf32>
    %cst_92 = arith.constant dense<0.000000e+00> : vector<8x8xf32>
    %293 = tpu.matmul %291, %292, %cst_92 {dimension_numbers = #tpu.dot_dimension_numbers<[1], [0], [0], [1], [0, 0, 1, 1], [], []>} : vector<8x8xf32>, vector<8x8xf32>, vector<8x8xf32> -> vector<8x8xf32>
    %294 = vector.extract_strided_slice %275 {offsets = [0, 8], sizes = [8, 8], strides = [1, 1]} : vector<8x32xf32> to vector<8x8xf32>
    %295 = vector.extract_strided_slice %276 {offsets = [0, 8], sizes = [8, 8], strides = [1, 1]} : vector<8x32xf32> to vector<8x8xf32>
    %296 = tpu.transpose %295, [1, 0] : vector<8x8xf32> -> vector<8x8xf32>
    %cst_93 = arith.constant dense<0.000000e+00> : vector<8x8xf32>
    %297 = tpu.matmul %294, %296, %cst_93 {dimension_numbers = #tpu.dot_dimension_numbers<[1], [0], [0], [1], [0, 0, 1, 1], [], []>} : vector<8x8xf32>, vector<8x8xf32>, vector<8x8xf32> -> vector<8x8xf32>
    %cst_94 = arith.constant dense<0xFF800000> : vector<8xf32>
    %298 = vector.multi_reduction <maximumf>, %297, %cst_94 [1] : vector<8x8xf32> to vector<8xf32>
    %299 = vector.shape_cast %298 : vector<8xf32> to vector<8x1xf32>
    %300 = vector.broadcast %299 : vector<8x1xf32> to vector<8x8xf32>
    %301 = arith.subf %297, %300 : vector<8x8xf32>
    %302 = math.exp %301 : vector<8x8xf32>
    %cst_95 = arith.constant dense<0.000000e+00> : vector<8xf32>
    %303 = vector.multi_reduction <add>, %302, %cst_95 [1] : vector<8x8xf32> to vector<8xf32>
    %304 = vector.shape_cast %303 : vector<8xf32> to vector<8x1xf32>
    %305 = tpu.reciprocal %304 {approx = true} : vector<8x1xf32> -> vector<8x1xf32>
    %306 = vector.broadcast %305 : vector<8x1xf32> to vector<8x8xf32>
    %307 = arith.mulf %302, %306 : vector<8x8xf32>
    %308 = vector.extract_strided_slice %277 {offsets = [0, 8], sizes = [8, 8], strides = [1, 1]} : vector<8x32xf32> to vector<8x8xf32>
    %cst_96 = arith.constant dense<0.000000e+00> : vector<8x8xf32>
    %309 = tpu.matmul %307, %308, %cst_96 {dimension_numbers = #tpu.dot_dimension_numbers<[1], [0], [0], [1], [0, 0, 1, 1], [], []>} : vector<8x8xf32>, vector<8x8xf32>, vector<8x8xf32> -> vector<8x8xf32>
    %310 = vector.extract_strided_slice %275 {offsets = [0, 16], sizes = [8, 8], strides = [1, 1]} : vector<8x32xf32> to vector<8x8xf32>
    %311 = vector.extract_strided_slice %276 {offsets = [0, 16], sizes = [8, 8], strides = [1, 1]} : vector<8x32xf32> to vector<8x8xf32>
    %312 = tpu.transpose %311, [1, 0] : vector<8x8xf32> -> vector<8x8xf32>
    %cst_97 = arith.constant dense<0.000000e+00> : vector<8x8xf32>
    %313 = tpu.matmul %310, %312, %cst_97 {dimension_numbers = #tpu.dot_dimension_numbers<[1], [0], [0], [1], [0, 0, 1, 1], [], []>} : vector<8x8xf32>, vector<8x8xf32>, vector<8x8xf32> -> vector<8x8xf32>
    %cst_98 = arith.constant dense<0xFF800000> : vector<8xf32>
    %314 = vector.multi_reduction <maximumf>, %313, %cst_98 [1] : vector<8x8xf32> to vector<8xf32>
    %315 = vector.shape_cast %314 : vector<8xf32> to vector<8x1xf32>
    %316 = vector.broadcast %315 : vector<8x1xf32> to vector<8x8xf32>
    %317 = arith.subf %313, %316 : vector<8x8xf32>
    %318 = math.exp %317 : vector<8x8xf32>
    %cst_99 = arith.constant dense<0.000000e+00> : vector<8xf32>
    %319 = vector.multi_reduction <add>, %318, %cst_99 [1] : vector<8x8xf32> to vector<8xf32>
    %320 = vector.shape_cast %319 : vector<8xf32> to vector<8x1xf32>
    %321 = tpu.reciprocal %320 {approx = true} : vector<8x1xf32> -> vector<8x1xf32>
    %322 = vector.broadcast %321 : vector<8x1xf32> to vector<8x8xf32>
    %323 = arith.mulf %318, %322 : vector<8x8xf32>
    %324 = vector.extract_strided_slice %277 {offsets = [0, 16], sizes = [8, 8], strides = [1, 1]} : vector<8x32xf32> to vector<8x8xf32>
    %cst_100 = arith.constant dense<0.000000e+00> : vector<8x8xf32>
    %325 = tpu.matmul %323, %324, %cst_100 {dimension_numbers = #tpu.dot_dimension_numbers<[1], [0], [0], [1], [0, 0, 1, 1], [], []>} : vector<8x8xf32>, vector<8x8xf32>, vector<8x8xf32> -> vector<8x8xf32>
    %326 = vector.extract_strided_slice %275 {offsets = [0, 24], sizes = [8, 8], strides = [1, 1]} : vector<8x32xf32> to vector<8x8xf32>
    %327 = vector.extract_strided_slice %276 {offsets = [0, 24], sizes = [8, 8], strides = [1, 1]} : vector<8x32xf32> to vector<8x8xf32>
    %328 = tpu.transpose %327, [1, 0] : vector<8x8xf32> -> vector<8x8xf32>
    %cst_101 = arith.constant dense<0.000000e+00> : vector<8x8xf32>
    %329 = tpu.matmul %326, %328, %cst_101 {dimension_numbers = #tpu.dot_dimension_numbers<[1], [0], [0], [1], [0, 0, 1, 1], [], []>} : vector<8x8xf32>, vector<8x8xf32>, vector<8x8xf32> -> vector<8x8xf32>
    %cst_102 = arith.constant dense<0xFF800000> : vector<8xf32>
    %330 = vector.multi_reduction <maximumf>, %329, %cst_102 [1] : vector<8x8xf32> to vector<8xf32>
    %331 = vector.shape_cast %330 : vector<8xf32> to vector<8x1xf32>
    %332 = vector.broadcast %331 : vector<8x1xf32> to vector<8x8xf32>
    %333 = arith.subf %329, %332 : vector<8x8xf32>
    %334 = math.exp %333 : vector<8x8xf32>
    %cst_103 = arith.constant dense<0.000000e+00> : vector<8xf32>
    %335 = vector.multi_reduction <add>, %334, %cst_103 [1] : vector<8x8xf32> to vector<8xf32>
    %336 = vector.shape_cast %335 : vector<8xf32> to vector<8x1xf32>
    %337 = tpu.reciprocal %336 {approx = true} : vector<8x1xf32> -> vector<8x1xf32>
    %338 = vector.broadcast %337 : vector<8x1xf32> to vector<8x8xf32>
    %339 = arith.mulf %334, %338 : vector<8x8xf32>
    %340 = vector.extract_strided_slice %277 {offsets = [0, 24], sizes = [8, 8], strides = [1, 1]} : vector<8x32xf32> to vector<8x8xf32>
    %cst_104 = arith.constant dense<0.000000e+00> : vector<8x8xf32>
    %341 = tpu.matmul %339, %340, %cst_104 {dimension_numbers = #tpu.dot_dimension_numbers<[1], [0], [0], [1], [0, 0, 1, 1], [], []>} : vector<8x8xf32>, vector<8x8xf32>, vector<8x8xf32> -> vector<8x8xf32>
    %342 = tpu.concatenate %293, %309, %325, %341 in 1 : vector<8x8xf32>, vector<8x8xf32>, vector<8x8xf32>, vector<8x8xf32> -> vector<8x32xf32>
    %343 = tpu.concatenate %274, %342 in 0 : vector<8x32xf32>, vector<8x32xf32> -> vector<16x32xf32>
    %c0_105 = arith.constant 0 : index
    %c512 = arith.constant 512 : index
    %344 = vector.load %arg3[%c0_105, %c512] : memref<32x768xf32, #tpu.memory_space<vmem>>, vector<32x32xf32>
    %cst_106 = arith.constant dense<0.000000e+00> : vector<16x32xf32>
    %345 = tpu.matmul %343, %344, %cst_106 {dimension_numbers = #tpu.dot_dimension_numbers<[1], [0], [0], [1], [0, 0, 1, 1], [], []>} : vector<16x32xf32>, vector<32x32xf32>, vector<16x32xf32> -> vector<16x32xf32>
    %c0_107 = arith.constant 0 : index
    %c512_108 = arith.constant 512 : index
    %346 = vector.load %arg5[%c0_107, %c512_108] : memref<1x1664xf32, #tpu.memory_space<vmem>>, vector<1x32xf32>
    %347 = vector.broadcast %346 : vector<1x32xf32> to vector<16x32xf32>
    %348 = arith.addf %345, %347 : vector<16x32xf32>
    %349 = arith.addf %192, %348 : vector<16x32xf32>
    %c0_109 = arith.constant 0 : index
    %c1152 = arith.constant 1152 : index
    %350 = vector.load %arg5[%c0_109, %c1152] : memref<1x1664xf32, #tpu.memory_space<vmem>>, vector<1x32xf32>
    %c0_110 = arith.constant 0 : index
    %c1280 = arith.constant 1280 : index
    %351 = vector.load %arg5[%c0_110, %c1280] : memref<1x1664xf32, #tpu.memory_space<vmem>>, vector<1x32xf32>
    %cst_111 = arith.constant dense<0.000000e+00> : vector<16xf32>
    %352 = vector.multi_reduction <add>, %349, %cst_111 [1] : vector<16x32xf32> to vector<16xf32>
    %353 = vector.shape_cast %352 : vector<16xf32> to vector<16x1xf32>
    %cst_112 = arith.constant 3.200000e+01 : f32
    %354 = vector.broadcast %cst_112 : f32 to vector<16x1xf32>
    %355 = arith.divf %353, %354 : vector<16x1xf32>
    %356 = vector.broadcast %355 : vector<16x1xf32> to vector<16x32xf32>
    %357 = arith.subf %349, %356 : vector<16x32xf32>
    %358 = arith.mulf %357, %357 : vector<16x32xf32>
    %cst_113 = arith.constant dense<0.000000e+00> : vector<16xf32>
    %359 = vector.multi_reduction <add>, %358, %cst_113 [1] : vector<16x32xf32> to vector<16xf32>
    %360 = vector.shape_cast %359 : vector<16xf32> to vector<16x1xf32>
    %cst_114 = arith.constant 3.200000e+01 : f32
    %361 = vector.broadcast %cst_114 : f32 to vector<16x1xf32>
    %362 = arith.divf %360, %361 : vector<16x1xf32>
    %363 = vector.broadcast %355 : vector<16x1xf32> to vector<16x32xf32>
    %364 = arith.subf %349, %363 : vector<16x32xf32>
    %cst_115 = arith.constant 9.99999974E-6 : f32
    %365 = vector.broadcast %cst_115 : f32 to vector<16x1xf32>
    %366 = arith.addf %362, %365 : vector<16x1xf32>
    %367 = math.rsqrt %366 : vector<16x1xf32>
    %368 = vector.broadcast %367 : vector<16x1xf32> to vector<16x32xf32>
    %369 = arith.mulf %364, %368 : vector<16x32xf32>
    %370 = vector.broadcast %350 : vector<1x32xf32> to vector<16x32xf32>
    %371 = arith.mulf %369, %370 : vector<16x32xf32>
    %372 = vector.broadcast %351 : vector<1x32xf32> to vector<16x32xf32>
    %373 = arith.addf %371, %372 : vector<16x32xf32>
    %c0_116 = arith.constant 0 : index
    %c640 = arith.constant 640 : index
    %374 = vector.load %arg3[%c0_116, %c640] : memref<32x768xf32, #tpu.memory_space<vmem>>, vector<32x64xf32>
    %cst_117 = arith.constant dense<0.000000e+00> : vector<16x64xf32>
    %375 = tpu.matmul %373, %374, %cst_117 {dimension_numbers = #tpu.dot_dimension_numbers<[1], [0], [0], [1], [0, 0, 1, 1], [], []>} : vector<16x32xf32>, vector<32x64xf32>, vector<16x64xf32> -> vector<16x64xf32>
    %c0_118 = arith.constant 0 : index
    %c640_119 = arith.constant 640 : index
    %376 = vector.load %arg5[%c0_118, %c640_119] : memref<1x1664xf32, #tpu.memory_space<vmem>>, vector<1x64xf32>
    %377 = vector.broadcast %376 : vector<1x64xf32> to vector<16x64xf32>
    %378 = arith.addf %375, %377 : vector<16x64xf32>
    %cst_120 = arith.constant 5.000000e-01 : f32
    %379 = vector.broadcast %cst_120 : f32 to vector<16x64xf32>
    %380 = arith.mulf %379, %378 : vector<16x64xf32>
    %381 = arith.mulf %378, %378 : vector<16x64xf32>
    %382 = arith.mulf %381, %378 : vector<16x64xf32>
    %cst_121 = arith.constant 4.471500e-02 : f32
    %383 = vector.broadcast %cst_121 : f32 to vector<16x64xf32>
    %384 = arith.mulf %383, %382 : vector<16x64xf32>
    %385 = arith.addf %378, %384 : vector<16x64xf32>
    %cst_122 = arith.constant 0.797884583 : f32
    %386 = vector.broadcast %cst_122 : f32 to vector<16x64xf32>
    %387 = arith.mulf %386, %385 : vector<16x64xf32>
    %388 = math.tanh %387 : vector<16x64xf32>
    %cst_123 = arith.constant 1.000000e+00 : f32
    %389 = vector.broadcast %cst_123 : f32 to vector<16x64xf32>
    %390 = arith.addf %389, %388 : vector<16x64xf32>
    %391 = arith.mulf %380, %390 : vector<16x64xf32>
    %c0_124 = arith.constant 0 : index
    %c0_125 = arith.constant 0 : index
    %392 = vector.load %arg4[%c0_124, %c0_125] : memref<64x32xf32, #tpu.memory_space<vmem>>, vector<64x32xf32>
    %cst_126 = arith.constant dense<0.000000e+00> : vector<16x32xf32>
    %393 = tpu.matmul %391, %392, %cst_126 {dimension_numbers = #tpu.dot_dimension_numbers<[1], [0], [0], [1], [0, 0, 1, 1], [], []>} : vector<16x64xf32>, vector<64x32xf32>, vector<16x32xf32> -> vector<16x32xf32>
    %c0_127 = arith.constant 0 : index
    %c768 = arith.constant 768 : index
    %394 = vector.load %arg5[%c0_127, %c768] : memref<1x1664xf32, #tpu.memory_space<vmem>>, vector<1x32xf32>
    %395 = vector.broadcast %394 : vector<1x32xf32> to vector<16x32xf32>
    %396 = arith.addf %393, %395 : vector<16x32xf32>
    %397 = arith.addf %373, %396 : vector<16x32xf32>
    %c0_128 = arith.constant 0 : index
    %c1408 = arith.constant 1408 : index
    %398 = vector.load %arg5[%c0_128, %c1408] : memref<1x1664xf32, #tpu.memory_space<vmem>>, vector<1x32xf32>
    %c0_129 = arith.constant 0 : index
    %c1536 = arith.constant 1536 : index
    %399 = vector.load %arg5[%c0_129, %c1536] : memref<1x1664xf32, #tpu.memory_space<vmem>>, vector<1x32xf32>
    %cst_130 = arith.constant dense<0.000000e+00> : vector<16xf32>
    %400 = vector.multi_reduction <add>, %397, %cst_130 [1] : vector<16x32xf32> to vector<16xf32>
    %401 = vector.shape_cast %400 : vector<16xf32> to vector<16x1xf32>
    %cst_131 = arith.constant 3.200000e+01 : f32
    %402 = vector.broadcast %cst_131 : f32 to vector<16x1xf32>
    %403 = arith.divf %401, %402 : vector<16x1xf32>
    %404 = vector.broadcast %403 : vector<16x1xf32> to vector<16x32xf32>
    %405 = arith.subf %397, %404 : vector<16x32xf32>
    %406 = arith.mulf %405, %405 : vector<16x32xf32>
    %cst_132 = arith.constant dense<0.000000e+00> : vector<16xf32>
    %407 = vector.multi_reduction <add>, %406, %cst_132 [1] : vector<16x32xf32> to vector<16xf32>
    %408 = vector.shape_cast %407 : vector<16xf32> to vector<16x1xf32>
    %cst_133 = arith.constant 3.200000e+01 : f32
    %409 = vector.broadcast %cst_133 : f32 to vector<16x1xf32>
    %410 = arith.divf %408, %409 : vector<16x1xf32>
    %411 = vector.broadcast %403 : vector<16x1xf32> to vector<16x32xf32>
    %412 = arith.subf %397, %411 : vector<16x32xf32>
    %cst_134 = arith.constant 9.99999974E-6 : f32
    %413 = vector.broadcast %cst_134 : f32 to vector<16x1xf32>
    %414 = arith.addf %410, %413 : vector<16x1xf32>
    %415 = math.rsqrt %414 : vector<16x1xf32>
    %416 = vector.broadcast %415 : vector<16x1xf32> to vector<16x32xf32>
    %417 = arith.mulf %412, %416 : vector<16x32xf32>
    %418 = vector.broadcast %398 : vector<1x32xf32> to vector<16x32xf32>
    %419 = arith.mulf %417, %418 : vector<16x32xf32>
    %420 = vector.broadcast %399 : vector<1x32xf32> to vector<16x32xf32>
    %421 = arith.addf %419, %420 : vector<16x32xf32>
    %422 = vector.extract_strided_slice %421 {offsets = [0, 0], sizes = [8, 32], strides = [1, 1]} : vector<16x32xf32> to vector<8x32xf32>
    %c0_135 = arith.constant 0 : index
    %c0_136 = arith.constant 0 : index
    %c0_137 = arith.constant 0 : index
    %423 = vector.load %arg6[%c0_135, %c0_136, %c0_137] : memref<8x2x32xf32, #tpu.memory_space<vmem>>, vector<8x1x32xf32>
    %424 = vector.shape_cast %423 : vector<8x1x32xf32> to vector<8x32xf32>
    %425 = vector.shape_cast %422 : vector<8x32xf32> to vector<8x1x32xf32>
    tpu.vector_store %arg6[%c0_135, %c0_136, %c0_137], %425 {strides = array<i32>} : memref<8x2x32xf32, #tpu.memory_space<vmem>>, vector<8x1x32xf32>,
    %426 = vector.extract_strided_slice %421 {offsets = [8, 0], sizes = [8, 32], strides = [1, 1]} : vector<16x32xf32> to vector<8x32xf32>
    %c0_138 = arith.constant 0 : index
    %c1_139 = arith.constant 1 : index
    %c0_140 = arith.constant 0 : index
    %427 = vector.load %arg6[%c0_138, %c1_139, %c0_140] : memref<8x2x32xf32, #tpu.memory_space<vmem>>, vector<8x1x32xf32>
    %428 = vector.shape_cast %427 : vector<8x1x32xf32> to vector<8x32xf32>
    %429 = vector.shape_cast %426 : vector<8x32xf32> to vector<8x1x32xf32>
    tpu.vector_store %arg6[%c0_138, %c1_139, %c0_140], %429 {strides = array<i32>} : memref<8x2x32xf32, #tpu.memory_space<vmem>>, vector<8x1x32xf32>,
    return
  }
}

</mosaic_0001>

<llo_original>
// kernel: tpu_custom_call.1
$region0: #{tpu_custom_call.1}
  #allocation0 [shape = 'u32[]', space=smem, size = 0x4, offset = 0x4, fixed_abs, tag = 'smem constant byte address 0x4 - core index']
  #allocation1 [shape = 'u32[144,128]{1,0:T(1,128)}', space=vmem, size = 0x12000, scoped, tag = 'internal scratch']
  %s0 = inlined_call_operand.vmem [shape: f32[8,2,32], index: 0, kind: input, shape index: {}]
  %s1 = inlined_call_operand.vmem [shape: f32[8,2,32], index: 1, kind: input, shape index: {}]
  %s2 = inlined_call_operand.vmem [shape: f32[8,2,32], index: 2, kind: input, shape index: {}]
  %s3 = inlined_call_operand.hbm [shape: f32[32,768], index: 3, kind: input, shape index: {}]
  %s4 = inlined_call_operand.vmem [shape: f32[64,32], index: 4, kind: input, shape index: {}]
  %s5 = inlined_call_operand.vmem [shape: f32[1,1664], index: 5, kind: input, shape index: {}]
  %s6 = inlined_call_operand.hbm [shape: f32[8,2,32], index: 6, kind: output, shape index: {}]
  %s7 = sld [smem:[#allocation0]]
  $region38: #{tpu_custom_call.1} parent=0
    _
  %s9 = ssub.s32 1, %s7
  %s10 = scalar_select 0, %s9, %s7
  $region1: #{tpu_custom_call.1} parent=0
    #allocation2 [shape = 'u8[98304]{0}', space=vmem, size = 0x18000, scoped, tag = 'input window, operand 3, single buffered']
    #allocation3 [shape = 's32[1]{0}', space=sflag, size = 0x4, scoped, tag = 'scoped memory for tpu_custom_call.1']
    #allocation4 [shape = 's32[1]{0}', space=sflag, size = 0x4, scoped, tag = 'scoped memory for tpu_custom_call.1']
    #allocation5 [shape = 'u8[8192]{0}', space=vmem, size = 0x2000, scoped, tag = 'output window, operand 0, single buffered']
    %11 = vsyncpa [#allocation3], 0
    %12 = vsyncpa [#allocation4], 0
    // Predicated region
    $region2: #{tpu_custom_call.1} parent=1 // pred_check
      _
    $region3: #{tpu_custom_call.1} parent=1 // pred_check_branch
      %14 = sbr.rel (0) target = $region5
    $region4: #{tpu_custom_call.1} parent=1 // pred_region
      _
    $region5: #{tpu_custom_call.1} parent=1 // pred_fallthru
      _
    // Predicated region
    $region6: #{tpu_custom_call.1} parent=1 // pred_check
      _
    $region7: #{tpu_custom_call.1} parent=1 // pred_check_branch
      %16 = sbr.rel (0) target = $region9
    $region8: #{tpu_custom_call.1} parent=1 // pred_region
      _
    $region9: #{tpu_custom_call.1} parent=1 // pred_fallthru
      _
    // Predicated region
    $region10: #{tpu_custom_call.1} parent=1 // pred_check
      _
    $region11: #{tpu_custom_call.1} parent=1 // pred_check_branch
      %18 = sbr.rel (0) target = $region13
    $region12: #{tpu_custom_call.1} parent=1 // pred_region
      _
    $region13: #{tpu_custom_call.1} parent=1 // pred_fallthru
      _
    // Predicated region
    $region14: #{tpu_custom_call.1} parent=1 // pred_check
      _
    $region15: #{tpu_custom_call.1} parent=1 // pred_check_branch
      %20 = sbr.rel (0) target = $region17
    $region16: #{tpu_custom_call.1} parent=1 // pred_region
      %s22 = ssub.s32 3072, 3072
      %23 = vsyncadd [#allocation3], %s22
      %s24 = sshll.u32 [#allocation2], 4
      %s25 = int_to_ptr.vmem [resolvable:$true] %s24
      %30 = dma.hbm_to_vmem [thread:$0]  %s3, 3072, %s25, [#allocation3], 768, 768, 48
    $region17: #{tpu_custom_call.1} parent=1 // pred_fallthru
      _
    // Predicated region
    $region18: #{tpu_custom_call.1} parent=1 // pred_check
      _
    $region19: #{tpu_custom_call.1} parent=1 // pred_check_branch
      %32 = sbr.rel (0) target = $region21
    $region20: #{tpu_custom_call.1} parent=1 // pred_region
      _
    $region21: #{tpu_custom_call.1} parent=1 // pred_fallthru
      _
    // Predicated region
    $region22: #{tpu_custom_call.1} parent=1 // pred_check
      _
    $region23: #{tpu_custom_call.1} parent=1 // pred_check_branch
      %34 = sbr.rel (0) target = $region25
    $region24: #{tpu_custom_call.1} parent=1 // pred_region
      _
    $region25: #{tpu_custom_call.1} parent=1 // pred_fallthru
      _
    // Predicated region
    $region26: #{tpu_custom_call.1} parent=1 // pred_check
      _
    $region27: #{tpu_custom_call.1} parent=1 // pred_check_branch
      %36 = sbr.rel (0) target = $region29
    $region28: #{tpu_custom_call.1} parent=1 // pred_region
      %37 = dma.done [#allocation3], 3072
    $region29: #{tpu_custom_call.1} parent=1 // pred_fallthru
      _
    %v38 = vld [vmem:[%s0] sm:$0x1]
    %v39 = vld [vmem:[%s0 + $0x2] sm:$0x1]
    %v40 = vld [vmem:[%s0 + $0x4] sm:$0x1]
    %v41 = vld [vmem:[%s0 + $0x6] sm:$0x1]
    %v42 = vld [vmem:[%s0 + $0x8] sm:$0x1]
    %v43 = vld [vmem:[%s0 + $0xa] sm:$0x1]
    %v44 = vld [vmem:[%s0 + $0xc] sm:$0x1]
    %v45 = vld [vmem:[%s0 + $0xe] sm:$0x1]
    %v46 = vld [vmem:[%s0 + $0x1] sm:$0x1]
    %v47 = vld [vmem:[%s0 + $0x3] sm:$0x1]
    %v48 = vld [vmem:[%s0 + $0x5] sm:$0x1]
    %v49 = vld [vmem:[%s0 + $0x7] sm:$0x1]
    %v50 = vld [vmem:[%s0 + $0x9] sm:$0x1]
    %v51 = vld [vmem:[%s0 + $0xb] sm:$0x1]
    %v52 = vld [vmem:[%s0 + $0xd] sm:$0x1]
    %v53 = vld [vmem:[%s0 + $0xf] sm:$0x1]
    %v62 = vrot.slane %v39, 7
    %vm63 = vcmask 1041409
    %v64 = vsel %vm63, %v62, %v38
    %v65 = vrot.slane %v40, 6
    %vm66 = vcmask 1042434
    %v67 = vsel %vm66, %v65, %v64
    %v68 = vrot.slane %v41, 5
    %vm69 = vcmask 1043459
    %v70 = vsel %vm69, %v68, %v67
    %v71 = vrot.slane %v42, 4
    %vm72 = vcmask 1044484
    %v73 = vsel %vm72, %v71, %v70
    %v74 = vrot.slane %v43, 3
    %vm75 = vcmask 1045509
    %v76 = vsel %vm75, %v74, %v73
    %v77 = vrot.slane %v44, 2
    %vm78 = vcmask 1046534
    %v79 = vsel %vm78, %v77, %v76
    %v80 = vrot.slane %v45, 1
    %vm81 = vcmask 1047559
    %v82 = vsel %vm81, %v80, %v79
    %v92 = vrot.slane %v47, 7
    %v93 = vsel %vm63, %v92, %v46
    %v94 = vrot.slane %v48, 6
    %v95 = vsel %vm66, %v94, %v93
    %v96 = vrot.slane %v49, 5
    %v97 = vsel %vm69, %v96, %v95
    %v98 = vrot.slane %v50, 4
    %v99 = vsel %vm72, %v98, %v97
    %v100 = vrot.slane %v51, 3
    %v101 = vsel %vm75, %v100, %v99
    %v102 = vrot.slane %v52, 2
    %v103 = vsel %vm78, %v102, %v101
    %v104 = vrot.slane %v53, 1
    %v105 = vsel %vm81, %v104, %v103
    %v107 = vld [vmem:[%s1] sm:$0x1]
    %v108 = vld [vmem:[%s1 + $0x2] sm:$0x1]
    %v109 = vld [vmem:[%s1 + $0x4] sm:$0x1]
    %v110 = vld [vmem:[%s1 + $0x6] sm:$0x1]
    %v111 = vld [vmem:[%s1 + $0x8] sm:$0x1]
    %v112 = vld [vmem:[%s1 + $0xa] sm:$0x1]
    %v113 = vld [vmem:[%s1 + $0xc] sm:$0x1]
    %v114 = vld [vmem:[%s1 + $0xe] sm:$0x1]
    %v115 = vld [vmem:[%s2] sm:$0x1]
    %v116 = vld [vmem:[%s2 + $0x2] sm:$0x1]
    %v117 = vld [vmem:[%s2 + $0x4] sm:$0x1]
    %v118 = vld [vmem:[%s2 + $0x6] sm:$0x1]
    %v119 = vld [vmem:[%s2 + $0x8] sm:$0x1]
    %v120 = vld [vmem:[%s2 + $0xa] sm:$0x1]
    %v121 = vld [vmem:[%s2 + $0xc] sm:$0x1]
    %v122 = vld [vmem:[%s2 + $0xe] sm:$0x1]
    %v123 = vadd.f32 %v107, %v115
    %v124 = vadd.f32 %v108, %v116
    %v125 = vadd.f32 %v109, %v117
    %v126 = vadd.f32 %v110, %v118
    %v127 = vadd.f32 %v111, %v119
    %v128 = vadd.f32 %v112, %v120
    %v129 = vadd.f32 %v113, %v121
    %v130 = vadd.f32 %v114, %v122
    %v131 = vld [vmem:[%s1 + $0x1] sm:$0x1]
    %v132 = vld [vmem:[%s1 + $0x3] sm:$0x1]
    %v133 = vld [vmem:[%s1 + $0x5] sm:$0x1]
    %v134 = vld [vmem:[%s1 + $0x7] sm:$0x1]
    %v135 = vld [vmem:[%s1 + $0x9] sm:$0x1]
    %v136 = vld [vmem:[%s1 + $0xb] sm:$0x1]
    %v137 = vld [vmem:[%s1 + $0xd] sm:$0x1]
    %v138 = vld [vmem:[%s1 + $0xf] sm:$0x1]
    %v139 = vld [vmem:[%s2 + $0x1] sm:$0x1]
    %v140 = vld [vmem:[%s2 + $0x3] sm:$0x1]
    %v141 = vld [vmem:[%s2 + $0x5] sm:$0x1]
    %v142 = vld [vmem:[%s2 + $0x7] sm:$0x1]
    %v143 = vld [vmem:[%s2 + $0x9] sm:$0x1]
    %v144 = vld [vmem:[%s2 + $0xb] sm:$0x1]
    %v145 = vld [vmem:[%s2 + $0xd] sm:$0x1]
    %v146 = vld [vmem:[%s2 + $0xf] sm:$0x1]
    %v147 = vadd.f32 %v131, %v139
    %v148 = vadd.f32 %v132, %v140
    %v149 = vadd.f32 %v133, %v141
    %v150 = vadd.f32 %v134, %v142
    %v151 = vadd.f32 %v135, %v143
    %v152 = vadd.f32 %v136, %v144
    %v153 = vadd.f32 %v137, %v145
    %v154 = vadd.f32 %v138, %v146
    %v163 = vrot.slane %v124, 7
    %v164 = vsel %vm63, %v163, %v123
    %v165 = vrot.slane %v125, 6
    %v166 = vsel %vm66, %v165, %v164
    %v167 = vrot.slane %v126, 5
    %v168 = vsel %vm69, %v167, %v166
    %v169 = vrot.slane %v127, 4
    %v170 = vsel %vm72, %v169, %v168
    %v171 = vrot.slane %v128, 3
    %v172 = vsel %vm75, %v171, %v170
    %v173 = vrot.slane %v129, 2
    %v174 = vsel %vm78, %v173, %v172
    %v175 = vrot.slane %v130, 1
    %v176 = vsel %vm81, %v175, %v174
    %v185 = vrot.slane %v148, 7
    %v186 = vsel %vm63, %v185, %v147
    %v187 = vrot.slane %v149, 6
    %v188 = vsel %vm66, %v187, %v186
    %v189 = vrot.slane %v150, 5
    %v190 = vsel %vm69, %v189, %v188
    %v191 = vrot.slane %v151, 4
    %v192 = vsel %vm72, %v191, %v190
    %v193 = vrot.slane %v152, 3
    %v194 = vsel %vm75, %v193, %v192
    %v195 = vrot.slane %v153, 2
    %v196 = vsel %vm78, %v195, %v194
    %v197 = vrot.slane %v154, 1
    %v198 = vsel %vm81, %v197, %v196
    %v199 = vld [vmem:[#allocation2] sm:$0xff]
    %v200 = vld [vmem:[#allocation2 + $0x30] sm:$0xff]
    %v201 = vld [vmem:[#allocation2 + $0x60] sm:$0xff]
    %v202 = vld [vmem:[#allocation2 + $0x90] sm:$0xff]
    %v203 = vld [vmem:[%s5] sm:$0x1]
    %v205 = vlaneseq
    %v206 = vshrl.u32 %v205, 7
    %v207 = vsub.s32 0, %v206
    %v208 = vrot.slane %v203, %v207
    %vm210 = vcmask 261120
    %v211 = vsel %vm210, %v82, 0
    %v213 = vsel %vm210, %v105, 0
    %215 = vmatprep.subr.mxu0 0.0
    %216 = vmatpush1.msra.mxu0 %v199
    %217 = vmatprep.subr.mxu0 0.0
    %218 = vmatpush1.msra.mxu0 %v200
    %219 = vmatprep.subr.mxu0 0.0
    %220 = vmatpush1.msra.mxu0 %v201
    %221 = vmatprep.subr.mxu0 0.0
    %222 = vmatpush1.msra.mxu0 %v202
    %223 = vmatprep.subr.mxu0 0.0
    %224 = vmatpush1.msra.mxu0 0.0
    %225 = vmatprep.subr.mxu0 0.0
    %226 = vmatpush1.msra.mxu0 0.0
    %227 = vmatprep.subr.mxu0 0.0
    %228 = vmatpush1.msra.mxu0 0.0
    %229 = vmatprep.subr.mxu0 0.0
    %230 = vmatpush1.msra.mxu0 0.0
    %231 = vmatprep.subr.mxu0 0.0
    %232 = vmatpush1.msra.mxu0 0.0
    %233 = vmatprep.subr.mxu0 0.0
    %234 = vmatpush1.msra.mxu0 0.0
    %235 = vmatprep.subr.mxu0 0.0
    %236 = vmatpush1.msra.mxu0 0.0
    %237 = vmatprep.subr.mxu0 0.0
    %238 = vmatpush1.msra.mxu0 0.0
    %239 = vmatprep.subr.mxu0 0.0
    %240 = vmatpush1.msra.mxu0 0.0
    %241 = vmatprep.subr.mxu0 0.0
    %242 = vmatpush1.msra.mxu0 0.0
    %243 = vmatprep.subr.mxu0 0.0
    %244 = vmatpush1.msra.mxu0 0.0
    %245 = vmatprep.subr.mxu0 0.0
    %246 = vmatpush1.msra.mxu0 0.0
    %247 = vmatprep.subr.mxu0 0.0
    %248 = vmatpush1.msra.mxu0 0.0
    %249 = vmatprep.subr.mxu0 0.0
    %250 = vmatpush1.msra.mxu0 0.0
    %251 = vmatprep.subr.mxu0 0.0
    %252 = vmatpush1.msra.mxu0 0.0
    %253 = vmatprep.subr.mxu0 0.0
    %254 = vmatpush1.msra.mxu0 0.0
    %255 = vmatprep.subr.mxu0 0.0
    %256 = vmatpush1.msra.mxu0 0.0
    %257 = vmatprep.subr.mxu0 0.0
    %258 = vmatpush1.msra.mxu0 0.0
    %259 = vmatprep.subr.mxu0 0.0
    %260 = vmatpush1.msra.mxu0 0.0
    %261 = vmatprep.subr.mxu0 0.0
    %262 = vmatpush1.msra.mxu0 0.0
    %263 = vmatprep.subr.mxu0 0.0
    %264 = vmatpush1.msra.mxu0 0.0
    %265 = vmatprep.subr.mxu0 0.0
    %266 = vmatpush1.msra.mxu0 0.0
    %267 = vmatprep.subr.mxu0 0.0
    %268 = vmatpush1.msra.mxu0 0.0
    %269 = vmatprep.subr.mxu0 0.0
    %270 = vmatpush1.msra.mxu0 0.0
    %271 = vmatprep.subr.mxu0 0.0
    %272 = vmatpush1.msra.mxu0 0.0
    %273 = vmatprep.subr.mxu0 0.0
    %274 = vmatpush1.msra.mxu0 0.0
    %275 = vmatprep.subr.mxu0 0.0
    %276 = vmatpush1.msra.mxu0 0.0
    %277 = vmatprep.subr.mxu0 0.0
    %278 = vmatpush1.msra.mxu0 0.0
    %279 = vmatprep.mubr.f32.mxu0 0.0
    %280 = vmatmul.mubr.f32.gmra.mrb[0].mxu0 %v211
    %v281 = vpop.f32.mrb[0].mxu0
    %v282 = vadd.f32 %v208, %v281
    %v283 = vpop.f32.mrb[0].mxu0
    %284 = vmatprep.mubr.f32.mxu0 0.0
    %285 = vmatmul.mubr.f32.gmra.mrb[0].mxu0 %v213
    %v286 = vpop.f32.mrb[0].mxu0
    %v287 = vadd.f32 %v208, %v286
    %v288 = vpop.f32.mrb[0].mxu0
    %289 = vdwg.mxu0
    %v290 = vmul.f32 %v282, 0.35355338
    %v291 = vmul.f32 %v287, 0.35355338
    %293 = vrot.lane.b32.xlu0 %v282, 96
    %v294 = vpop.permute.xlu0 %293
    %vm295 = vcmask 64512
    %v297 = vsel %vm295, %v290, 0
    %v299 = vsel %vm295, %v294, 0
    %301 = vmatprep.subr.mxu0 0.0
    %302 = vmatpush1.xpose.msra.mxu0 %v299
    %303 = vmatprep.subr.mxu0 0.0
    %304 = vmatpush1.xpose.msra.mxu0 0.0
    %305 = vmatprep.subr.mxu0 0.0
    %306 = vmatpush1.xpose.msra.mxu0 0.0
    %307 = vmatprep.subr.mxu0 0.0
    %308 = vmatpush1.xpose.msra.mxu0 0.0
    %309 = vmatprep.subr.mxu0 0.0
    %310 = vmatpush1.xpose.msra.mxu0 0.0
    %311 = vmatprep.subr.mxu0 0.0
    %312 = vmatpush1.xpose.msra.mxu0 0.0
    %313 = vmatprep.subr.mxu0 0.0
    %314 = vmatpush1.xpose.msra.mxu0 0.0
    %315 = vmatprep.subr.mxu0 0.0
    %316 = vmatpush1.xpose.msra.mxu0 0.0
    %317 = vmatprep.subr.mxu0 0.0
    %318 = vmatpush1.xpose.msra.mxu0 0.0
    %319 = vmatprep.subr.mxu0 0.0
    %320 = vmatpush1.xpose.msra.mxu0 0.0
    %321 = vmatprep.subr.mxu0 0.0
    %322 = vmatpush1.xpose.msra.mxu0 0.0
    %323 = vmatprep.subr.mxu0 0.0
    %324 = vmatpush1.xpose.msra.mxu0 0.0
    %325 = vmatprep.subr.mxu0 0.0
    %326 = vmatpush1.xpose.msra.mxu0 0.0
    %327 = vmatprep.subr.mxu0 0.0
    %328 = vmatpush1.xpose.msra.mxu0 0.0
    %329 = vmatprep.subr.mxu0 0.0
    %330 = vmatpush1.xpose.msra.mxu0 0.0
    %331 = vmatprep.subr.mxu0 0.0
    %332 = vmatpush1.xpose.msra.mxu0 0.0
    %333 = vmatprep.subr.mxu0 0.0
    %334 = vmatpush1.xpose.msra.mxu0 0.0
    %335 = vmatprep.subr.mxu0 0.0
    %336 = vmatpush1.xpose.msra.mxu0 0.0
    %337 = vmatprep.subr.mxu0 0.0
    %338 = vmatpush1.xpose.msra.mxu0 0.0
    %339 = vmatprep.subr.mxu0 0.0
    %340 = vmatpush1.xpose.msra.mxu0 0.0
    %341 = vmatprep.subr.mxu0 0.0
    %342 = vmatpush1.xpose.msra.mxu0 0.0
    %343 = vmatprep.subr.mxu0 0.0
    %344 = vmatpush1.xpose.msra.mxu0 0.0
    %345 = vmatprep.subr.mxu0 0.0
    %346 = vmatpush1.xpose.msra.mxu0 0.0
    %347 = vmatprep.subr.mxu0 0.0
    %348 = vmatpush1.xpose.msra.mxu0 0.0
    %349 = vmatprep.subr.mxu0 0.0
    %350 = vmatpush1.xpose.msra.mxu0 0.0
    %351 = vmatprep.subr.mxu0 0.0
    %352 = vmatpush1.xpose.msra.mxu0 0.0
    %353 = vmatprep.subr.mxu0 0.0
    %354 = vmatpush1.xpose.msra.mxu0 0.0
    %355 = vmatprep.subr.mxu0 0.0
    %356 = vmatpush1.xpose.msra.mxu0 0.0
    %357 = vmatprep.subr.mxu0 0.0
    %358 = vmatpush1.xpose.msra.mxu0 0.0
    %359 = vmatprep.subr.mxu0 0.0
    %360 = vmatpush1.xpose.msra.mxu0 0.0
    %361 = vmatprep.subr.mxu0 0.0
    %362 = vmatpush1.xpose.msra.mxu0 0.0
    %363 = vmatprep.subr.mxu0 0.0
    %364 = vmatpush1.xpose.msra.mxu0 0.0
    %365 = vmatprep.mubr.f32.mxu0 0.0
    %366 = vmatmul.mubr.f32.gmra.mrb[0].mxu0 %v297
    %v367 = vpop.f32.mrb[0].mxu0
    %v368 = vadd.f32 0.0, %v367
    %v369 = vpop.f32.mrb[0].mxu0
    %370 = vdwg.mxu0
    %v371 = vsel %vm295, %v368, -inf
    %372 = vmax.xlane.f32.xlu0 %v371
    %v373 = vpop.xlane.xlu0 %372
    %v374 = vsub.f32 %v368, %v373
    %v375 = vmul.f32 %v374, 1.442695
    %v376 = vpow.pop %v375
    %v377 = vsel %vm295, %v376, 0.0
    %378 = vadd.xlane.f32.xlu0 %v377
    %v379 = vpop.xlane.xlu0 %378
    %v380 = vrcp.pop %v379
    %v381 = vmul.f32 %v376, %v380
    %382 = vrot.lane.b32.xlu0 %v282, 64
    %v383 = vpop.permute.xlu0 %382
    %v386 = vsel %vm295, %v381, 0
    %388 = vmatprep.subr.mxu0 0.0
    %389 = vmatpush1.msra.mxu0 %v383
    %390 = vmatprep.subr.mxu0 0.0
    %391 = vmatpush1.msra.mxu0 0.0
    %392 = vmatprep.subr.mxu0 0.0
    %393 = vmatpush1.msra.mxu0 0.0
    %394 = vmatprep.subr.mxu0 0.0
    %395 = vmatpush1.msra.mxu0 0.0
    %396 = vmatprep.subr.mxu0 0.0
    %397 = vmatpush1.msra.mxu0 0.0
    %398 = vmatprep.subr.mxu0 0.0
    %399 = vmatpush1.msra.mxu0 0.0
    %400 = vmatprep.subr.mxu0 0.0
    %401 = vmatpush1.msra.mxu0 0.0
    %402 = vmatprep.subr.mxu0 0.0
    %403 = vmatpush1.msra.mxu0 0.0
    %404 = vmatprep.subr.mxu0 0.0
    %405 = vmatpush1.msra.mxu0 0.0
    %406 = vmatprep.subr.mxu0 0.0
    %407 = vmatpush1.msra.mxu0 0.0
    %408 = vmatprep.subr.mxu0 0.0
    %409 = vmatpush1.msra.mxu0 0.0
    %410 = vmatprep.subr.mxu0 0.0
    %411 = vmatpush1.msra.mxu0 0.0
    %412 = vmatprep.subr.mxu0 0.0
    %413 = vmatpush1.msra.mxu0 0.0
    %414 = vmatprep.subr.mxu0 0.0
    %415 = vmatpush1.msra.mxu0 0.0
    %416 = vmatprep.subr.mxu0 0.0
    %417 = vmatpush1.msra.mxu0 0.0
    %418 = vmatprep.subr.mxu0 0.0
    %419 = vmatpush1.msra.mxu0 0.0
    %420 = vmatprep.subr.mxu0 0.0
    %421 = vmatpush1.msra.mxu0 0.0
    %422 = vmatprep.subr.mxu0 0.0
    %423 = vmatpush1.msra.mxu0 0.0
    %424 = vmatprep.subr.mxu0 0.0
    %425 = vmatpush1.msra.mxu0 0.0
    %426 = vmatprep.subr.mxu0 0.0
    %427 = vmatpush1.msra.mxu0 0.0
    %428 = vmatprep.subr.mxu0 0.0
    %429 = vmatpush1.msra.mxu0 0.0
    %430 = vmatprep.subr.mxu0 0.0
    %431 = vmatpush1.msra.mxu0 0.0
    %432 = vmatprep.subr.mxu0 0.0
    %433 = vmatpush1.msra.mxu0 0.0
    %434 = vmatprep.subr.mxu0 0.0
    %435 = vmatpush1.msra.mxu0 0.0
    %436 = vmatprep.subr.mxu0 0.0
    %437 = vmatpush1.msra.mxu0 0.0
    %438 = vmatprep.subr.mxu0 0.0
    %439 = vmatpush1.msra.mxu0 0.0
    %440 = vmatprep.subr.mxu0 0.0
    %441 = vmatpush1.msra.mxu0 0.0
    %442 = vmatprep.subr.mxu0 0.0
    %443 = vmatpush1.msra.mxu0 0.0
    %444 = vmatprep.subr.mxu0 0.0
    %445 = vmatpush1.msra.mxu0 0.0
    %446 = vmatprep.subr.mxu0 0.0
    %447 = vmatpush1.msra.mxu0 0.0
    %448 = vmatprep.subr.mxu0 0.0
    %449 = vmatpush1.msra.mxu0 0.0
    %450 = vmatprep.subr.mxu0 0.0
    %451 = vmatpush1.msra.mxu0 0.0
    %452 = vmatprep.mubr.f32.mxu0 0.0
    %453 = vmatmul.mubr.f32.gmra.mrb[0].mxu0 %v386
    %v454 = vpop.f32.mrb[0].mxu0
    %v455 = vadd.f32 0.0, %v454
    %v456 = vpop.f32.mrb[0].mxu0
    %457 = vdwg.mxu0
    %458 = vrot.lane.b32.xlu0 %v290, 120
    %v459 = vpop.permute.xlu0 %458
    %460 = vrot.lane.b32.xlu0 %v282, 88
    %v461 = vpop.permute.xlu0 %460
    %v462 = vsel %vm295, %v459, 0
    %v464 = vsel %vm295, %v461, 0
    %466 = vmatprep.subr.mxu0 0.0
    %467 = vmatpush1.xpose.msra.mxu0 %v464
    %468 = vmatprep.subr.mxu0 0.0
    %469 = vmatpush1.xpose.msra.mxu0 0.0
    %470 = vmatprep.subr.mxu0 0.0
    %471 = vmatpush1.xpose.msra.mxu0 0.0
    %472 = vmatprep.subr.mxu0 0.0
    %473 = vmatpush1.xpose.msra.mxu0 0.0
    %474 = vmatprep.subr.mxu0 0.0
    %475 = vmatpush1.xpose.msra.mxu0 0.0
    %476 = vmatprep.subr.mxu0 0.0
    %477 = vmatpush1.xpose.msra.mxu0 0.0
    %478 = vmatprep.subr.mxu0 0.0
    %479 = vmatpush1.xpose.msra.mxu0 0.0
    %480 = vmatprep.subr.mxu0 0.0
    %481 = vmatpush1.xpose.msra.mxu0 0.0
    %482 = vmatprep.subr.mxu0 0.0
    %483 = vmatpush1.xpose.msra.mxu0 0.0
    %484 = vmatprep.subr.mxu0 0.0
    %485 = vmatpush1.xpose.msra.mxu0 0.0
    %486 = vmatprep.subr.mxu0 0.0
    %487 = vmatpush1.xpose.msra.mxu0 0.0
    %488 = vmatprep.subr.mxu0 0.0
    %489 = vmatpush1.xpose.msra.mxu0 0.0
    %490 = vmatprep.subr.mxu0 0.0
    %491 = vmatpush1.xpose.msra.mxu0 0.0
    %492 = vmatprep.subr.mxu0 0.0
    %493 = vmatpush1.xpose.msra.mxu0 0.0
    %494 = vmatprep.subr.mxu0 0.0
    %495 = vmatpush1.xpose.msra.mxu0 0.0
    %496 = vmatprep.subr.mxu0 0.0
    %497 = vmatpush1.xpose.msra.mxu0 0.0
    %498 = vmatprep.subr.mxu0 0.0
    %499 = vmatpush1.xpose.msra.mxu0 0.0
    %500 = vmatprep.subr.mxu0 0.0
    %501 = vmatpush1.xpose.msra.mxu0 0.0
    %502 = vmatprep.subr.mxu0 0.0
    %503 = vmatpush1.xpose.msra.mxu0 0.0
    %504 = vmatprep.subr.mxu0 0.0
    %505 = vmatpush1.xpose.msra.mxu0 0.0
    %506 = vmatprep.subr.mxu0 0.0
    %507 = vmatpush1.xpose.msra.mxu0 0.0
    %508 = vmatprep.subr.mxu0 0.0
    %509 = vmatpush1.xpose.msra.mxu0 0.0
    %510 = vmatprep.subr.mxu0 0.0
    %511 = vmatpush1.xpose.msra.mxu0 0.0
    %512 = vmatprep.subr.mxu0 0.0
    %513 = vmatpush1.xpose.msra.mxu0 0.0
    %514 = vmatprep.subr.mxu0 0.0
    %515 = vmatpush1.xpose.msra.mxu0 0.0
    %516 = vmatprep.subr.mxu0 0.0
    %517 = vmatpush1.xpose.msra.mxu0 0.0
    %518 = vmatprep.subr.mxu0 0.0
    %519 = vmatpush1.xpose.msra.mxu0 0.0
    %520 = vmatprep.subr.mxu0 0.0
    %521 = vmatpush1.xpose.msra.mxu0 0.0
    %522 = vmatprep.subr.mxu0 0.0
    %523 = vmatpush1.xpose.msra.mxu0 0.0
    %524 = vmatprep.subr.mxu0 0.0
    %525 = vmatpush1.xpose.msra.mxu0 0.0
    %526 = vmatprep.subr.mxu0 0.0
    %527 = vmatpush1.xpose.msra.mxu0 0.0
    %528 = vmatprep.subr.mxu0 0.0
    %529 = vmatpush1.xpose.msra.mxu0 0.0
    %530 = vmatprep.mubr.f32.mxu0 0.0
    %531 = vmatmul.mubr.f32.gmra.mrb[0].mxu0 %v462
    %v532 = vpop.f32.mrb[0].mxu0
    %v533 = vadd.f32 0.0, %v532
    %v534 = vpop.f32.mrb[0].mxu0
    %535 = vdwg.mxu0
    %v536 = vsel %vm295, %v533, -inf
    %537 = vmax.xlane.f32.xlu0 %v536
    %v538 = vpop.xlane.xlu0 %537
    %v539 = vsub.f32 %v533, %v538
    %v540 = vmul.f32 %v539, 1.442695
    %v541 = vpow.pop %v540
    %v542 = vsel %vm295, %v541, 0.0
    %543 = vadd.xlane.f32.xlu0 %v542
    %v544 = vpop.xlane.xlu0 %543
    %v545 = vrcp.pop %v544
    %v546 = vmul.f32 %v541, %v545
    %547 = vrot.lane.b32.xlu0 %v282, 56
    %v548 = vpop.permute.xlu0 %547
    %v551 = vsel %vm295, %v546, 0
    %553 = vmatprep.subr.mxu0 0.0
    %554 = vmatpush1.msra.mxu0 %v548
    %555 = vmatprep.subr.mxu0 0.0
    %556 = vmatpush1.msra.mxu0 0.0
    %557 = vmatprep.subr.mxu0 0.0
    %558 = vmatpush1.msra.mxu0 0.0
    %559 = vmatprep.subr.mxu0 0.0
    %560 = vmatpush1.msra.mxu0 0.0
    %561 = vmatprep.subr.mxu0 0.0
    %562 = vmatpush1.msra.mxu0 0.0
    %563 = vmatprep.subr.mxu0 0.0
    %564 = vmatpush1.msra.mxu0 0.0
    %565 = vmatprep.subr.mxu0 0.0
    %566 = vmatpush1.msra.mxu0 0.0
    %567 = vmatprep.subr.mxu0 0.0
    %568 = vmatpush1.msra.mxu0 0.0
    %569 = vmatprep.subr.mxu0 0.0
    %570 = vmatpush1.msra.mxu0 0.0
    %571 = vmatprep.subr.mxu0 0.0
    %572 = vmatpush1.msra.mxu0 0.0
    %573 = vmatprep.subr.mxu0 0.0
    %574 = vmatpush1.msra.mxu0 0.0
    %575 = vmatprep.subr.mxu0 0.0
    %576 = vmatpush1.msra.mxu0 0.0
    %577 = vmatprep.subr.mxu0 0.0
    %578 = vmatpush1.msra.mxu0 0.0
    %579 = vmatprep.subr.mxu0 0.0
    %580 = vmatpush1.msra.mxu0 0.0
    %581 = vmatprep.subr.mxu0 0.0
    %582 = vmatpush1.msra.mxu0 0.0
    %583 = vmatprep.subr.mxu0 0.0
    %584 = vmatpush1.msra.mxu0 0.0
    %585 = vmatprep.subr.mxu0 0.0
    %586 = vmatpush1.msra.mxu0 0.0
    %587 = vmatprep.subr.mxu0 0.0
    %588 = vmatpush1.msra.mxu0 0.0
    %589 = vmatprep.subr.mxu0 0.0
    %590 = vmatpush1.msra.mxu0 0.0
    %591 = vmatprep.subr.mxu0 0.0
    %592 = vmatpush1.msra.mxu0 0.0
    %593 = vmatprep.subr.mxu0 0.0
    %594 = vmatpush1.msra.mxu0 0.0
    %595 = vmatprep.subr.mxu0 0.0
    %596 = vmatpush1.msra.mxu0 0.0
    %597 = vmatprep.subr.mxu0 0.0
    %598 = vmatpush1.msra.mxu0 0.0
    %599 = vmatprep.subr.mxu0 0.0
    %600 = vmatpush1.msra.mxu0 0.0
    %601 = vmatprep.subr.mxu0 0.0
    %602 = vmatpush1.msra.mxu0 0.0
    %603 = vmatprep.subr.mxu0 0.0
    %604 = vmatpush1.msra.mxu0 0.0
    %605 = vmatprep.subr.mxu0 0.0
    %606 = vmatpush1.msra.mxu0 0.0
    %607 = vmatprep.subr.mxu0 0.0
    %608 = vmatpush1.msra.mxu0 0.0
    %609 = vmatprep.subr.mxu0 0.0
    %610 = vmatpush1.msra.mxu0 0.0
    %611 = vmatprep.subr.mxu0 0.0
    %612 = vmatpush1.msra.mxu0 0.0
    %613 = vmatprep.subr.mxu0 0.0
    %614 = vmatpush1.msra.mxu0 0.0
    %615 = vmatprep.subr.mxu0 0.0
    %616 = vmatpush1.msra.mxu0 0.0
    %617 = vmatprep.mubr.f32.mxu0 0.0
    %618 = vmatmul.mubr.f32.gmra.mrb[0].mxu0 %v551
    %v619 = vpop.f32.mrb[0].mxu0
    %v620 = vadd.f32 0.0, %v619
    %v621 = vpop.f32.mrb[0].mxu0
    %622 = vdwg.mxu0
    %623 = vrot.lane.b32.xlu0 %v290, 112
    %v624 = vpop.permute.xlu0 %623
    %625 = vrot.lane.b32.xlu0 %v282, 80
    %v626 = vpop.permute.xlu0 %625
    %v627 = vsel %vm295, %v624, 0
    %v629 = vsel %vm295, %v626, 0
    %631 = vmatprep.subr.mxu0 0.0
    %632 = vmatpush1.xpose.msra.mxu0 %v629
    %633 = vmatprep.subr.mxu0 0.0
    %634 = vmatpush1.xpose.msra.mxu0 0.0
    %635 = vmatprep.subr.mxu0 0.0
    %636 = vmatpush1.xpose.msra.mxu0 0.0
    %637 = vmatprep.subr.mxu0 0.0
    %638 = vmatpush1.xpose.msra.mxu0 0.0
    %639 = vmatprep.subr.mxu0 0.0
    %640 = vmatpush1.xpose.msra.mxu0 0.0
    %641 = vmatprep.subr.mxu0 0.0
    %642 = vmatpush1.xpose.msra.mxu0 0.0
    %643 = vmatprep.subr.mxu0 0.0
    %644 = vmatpush1.xpose.msra.mxu0 0.0
    %645 = vmatprep.subr.mxu0 0.0
    %646 = vmatpush1.xpose.msra.mxu0 0.0
    %647 = vmatprep.subr.mxu0 0.0
    %648 = vmatpush1.xpose.msra.mxu0 0.0
    %649 = vmatprep.subr.mxu0 0.0
    %650 = vmatpush1.xpose.msra.mxu0 0.0
    %651 = vmatprep.subr.mxu0 0.0
    %652 = vmatpush1.xpose.msra.mxu0 0.0
    %653 = vmatprep.subr.mxu0 0.0
    %654 = vmatpush1.xpose.msra.mxu0 0.0
    %655 = vmatprep.subr.mxu0 0.0
    %656 = vmatpush1.xpose.msra.mxu0 0.0
    %657 = vmatprep.subr.mxu0 0.0
    %658 = vmatpush1.xpose.msra.mxu0 0.0
    %659 = vmatprep.subr.mxu0 0.0
    %660 = vmatpush1.xpose.msra.mxu0 0.0
    %661 = vmatprep.subr.mxu0 0.0
    %662 = vmatpush1.xpose.msra.mxu0 0.0
    %663 = vmatprep.subr.mxu0 0.0
    %664 = vmatpush1.xpose.msra.mxu0 0.0
    %665 = vmatprep.subr.mxu0 0.0
    %666 = vmatpush1.xpose.msra.mxu0 0.0
    %667 = vmatprep.subr.mxu0 0.0
    %668 = vmatpush1.xpose.msra.mxu0 0.0
    %669 = vmatprep.subr.mxu0 0.0
    %670 = vmatpush1.xpose.msra.mxu0 0.0
    %671 = vmatprep.subr.mxu0 0.0
    %672 = vmatpush1.xpose.msra.mxu0 0.0
    %673 = vmatprep.subr.mxu0 0.0
    %674 = vmatpush1.xpose.msra.mxu0 0.0
    %675 = vmatprep.subr.mxu0 0.0
    %676 = vmatpush1.xpose.msra.mxu0 0.0
    %677 = vmatprep.subr.mxu0 0.0
    %678 = vmatpush1.xpose.msra.mxu0 0.0
    %679 = vmatprep.subr.mxu0 0.0
    %680 = vmatpush1.xpose.msra.mxu0 0.0
    %681 = vmatprep.subr.mxu0 0.0
    %682 = vmatpush1.xpose.msra.mxu0 0.0
    %683 = vmatprep.subr.mxu0 0.0
    %684 = vmatpush1.xpose.msra.mxu0 0.0
    %685 = vmatprep.subr.mxu0 0.0
    %686 = vmatpush1.xpose.msra.mxu0 0.0
    %687 = vmatprep.subr.mxu0 0.0
    %688 = vmatpush1.xpose.msra.mxu0 0.0
    %689 = vmatprep.subr.mxu0 0.0
    %690 = vmatpush1.xpose.msra.mxu0 0.0
    %691 = vmatprep.subr.mxu0 0.0
    %692 = vmatpush1.xpose.msra.mxu0 0.0
    %693 = vmatprep.subr.mxu0 0.0
    %694 = vmatpush1.xpose.msra.mxu0 0.0
    %695 = vmatprep.mubr.f32.mxu0 0.0
    %696 = vmatmul.mubr.f32.gmra.mrb[0].mxu0 %v627
    %v697 = vpop.f32.mrb[0].mxu0
    %v698 = vadd.f32 0.0, %v697
    %v699 = vpop.f32.mrb[0].mxu0
    %700 = vdwg.mxu0
    %v701 = vsel %vm295, %v698, -inf
    %702 = vmax.xlane.f32.xlu0 %v701
    %v703 = vpop.xlane.xlu0 %702
    %v704 = vsub.f32 %v698, %v703
    %v705 = vmul.f32 %v704, 1.442695
    %v706 = vpow.pop %v705
    %v707 = vsel %vm295, %v706, 0.0
    %708 = vadd.xlane.f32.xlu0 %v707
    %v709 = vpop.xlane.xlu0 %708
    %v710 = vrcp.pop %v709
    %v711 = vmul.f32 %v706, %v710
    %712 = vrot.lane.b32.xlu0 %v282, 48
    %v713 = vpop.permute.xlu0 %712
    %v716 = vsel %vm295, %v711, 0
    %718 = vmatprep.subr.mxu0 0.0
    %719 = vmatpush1.msra.mxu0 %v713
    %720 = vmatprep.subr.mxu0 0.0
    %721 = vmatpush1.msra.mxu0 0.0
    %722 = vmatprep.subr.mxu0 0.0
    %723 = vmatpush1.msra.mxu0 0.0
    %724 = vmatprep.subr.mxu0 0.0
    %725 = vmatpush1.msra.mxu0 0.0
    %726 = vmatprep.subr.mxu0 0.0
    %727 = vmatpush1.msra.mxu0 0.0
    %728 = vmatprep.subr.mxu0 0.0
    %729 = vmatpush1.msra.mxu0 0.0
    %730 = vmatprep.subr.mxu0 0.0
    %731 = vmatpush1.msra.mxu0 0.0
    %732 = vmatprep.subr.mxu0 0.0
    %733 = vmatpush1.msra.mxu0 0.0
    %734 = vmatprep.subr.mxu0 0.0
    %735 = vmatpush1.msra.mxu0 0.0
    %736 = vmatprep.subr.mxu0 0.0
    %737 = vmatpush1.msra.mxu0 0.0
    %738 = vmatprep.subr.mxu0 0.0
    %739 = vmatpush1.msra.mxu0 0.0
    %740 = vmatprep.subr.mxu0 0.0
    %741 = vmatpush1.msra.mxu0 0.0
    %742 = vmatprep.subr.mxu0 0.0
    %743 = vmatpush1.msra.mxu0 0.0
    %744 = vmatprep.subr.mxu0 0.0
    %745 = vmatpush1.msra.mxu0 0.0
    %746 = vmatprep.subr.mxu0 0.0
    %747 = vmatpush1.msra.mxu0 0.0
    %748 = vmatprep.subr.mxu0 0.0
    %749 = vmatpush1.msra.mxu0 0.0
    %750 = vmatprep.subr.mxu0 0.0
    %751 = vmatpush1.msra.mxu0 0.0
    %752 = vmatprep.subr.mxu0 0.0
    %753 = vmatpush1.msra.mxu0 0.0
    %754 = vmatprep.subr.mxu0 0.0
    %755 = vmatpush1.msra.mxu0 0.0
    %756 = vmatprep.subr.mxu0 0.0
    %757 = vmatpush1.msra.mxu0 0.0
    %758 = vmatprep.subr.mxu0 0.0
    %759 = vmatpush1.msra.mxu0 0.0
    %760 = vmatprep.subr.mxu0 0.0
    %761 = vmatpush1.msra.mxu0 0.0
    %762 = vmatprep.subr.mxu0 0.0
    %763 = vmatpush1.msra.mxu0 0.0
    %764 = vmatprep.subr.mxu0 0.0
    %765 = vmatpush1.msra.mxu0 0.0
    %766 = vmatprep.subr.mxu0 0.0
    %767 = vmatpush1.msra.mxu0 0.0
    %768 = vmatprep.subr.mxu0 0.0
    %769 = vmatpush1.msra.mxu0 0.0
    %770 = vmatprep.subr.mxu0 0.0
    %771 = vmatpush1.msra.mxu0 0.0
    %772 = vmatprep.subr.mxu0 0.0
    %773 = vmatpush1.msra.mxu0 0.0
    %774 = vmatprep.subr.mxu0 0.0
    %775 = vmatpush1.msra.mxu0 0.0
    %776 = vmatprep.subr.mxu0 0.0
    %777 = vmatpush1.msra.mxu0 0.0
    %778 = vmatprep.subr.mxu0 0.0
    %779 = vmatpush1.msra.mxu0 0.0
    %780 = vmatprep.subr.mxu0 0.0
    %781 = vmatpush1.msra.mxu0 0.0
    %782 = vmatprep.mubr.f32.mxu0 0.0
    %783 = vmatmul.mubr.f32.gmra.mrb[0].mxu0 %v716
    %v784 = vpop.f32.mrb[0].mxu0
    %v785 = vadd.f32 0.0, %v784
    %v786 = vpop.f32.mrb[0].mxu0
    %787 = vdwg.mxu0
    %788 = vrot.lane.b32.xlu0 %v290, 104
    %v789 = vpop.permute.xlu0 %788
    %790 = vrot.lane.b32.xlu0 %v282, 72
    %v791 = vpop.permute.xlu0 %790
    %v792 = vsel %vm295, %v789, 0
    %v794 = vsel %vm295, %v791, 0
    %796 = vmatprep.subr.mxu0 0.0
    %797 = vmatpush1.xpose.msra.mxu0 %v794
    %798 = vmatprep.subr.mxu0 0.0
    %799 = vmatpush1.xpose.msra.mxu0 0.0
    %800 = vmatprep.subr.mxu0 0.0
    %801 = vmatpush1.xpose.msra.mxu0 0.0
    %802 = vmatprep.subr.mxu0 0.0
    %803 = vmatpush1.xpose.msra.mxu0 0.0
    %804 = vmatprep.subr.mxu0 0.0
    %805 = vmatpush1.xpose.msra.mxu0 0.0
    %806 = vmatprep.subr.mxu0 0.0
    %807 = vmatpush1.xpose.msra.mxu0 0.0
    %808 = vmatprep.subr.mxu0 0.0
    %809 = vmatpush1.xpose.msra.mxu0 0.0
    %810 = vmatprep.subr.mxu0 0.0
    %811 = vmatpush1.xpose.msra.mxu0 0.0
    %812 = vmatprep.subr.mxu0 0.0
    %813 = vmatpush1.xpose.msra.mxu0 0.0
    %814 = vmatprep.subr.mxu0 0.0
    %815 = vmatpush1.xpose.msra.mxu0 0.0
    %816 = vmatprep.subr.mxu0 0.0
    %817 = vmatpush1.xpose.msra.mxu0 0.0
    %818 = vmatprep.subr.mxu0 0.0
    %819 = vmatpush1.xpose.msra.mxu0 0.0
    %820 = vmatprep.subr.mxu0 0.0
    %821 = vmatpush1.xpose.msra.mxu0 0.0
    %822 = vmatprep.subr.mxu0 0.0
    %823 = vmatpush1.xpose.msra.mxu0 0.0
    %824 = vmatprep.subr.mxu0 0.0
    %825 = vmatpush1.xpose.msra.mxu0 0.0
    %826 = vmatprep.subr.mxu0 0.0
    %827 = vmatpush1.xpose.msra.mxu0 0.0
    %828 = vmatprep.subr.mxu0 0.0
    %829 = vmatpush1.xpose.msra.mxu0 0.0
    %830 = vmatprep.subr.mxu0 0.0
    %831 = vmatpush1.xpose.msra.mxu0 0.0
    %832 = vmatprep.subr.mxu0 0.0
    %833 = vmatpush1.xpose.msra.mxu0 0.0
    %834 = vmatprep.subr.mxu0 0.0
    %835 = vmatpush1.xpose.msra.mxu0 0.0
    %836 = vmatprep.subr.mxu0 0.0
    %837 = vmatpush1.xpose.msra.mxu0 0.0
    %838 = vmatprep.subr.mxu0 0.0
    %839 = vmatpush1.xpose.msra.mxu0 0.0
    %840 = vmatprep.subr.mxu0 0.0
    %841 = vmatpush1.xpose.msra.mxu0 0.0
    %842 = vmatprep.subr.mxu0 0.0
    %843 = vmatpush1.xpose.msra.mxu0 0.0
    %844 = vmatprep.subr.mxu0 0.0
    %845 = vmatpush1.xpose.msra.mxu0 0.0
    %846 = vmatprep.subr.mxu0 0.0
    %847 = vmatpush1.xpose.msra.mxu0 0.0
    %848 = vmatprep.subr.mxu0 0.0
    %849 = vmatpush1.xpose.msra.mxu0 0.0
    %850 = vmatprep.subr.mxu0 0.0
    %851 = vmatpush1.xpose.msra.mxu0 0.0
    %852 = vmatprep.subr.mxu0 0.0
    %853 = vmatpush1.xpose.msra.mxu0 0.0
    %854 = vmatprep.subr.mxu0 0.0
    %855 = vmatpush1.xpose.msra.mxu0 0.0
    %856 = vmatprep.subr.mxu0 0.0
    %857 = vmatpush1.xpose.msra.mxu0 0.0
    %858 = vmatprep.subr.mxu0 0.0
    %859 = vmatpush1.xpose.msra.mxu0 0.0
    %860 = vmatprep.mubr.f32.mxu0 0.0
    %861 = vmatmul.mubr.f32.gmra.mrb[0].mxu0 %v792
    %v862 = vpop.f32.mrb[0].mxu0
    %v863 = vadd.f32 0.0, %v862
    %v864 = vpop.f32.mrb[0].mxu0
    %865 = vdwg.mxu0
    %v866 = vsel %vm295, %v863, -inf
    %867 = vmax.xlane.f32.xlu0 %v866
    %v868 = vpop.xlane.xlu0 %867
    %v869 = vsub.f32 %v863, %v868
    %v870 = vmul.f32 %v869, 1.442695
    %v871 = vpow.pop %v870
    %v872 = vsel %vm295, %v871, 0.0
    %873 = vadd.xlane.f32.xlu0 %v872
    %v874 = vpop.xlane.xlu0 %873
    %v875 = vrcp.pop %v874
    %v876 = vmul.f32 %v871, %v875
    %877 = vrot.lane.b32.xlu0 %v282, 40
    %v878 = vpop.permute.xlu0 %877
    %v881 = vsel %vm295, %v876, 0
    %883 = vmatprep.subr.mxu0 0.0
    %884 = vmatpush1.msra.mxu0 %v878
    %885 = vmatprep.subr.mxu0 0.0
    %886 = vmatpush1.msra.mxu0 0.0
    %887 = vmatprep.subr.mxu0 0.0
    %888 = vmatpush1.msra.mxu0 0.0
    %889 = vmatprep.subr.mxu0 0.0
    %890 = vmatpush1.msra.mxu0 0.0
    %891 = vmatprep.subr.mxu0 0.0
    %892 = vmatpush1.msra.mxu0 0.0
    %893 = vmatprep.subr.mxu0 0.0
    %894 = vmatpush1.msra.mxu0 0.0
    %895 = vmatprep.subr.mxu0 0.0
    %896 = vmatpush1.msra.mxu0 0.0
    %897 = vmatprep.subr.mxu0 0.0
    %898 = vmatpush1.msra.mxu0 0.0
    %899 = vmatprep.subr.mxu0 0.0
    %900 = vmatpush1.msra.mxu0 0.0
    %901 = vmatprep.subr.mxu0 0.0
    %902 = vmatpush1.msra.mxu0 0.0
    %903 = vmatprep.subr.mxu0 0.0
    %904 = vmatpush1.msra.mxu0 0.0
    %905 = vmatprep.subr.mxu0 0.0
    %906 = vmatpush1.msra.mxu0 0.0
    %907 = vmatprep.subr.mxu0 0.0
    %908 = vmatpush1.msra.mxu0 0.0
    %909 = vmatprep.subr.mxu0 0.0
    %910 = vmatpush1.msra.mxu0 0.0
    %911 = vmatprep.subr.mxu0 0.0
    %912 = vmatpush1.msra.mxu0 0.0
    %913 = vmatprep.subr.mxu0 0.0
    %914 = vmatpush1.msra.mxu0 0.0
    %915 = vmatprep.subr.mxu0 0.0
    %916 = vmatpush1.msra.mxu0 0.0
    %917 = vmatprep.subr.mxu0 0.0
    %918 = vmatpush1.msra.mxu0 0.0
    %919 = vmatprep.subr.mxu0 0.0
    %920 = vmatpush1.msra.mxu0 0.0
    %921 = vmatprep.subr.mxu0 0.0
    %922 = vmatpush1.msra.mxu0 0.0
    %923 = vmatprep.subr.mxu0 0.0
    %924 = vmatpush1.msra.mxu0 0.0
    %925 = vmatprep.subr.mxu0 0.0
    %926 = vmatpush1.msra.mxu0 0.0
    %927 = vmatprep.subr.mxu0 0.0
    %928 = vmatpush1.msra.mxu0 0.0
    %929 = vmatprep.subr.mxu0 0.0
    %930 = vmatpush1.msra.mxu0 0.0
    %931 = vmatprep.subr.mxu0 0.0
    %932 = vmatpush1.msra.mxu0 0.0
    %933 = vmatprep.subr.mxu0 0.0
    %934 = vmatpush1.msra.mxu0 0.0
    %935 = vmatprep.subr.mxu0 0.0
    %936 = vmatpush1.msra.mxu0 0.0
    %937 = vmatprep.subr.mxu0 0.0
    %938 = vmatpush1.msra.mxu0 0.0
    %939 = vmatprep.subr.mxu0 0.0
    %940 = vmatpush1.msra.mxu0 0.0
    %941 = vmatprep.subr.mxu0 0.0
    %942 = vmatpush1.msra.mxu0 0.0
    %943 = vmatprep.subr.mxu0 0.0
    %944 = vmatpush1.msra.mxu0 0.0
    %945 = vmatprep.subr.mxu0 0.0
    %946 = vmatpush1.msra.mxu0 0.0
    %947 = vmatprep.mubr.f32.mxu0 0.0
    %948 = vmatmul.mubr.f32.gmra.mrb[0].mxu0 %v881
    %v949 = vpop.f32.mrb[0].mxu0
    %v950 = vadd.f32 0.0, %v949
    %v951 = vpop.f32.mrb[0].mxu0
    %952 = vdwg.mxu0
    %954 = vrot.lane.b32.xlu0 %v620, 8
    %v955 = vpop.permute.xlu0 %954
    %958 = vrot.lane.b32.xlu0 %v785, 16
    %v959 = vpop.permute.xlu0 %958
    %962 = vrot.lane.b32.xlu0 %v950, 24
    %v963 = vpop.permute.xlu0 %962
    %v965 = vsel %vm295, %v455, %v955
    %vm966 = vcmask 130048
    %v967 = vsel %vm966, %v965, %v959
    %vm968 = vcmask 195584
    %v969 = vsel %vm968, %v967, %v963
    %971 = vrot.lane.b32.xlu0 %v287, 96
    %v972 = vpop.permute.xlu0 %971
    %v974 = vsel %vm295, %v291, 0
    %v976 = vsel %vm295, %v972, 0
    %978 = vmatprep.subr.mxu0 0.0
    %979 = vmatpush1.xpose.msra.mxu0 %v976
    %980 = vmatprep.subr.mxu0 0.0
    %981 = vmatpush1.xpose.msra.mxu0 0.0
    %982 = vmatprep.subr.mxu0 0.0
    %983 = vmatpush1.xpose.msra.mxu0 0.0
    %984 = vmatprep.subr.mxu0 0.0
    %985 = vmatpush1.xpose.msra.mxu0 0.0
    %986 = vmatprep.subr.mxu0 0.0
    %987 = vmatpush1.xpose.msra.mxu0 0.0
    %988 = vmatprep.subr.mxu0 0.0
    %989 = vmatpush1.xpose.msra.mxu0 0.0
    %990 = vmatprep.subr.mxu0 0.0
    %991 = vmatpush1.xpose.msra.mxu0 0.0
    %992 = vmatprep.subr.mxu0 0.0
    %993 = vmatpush1.xpose.msra.mxu0 0.0
    %994 = vmatprep.subr.mxu0 0.0
    %995 = vmatpush1.xpose.msra.mxu0 0.0
    %996 = vmatprep.subr.mxu0 0.0
    %997 = vmatpush1.xpose.msra.mxu0 0.0
    %998 = vmatprep.subr.mxu0 0.0
    %999 = vmatpush1.xpose.msra.mxu0 0.0
    %1000 = vmatprep.subr.mxu0 0.0
    %1001 = vmatpush1.xpose.msra.mxu0 0.0
    %1002 = vmatprep.subr.mxu0 0.0
    %1003 = vmatpush1.xpose.msra.mxu0 0.0
    %1004 = vmatprep.subr.mxu0 0.0
    %1005 = vmatpush1.xpose.msra.mxu0 0.0
    %1006 = vmatprep.subr.mxu0 0.0
    %1007 = vmatpush1.xpose.msra.mxu0 0.0
    %1008 = vmatprep.subr.mxu0 0.0
    %1009 = vmatpush1.xpose.msra.mxu0 0.0
    %1010 = vmatprep.subr.mxu0 0.0
    %1011 = vmatpush1.xpose.msra.mxu0 0.0
    %1012 = vmatprep.subr.mxu0 0.0
    %1013 = vmatpush1.xpose.msra.mxu0 0.0
    %1014 = vmatprep.subr.mxu0 0.0
    %1015 = vmatpush1.xpose.msra.mxu0 0.0
    %1016 = vmatprep.subr.mxu0 0.0
    %1017 = vmatpush1.xpose.msra.mxu0 0.0
    %1018 = vmatprep.subr.mxu0 0.0
    %1019 = vmatpush1.xpose.msra.mxu0 0.0
    %1020 = vmatprep.subr.mxu0 0.0
    %1021 = vmatpush1.xpose.msra.mxu0 0.0
    %1022 = vmatprep.subr.mxu0 0.0
    %1023 = vmatpush1.xpose.msra.mxu0 0.0
    %1024 = vmatprep.subr.mxu0 0.0
    %1025 = vmatpush1.xpose.msra.mxu0 0.0
    %1026 = vmatprep.subr.mxu0 0.0
    %1027 = vmatpush1.xpose.msra.mxu0 0.0
    %1028 = vmatprep.subr.mxu0 0.0
    %1029 = vmatpush1.xpose.msra.mxu0 0.0
    %1030 = vmatprep.subr.mxu0 0.0
    %1031 = vmatpush1.xpose.msra.mxu0 0.0
    %1032 = vmatprep.subr.mxu0 0.0
    %1033 = vmatpush1.xpose.msra.mxu0 0.0
    %1034 = vmatprep.subr.mxu0 0.0
    %1035 = vmatpush1.xpose.msra.mxu0 0.0
    %1036 = vmatprep.subr.mxu0 0.0
    %1037 = vmatpush1.xpose.msra.mxu0 0.0
    %1038 = vmatprep.subr.mxu0 0.0
    %1039 = vmatpush1.xpose.msra.mxu0 0.0
    %1040 = vmatprep.subr.mxu0 0.0
    %1041 = vmatpush1.xpose.msra.mxu0 0.0
    %1042 = vmatprep.mubr.f32.mxu0 0.0
    %1043 = vmatmul.mubr.f32.gmra.mrb[0].mxu0 %v974
    %v1044 = vpop.f32.mrb[0].mxu0
    %v1045 = vadd.f32 0.0, %v1044
    %v1046 = vpop.f32.mrb[0].mxu0
    %1047 = vdwg.mxu0
    %v1048 = vsel %vm295, %v1045, -inf
    %1049 = vmax.xlane.f32.xlu0 %v1048
    %v1050 = vpop.xlane.xlu0 %1049
    %v1051 = vsub.f32 %v1045, %v1050
    %v1052 = vmul.f32 %v1051, 1.442695
    %v1053 = vpow.pop %v1052
    %v1054 = vsel %vm295, %v1053, 0.0
    %1055 = vadd.xlane.f32.xlu0 %v1054
    %v1056 = vpop.xlane.xlu0 %1055
    %v1057 = vrcp.pop %v1056
    %v1058 = vmul.f32 %v1053, %v1057
    %1059 = vrot.lane.b32.xlu0 %v287, 64
    %v1060 = vpop.permute.xlu0 %1059
    %v1063 = vsel %vm295, %v1058, 0
    %1065 = vmatprep.subr.mxu0 0.0
    %1066 = vmatpush1.msra.mxu0 %v1060
    %1067 = vmatprep.subr.mxu0 0.0
    %1068 = vmatpush1.msra.mxu0 0.0
    %1069 = vmatprep.subr.mxu0 0.0
    %1070 = vmatpush1.msra.mxu0 0.0
    %1071 = vmatprep.subr.mxu0 0.0
    %1072 = vmatpush1.msra.mxu0 0.0
    %1073 = vmatprep.subr.mxu0 0.0
    %1074 = vmatpush1.msra.mxu0 0.0
    %1075 = vmatprep.subr.mxu0 0.0
    %1076 = vmatpush1.msra.mxu0 0.0
    %1077 = vmatprep.subr.mxu0 0.0
    %1078 = vmatpush1.msra.mxu0 0.0
    %1079 = vmatprep.subr.mxu0 0.0
    %1080 = vmatpush1.msra.mxu0 0.0
    %1081 = vmatprep.subr.mxu0 0.0
    %1082 = vmatpush1.msra.mxu0 0.0
    %1083 = vmatprep.subr.mxu0 0.0
    %1084 = vmatpush1.msra.mxu0 0.0
    %1085 = vmatprep.subr.mxu0 0.0
    %1086 = vmatpush1.msra.mxu0 0.0
    %1087 = vmatprep.subr.mxu0 0.0
    %1088 = vmatpush1.msra.mxu0 0.0
    %1089 = vmatprep.subr.mxu0 0.0
    %1090 = vmatpush1.msra.mxu0 0.0
    %1091 = vmatprep.subr.mxu0 0.0
    %1092 = vmatpush1.msra.mxu0 0.0
    %1093 = vmatprep.subr.mxu0 0.0
    %1094 = vmatpush1.msra.mxu0 0.0
    %1095 = vmatprep.subr.mxu0 0.0
    %1096 = vmatpush1.msra.mxu0 0.0
    %1097 = vmatprep.subr.mxu0 0.0
    %1098 = vmatpush1.msra.mxu0 0.0
    %1099 = vmatprep.subr.mxu0 0.0
    %1100 = vmatpush1.msra.mxu0 0.0
    %1101 = vmatprep.subr.mxu0 0.0
    %1102 = vmatpush1.msra.mxu0 0.0
    %1103 = vmatprep.subr.mxu0 0.0
    %1104 = vmatpush1.msra.mxu0 0.0
    %1105 = vmatprep.subr.mxu0 0.0
    %1106 = vmatpush1.msra.mxu0 0.0
    %1107 = vmatprep.subr.mxu0 0.0
    %1108 = vmatpush1.msra.mxu0 0.0
    %1109 = vmatprep.subr.mxu0 0.0
    %1110 = vmatpush1.msra.mxu0 0.0
    %1111 = vmatprep.subr.mxu0 0.0
    %1112 = vmatpush1.msra.mxu0 0.0
    %1113 = vmatprep.subr.mxu0 0.0
    %1114 = vmatpush1.msra.mxu0 0.0
    %1115 = vmatprep.subr.mxu0 0.0
    %1116 = vmatpush1.msra.mxu0 0.0
    %1117 = vmatprep.subr.mxu0 0.0
    %1118 = vmatpush1.msra.mxu0 0.0
    %1119 = vmatprep.subr.mxu0 0.0
    %1120 = vmatpush1.msra.mxu0 0.0
    %1121 = vmatprep.subr.mxu0 0.0
    %1122 = vmatpush1.msra.mxu0 0.0
    %1123 = vmatprep.subr.mxu0 0.0
    %1124 = vmatpush1.msra.mxu0 0.0
    %1125 = vmatprep.subr.mxu0 0.0
    %1126 = vmatpush1.msra.mxu0 0.0
    %1127 = vmatprep.subr.mxu0 0.0
    %1128 = vmatpush1.msra.mxu0 0.0
    %1129 = vmatprep.mubr.f32.mxu0 0.0
    %1130 = vmatmul.mubr.f32.gmra.mrb[0].mxu0 %v1063
    %v1131 = vpop.f32.mrb[0].mxu0
    %v1132 = vadd.f32 0.0, %v1131
    %v1133 = vpop.f32.mrb[0].mxu0
    %1134 = vdwg.mxu0
    %1135 = vrot.lane.b32.xlu0 %v291, 120
    %v1136 = vpop.permute.xlu0 %1135
    %1137 = vrot.lane.b32.xlu0 %v287, 88
    %v1138 = vpop.permute.xlu0 %1137
    %v1139 = vsel %vm295, %v1136, 0
    %v1141 = vsel %vm295, %v1138, 0
    %1143 = vmatprep.subr.mxu0 0.0
    %1144 = vmatpush1.xpose.msra.mxu0 %v1141
    %1145 = vmatprep.subr.mxu0 0.0
    %1146 = vmatpush1.xpose.msra.mxu0 0.0
    %1147 = vmatprep.subr.mxu0 0.0
    %1148 = vmatpush1.xpose.msra.mxu0 0.0
    %1149 = vmatprep.subr.mxu0 0.0
    %1150 = vmatpush1.xpose.msra.mxu0 0.0
    %1151 = vmatprep.subr.mxu0 0.0
    %1152 = vmatpush1.xpose.msra.mxu0 0.0
    %1153 = vmatprep.subr.mxu0 0.0
    %1154 = vmatpush1.xpose.msra.mxu0 0.0
    %1155 = vmatprep.subr.mxu0 0.0
    %1156 = vmatpush1.xpose.msra.mxu0 0.0
    %1157 = vmatprep.subr.mxu0 0.0
    %1158 = vmatpush1.xpose.msra.mxu0 0.0
    %1159 = vmatprep.subr.mxu0 0.0
    %1160 = vmatpush1.xpose.msra.mxu0 0.0
    %1161 = vmatprep.subr.mxu0 0.0
    %1162 = vmatpush1.xpose.msra.mxu0 0.0
    %1163 = vmatprep.subr.mxu0 0.0
    %1164 = vmatpush1.xpose.msra.mxu0 0.0
    %1165 = vmatprep.subr.mxu0 0.0
    %1166 = vmatpush1.xpose.msra.mxu0 0.0
    %1167 = vmatprep.subr.mxu0 0.0
    %1168 = vmatpush1.xpose.msra.mxu0 0.0
    %1169 = vmatprep.subr.mxu0 0.0
    %1170 = vmatpush1.xpose.msra.mxu0 0.0
    %1171 = vmatprep.subr.mxu0 0.0
    %1172 = vmatpush1.xpose.msra.mxu0 0.0
    %1173 = vmatprep.subr.mxu0 0.0
    %1174 = vmatpush1.xpose.msra.mxu0 0.0
    %1175 = vmatprep.subr.mxu0 0.0
    %1176 = vmatpush1.xpose.msra.mxu0 0.0
    %1177 = vmatprep.subr.mxu0 0.0
    %1178 = vmatpush1.xpose.msra.mxu0 0.0
    %1179 = vmatprep.subr.mxu0 0.0
    %1180 = vmatpush1.xpose.msra.mxu0 0.0
    %1181 = vmatprep.subr.mxu0 0.0
    %1182 = vmatpush1.xpose.msra.mxu0 0.0
    %1183 = vmatprep.subr.mxu0 0.0
    %1184 = vmatpush1.xpose.msra.mxu0 0.0
    %1185 = vmatprep.subr.mxu0 0.0
    %1186 = vmatpush1.xpose.msra.mxu0 0.0
    %1187 = vmatprep.subr.mxu0 0.0
    %1188 = vmatpush1.xpose.msra.mxu0 0.0
    %1189 = vmatprep.subr.mxu0 0.0
    %1190 = vmatpush1.xpose.msra.mxu0 0.0
    %1191 = vmatprep.subr.mxu0 0.0
    %1192 = vmatpush1.xpose.msra.mxu0 0.0
    %1193 = vmatprep.subr.mxu0 0.0
    %1194 = vmatpush1.xpose.msra.mxu0 0.0
    %1195 = vmatprep.subr.mxu0 0.0
    %1196 = vmatpush1.xpose.msra.mxu0 0.0
    %1197 = vmatprep.subr.mxu0 0.0
    %1198 = vmatpush1.xpose.msra.mxu0 0.0
    %1199 = vmatprep.subr.mxu0 0.0
    %1200 = vmatpush1.xpose.msra.mxu0 0.0
    %1201 = vmatprep.subr.mxu0 0.0
    %1202 = vmatpush1.xpose.msra.mxu0 0.0
    %1203 = vmatprep.subr.mxu0 0.0
    %1204 = vmatpush1.xpose.msra.mxu0 0.0
    %1205 = vmatprep.subr.mxu0 0.0
    %1206 = vmatpush1.xpose.msra.mxu0 0.0
    %1207 = vmatprep.mubr.f32.mxu0 0.0
    %1208 = vmatmul.mubr.f32.gmra.mrb[0].mxu0 %v1139
    %v1209 = vpop.f32.mrb[0].mxu0
    %v1210 = vadd.f32 0.0, %v1209
    %v1211 = vpop.f32.mrb[0].mxu0
    %1212 = vdwg.mxu0
    %v1213 = vsel %vm295, %v1210, -inf
    %1214 = vmax.xlane.f32.xlu0 %v1213
    %v1215 = vpop.xlane.xlu0 %1214
    %v1216 = vsub.f32 %v1210, %v1215
    %v1217 = vmul.f32 %v1216, 1.442695
    %v1218 = vpow.pop %v1217
    %v1219 = vsel %vm295, %v1218, 0.0
    %1220 = vadd.xlane.f32.xlu0 %v1219
    %v1221 = vpop.xlane.xlu0 %1220
    %v1222 = vrcp.pop %v1221
    %v1223 = vmul.f32 %v1218, %v1222
    %1224 = vrot.lane.b32.xlu0 %v287, 56
    %v1225 = vpop.permute.xlu0 %1224
    %v1228 = vsel %vm295, %v1223, 0
    %1230 = vmatprep.subr.mxu0 0.0
    %1231 = vmatpush1.msra.mxu0 %v1225
    %1232 = vmatprep.subr.mxu0 0.0
    %1233 = vmatpush1.msra.mxu0 0.0
    %1234 = vmatprep.subr.mxu0 0.0
    %1235 = vmatpush1.msra.mxu0 0.0
    %1236 = vmatprep.subr.mxu0 0.0
    %1237 = vmatpush1.msra.mxu0 0.0
    %1238 = vmatprep.subr.mxu0 0.0
    %1239 = vmatpush1.msra.mxu0 0.0
    %1240 = vmatprep.subr.mxu0 0.0
    %1241 = vmatpush1.msra.mxu0 0.0
    %1242 = vmatprep.subr.mxu0 0.0
    %1243 = vmatpush1.msra.mxu0 0.0
    %1244 = vmatprep.subr.mxu0 0.0
    %1245 = vmatpush1.msra.mxu0 0.0
    %1246 = vmatprep.subr.mxu0 0.0
    %1247 = vmatpush1.msra.mxu0 0.0
    %1248 = vmatprep.subr.mxu0 0.0
    %1249 = vmatpush1.msra.mxu0 0.0
    %1250 = vmatprep.subr.mxu0 0.0
    %1251 = vmatpush1.msra.mxu0 0.0
    %1252 = vmatprep.subr.mxu0 0.0
    %1253 = vmatpush1.msra.mxu0 0.0
    %1254 = vmatprep.subr.mxu0 0.0
    %1255 = vmatpush1.msra.mxu0 0.0
    %1256 = vmatprep.subr.mxu0 0.0
    %1257 = vmatpush1.msra.mxu0 0.0
    %1258 = vmatprep.subr.mxu0 0.0
    %1259 = vmatpush1.msra.mxu0 0.0
    %1260 = vmatprep.subr.mxu0 0.0
    %1261 = vmatpush1.msra.mxu0 0.0
    %1262 = vmatprep.subr.mxu0 0.0
    %1263 = vmatpush1.msra.mxu0 0.0
    %1264 = vmatprep.subr.mxu0 0.0
    %1265 = vmatpush1.msra.mxu0 0.0
    %1266 = vmatprep.subr.mxu0 0.0
    %1267 = vmatpush1.msra.mxu0 0.0
    %1268 = vmatprep.subr.mxu0 0.0
    %1269 = vmatpush1.msra.mxu0 0.0
    %1270 = vmatprep.subr.mxu0 0.0
    %1271 = vmatpush1.msra.mxu0 0.0
    %1272 = vmatprep.subr.mxu0 0.0
    %1273 = vmatpush1.msra.mxu0 0.0
    %1274 = vmatprep.subr.mxu0 0.0
    %1275 = vmatpush1.msra.mxu0 0.0
    %1276 = vmatprep.subr.mxu0 0.0
    %1277 = vmatpush1.msra.mxu0 0.0
    %1278 = vmatprep.subr.mxu0 0.0
    %1279 = vmatpush1.msra.mxu0 0.0
    %1280 = vmatprep.subr.mxu0 0.0
    %1281 = vmatpush1.msra.mxu0 0.0
    %1282 = vmatprep.subr.mxu0 0.0
    %1283 = vmatpush1.msra.mxu0 0.0
    %1284 = vmatprep.subr.mxu0 0.0
    %1285 = vmatpush1.msra.mxu0 0.0
    %1286 = vmatprep.subr.mxu0 0.0
    %1287 = vmatpush1.msra.mxu0 0.0
    %1288 = vmatprep.subr.mxu0 0.0
    %1289 = vmatpush1.msra.mxu0 0.0
    %1290 = vmatprep.subr.mxu0 0.0
    %1291 = vmatpush1.msra.mxu0 0.0
    %1292 = vmatprep.subr.mxu0 0.0
    %1293 = vmatpush1.msra.mxu0 0.0
    %1294 = vmatprep.mubr.f32.mxu0 0.0
    %1295 = vmatmul.mubr.f32.gmra.mrb[0].mxu0 %v1228
    %v1296 = vpop.f32.mrb[0].mxu0
    %v1297 = vadd.f32 0.0, %v1296
    %v1298 = vpop.f32.mrb[0].mxu0
    %1299 = vdwg.mxu0
    %1300 = vrot.lane.b32.xlu0 %v291, 112
    %v1301 = vpop.permute.xlu0 %1300
    %1302 = vrot.lane.b32.xlu0 %v287, 80
    %v1303 = vpop.permute.xlu0 %1302
    %v1304 = vsel %vm295, %v1301, 0
    %v1306 = vsel %vm295, %v1303, 0
    %1308 = vmatprep.subr.mxu0 0.0
    %1309 = vmatpush1.xpose.msra.mxu0 %v1306
    %1310 = vmatprep.subr.mxu0 0.0
    %1311 = vmatpush1.xpose.msra.mxu0 0.0
    %1312 = vmatprep.subr.mxu0 0.0
    %1313 = vmatpush1.xpose.msra.mxu0 0.0
    %1314 = vmatprep.subr.mxu0 0.0
    %1315 = vmatpush1.xpose.msra.mxu0 0.0
    %1316 = vmatprep.subr.mxu0 0.0
    %1317 = vmatpush1.xpose.msra.mxu0 0.0
    %1318 = vmatprep.subr.mxu0 0.0
    %1319 = vmatpush1.xpose.msra.mxu0 0.0
    %1320 = vmatprep.subr.mxu0 0.0
    %1321 = vmatpush1.xpose.msra.mxu0 0.0
    %1322 = vmatprep.subr.mxu0 0.0
    %1323 = vmatpush1.xpose.msra.mxu0 0.0
    %1324 = vmatprep.subr.mxu0 0.0
    %1325 = vmatpush1.xpose.msra.mxu0 0.0
    %1326 = vmatprep.subr.mxu0 0.0
    %1327 = vmatpush1.xpose.msra.mxu0 0.0
    %1328 = vmatprep.subr.mxu0 0.0
    %1329 = vmatpush1.xpose.msra.mxu0 0.0
    %1330 = vmatprep.subr.mxu0 0.0
    %1331 = vmatpush1.xpose.msra.mxu0 0.0
    %1332 = vmatprep.subr.mxu0 0.0
    %1333 = vmatpush1.xpose.msra.mxu0 0.0
    %1334 = vmatprep.subr.mxu0 0.0
    %1335 = vmatpush1.xpose.msra.mxu0 0.0
    %1336 = vmatprep.subr.mxu0 0.0
    %1337 = vmatpush1.xpose.msra.mxu0 0.0
    %1338 = vmatprep.subr.mxu0 0.0
    %1339 = vmatpush1.xpose.msra.mxu0 0.0
    %1340 = vmatprep.subr.mxu0 0.0
    %1341 = vmatpush1.xpose.msra.mxu0 0.0
    %1342 = vmatprep.subr.mxu0 0.0
    %1343 = vmatpush1.xpose.msra.mxu0 0.0
    %1344 = vmatprep.subr.mxu0 0.0
    %1345 = vmatpush1.xpose.msra.mxu0 0.0
    %1346 = vmatprep.subr.mxu0 0.0
    %1347 = vmatpush1.xpose.msra.mxu0 0.0
    %1348 = vmatprep.subr.mxu0 0.0
    %1349 = vmatpush1.xpose.msra.mxu0 0.0
    %1350 = vmatprep.subr.mxu0 0.0
    %1351 = vmatpush1.xpose.msra.mxu0 0.0
    %1352 = vmatprep.subr.mxu0 0.0
    %1353 = vmatpush1.xpose.msra.mxu0 0.0
    %1354 = vmatprep.subr.mxu0 0.0
    %1355 = vmatpush1.xpose.msra.mxu0 0.0
    %1356 = vmatprep.subr.mxu0 0.0
    %1357 = vmatpush1.xpose.msra.mxu0 0.0
    %1358 = vmatprep.subr.mxu0 0.0
    %1359 = vmatpush1.xpose.msra.mxu0 0.0
    %1360 = vmatprep.subr.mxu0 0.0
    %1361 = vmatpush1.xpose.msra.mxu0 0.0
    %1362 = vmatprep.subr.mxu0 0.0
    %1363 = vmatpush1.xpose.msra.mxu0 0.0
    %1364 = vmatprep.subr.mxu0 0.0
    %1365 = vmatpush1.xpose.msra.mxu0 0.0
    %1366 = vmatprep.subr.mxu0 0.0
    %1367 = vmatpush1.xpose.msra.mxu0 0.0
    %1368 = vmatprep.subr.mxu0 0.0
    %1369 = vmatpush1.xpose.msra.mxu0 0.0
    %1370 = vmatprep.subr.mxu0 0.0
    %1371 = vmatpush1.xpose.msra.mxu0 0.0
    %1372 = vmatprep.mubr.f32.mxu0 0.0
    %1373 = vmatmul.mubr.f32.gmra.mrb[0].mxu0 %v1304
    %v1374 = vpop.f32.mrb[0].mxu0
    %v1375 = vadd.f32 0.0, %v1374
    %v1376 = vpop.f32.mrb[0].mxu0
    %1377 = vdwg.mxu0
    %v1378 = vsel %vm295, %v1375, -inf
    %1379 = vmax.xlane.f32.xlu0 %v1378
    %v1380 = vpop.xlane.xlu0 %1379
    %v1381 = vsub.f32 %v1375, %v1380
    %v1382 = vmul.f32 %v1381, 1.442695
    %v1383 = vpow.pop %v1382
    %v1384 = vsel %vm295, %v1383, 0.0
    %1385 = vadd.xlane.f32.xlu0 %v1384
    %v1386 = vpop.xlane.xlu0 %1385
    %v1387 = vrcp.pop %v1386
    %v1388 = vmul.f32 %v1383, %v1387
    %1389 = vrot.lane.b32.xlu0 %v287, 48
    %v1390 = vpop.permute.xlu0 %1389
    %v1393 = vsel %vm295, %v1388, 0
    %1395 = vmatprep.subr.mxu0 0.0
    %1396 = vmatpush1.msra.mxu0 %v1390
    %1397 = vmatprep.subr.mxu0 0.0
    %1398 = vmatpush1.msra.mxu0 0.0
    %1399 = vmatprep.subr.mxu0 0.0
    %1400 = vmatpush1.msra.mxu0 0.0
    %1401 = vmatprep.subr.mxu0 0.0
    %1402 = vmatpush1.msra.mxu0 0.0
    %1403 = vmatprep.subr.mxu0 0.0
    %1404 = vmatpush1.msra.mxu0 0.0
    %1405 = vmatprep.subr.mxu0 0.0
    %1406 = vmatpush1.msra.mxu0 0.0
    %1407 = vmatprep.subr.mxu0 0.0
    %1408 = vmatpush1.msra.mxu0 0.0
    %1409 = vmatprep.subr.mxu0 0.0
    %1410 = vmatpush1.msra.mxu0 0.0
    %1411 = vmatprep.subr.mxu0 0.0
    %1412 = vmatpush1.msra.mxu0 0.0
    %1413 = vmatprep.subr.mxu0 0.0
    %1414 = vmatpush1.msra.mxu0 0.0
    %1415 = vmatprep.subr.mxu0 0.0
    %1416 = vmatpush1.msra.mxu0 0.0
    %1417 = vmatprep.subr.mxu0 0.0
    %1418 = vmatpush1.msra.mxu0 0.0
    %1419 = vmatprep.subr.mxu0 0.0
    %1420 = vmatpush1.msra.mxu0 0.0
    %1421 = vmatprep.subr.mxu0 0.0
    %1422 = vmatpush1.msra.mxu0 0.0
    %1423 = vmatprep.subr.mxu0 0.0
    %1424 = vmatpush1.msra.mxu0 0.0
    %1425 = vmatprep.subr.mxu0 0.0
    %1426 = vmatpush1.msra.mxu0 0.0
    %1427 = vmatprep.subr.mxu0 0.0
    %1428 = vmatpush1.msra.mxu0 0.0
    %1429 = vmatprep.subr.mxu0 0.0
    %1430 = vmatpush1.msra.mxu0 0.0
    %1431 = vmatprep.subr.mxu0 0.0
    %1432 = vmatpush1.msra.mxu0 0.0
    %1433 = vmatprep.subr.mxu0 0.0
    %1434 = vmatpush1.msra.mxu0 0.0
    %1435 = vmatprep.subr.mxu0 0.0
    %1436 = vmatpush1.msra.mxu0 0.0
    %1437 = vmatprep.subr.mxu0 0.0
    %1438 = vmatpush1.msra.mxu0 0.0
    %1439 = vmatprep.subr.mxu0 0.0
    %1440 = vmatpush1.msra.mxu0 0.0
    %1441 = vmatprep.subr.mxu0 0.0
    %1442 = vmatpush1.msra.mxu0 0.0
    %1443 = vmatprep.subr.mxu0 0.0
    %1444 = vmatpush1.msra.mxu0 0.0
    %1445 = vmatprep.subr.mxu0 0.0
    %1446 = vmatpush1.msra.mxu0 0.0
    %1447 = vmatprep.subr.mxu0 0.0
    %1448 = vmatpush1.msra.mxu0 0.0
    %1449 = vmatprep.subr.mxu0 0.0
    %1450 = vmatpush1.msra.mxu0 0.0
    %1451 = vmatprep.subr.mxu0 0.0
    %1452 = vmatpush1.msra.mxu0 0.0
    %1453 = vmatprep.subr.mxu0 0.0
    %1454 = vmatpush1.msra.mxu0 0.0
    %1455 = vmatprep.subr.mxu0 0.0
    %1456 = vmatpush1.msra.mxu0 0.0
    %1457 = vmatprep.subr.mxu0 0.0
    %1458 = vmatpush1.msra.mxu0 0.0
    %1459 = vmatprep.mubr.f32.mxu0 0.0
    %1460 = vmatmul.mubr.f32.gmra.mrb[0].mxu0 %v1393
    %v1461 = vpop.f32.mrb[0].mxu0
    %v1462 = vadd.f32 0.0, %v1461
    %v1463 = vpop.f32.mrb[0].mxu0
    %1464 = vdwg.mxu0
    %1465 = vrot.lane.b32.xlu0 %v291, 104
    %v1466 = vpop.permute.xlu0 %1465
    %1467 = vrot.lane.b32.xlu0 %v287, 72
    %v1468 = vpop.permute.xlu0 %1467
    %v1469 = vsel %vm295, %v1466, 0
    %v1471 = vsel %vm295, %v1468, 0
    %1473 = vmatprep.subr.mxu0 0.0
    %1474 = vmatpush1.xpose.msra.mxu0 %v1471
    %1475 = vmatprep.subr.mxu0 0.0
    %1476 = vmatpush1.xpose.msra.mxu0 0.0
    %1477 = vmatprep.subr.mxu0 0.0
    %1478 = vmatpush1.xpose.msra.mxu0 0.0
    %1479 = vmatprep.subr.mxu0 0.0
    %1480 = vmatpush1.xpose.msra.mxu0 0.0
    %1481 = vmatprep.subr.mxu0 0.0
    %1482 = vmatpush1.xpose.msra.mxu0 0.0
    %1483 = vmatprep.subr.mxu0 0.0
    %1484 = vmatpush1.xpose.msra.mxu0 0.0
    %1485 = vmatprep.subr.mxu0 0.0
    %1486 = vmatpush1.xpose.msra.mxu0 0.0
    %1487 = vmatprep.subr.mxu0 0.0
    %1488 = vmatpush1.xpose.msra.mxu0 0.0
    %1489 = vmatprep.subr.mxu0 0.0
    %1490 = vmatpush1.xpose.msra.mxu0 0.0
    %1491 = vmatprep.subr.mxu0 0.0
    %1492 = vmatpush1.xpose.msra.mxu0 0.0
    %1493 = vmatprep.subr.mxu0 0.0
    %1494 = vmatpush1.xpose.msra.mxu0 0.0
    %1495 = vmatprep.subr.mxu0 0.0
    %1496 = vmatpush1.xpose.msra.mxu0 0.0
    %1497 = vmatprep.subr.mxu0 0.0
    %1498 = vmatpush1.xpose.msra.mxu0 0.0
    %1499 = vmatprep.subr.mxu0 0.0
    %1500 = vmatpush1.xpose.msra.mxu0 0.0
    %1501 = vmatprep.subr.mxu0 0.0
    %1502 = vmatpush1.xpose.msra.mxu0 0.0
    %1503 = vmatprep.subr.mxu0 0.0
    %1504 = vmatpush1.xpose.msra.mxu0 0.0
    %1505 = vmatprep.subr.mxu0 0.0
    %1506 = vmatpush1.xpose.msra.mxu0 0.0
    %1507 = vmatprep.subr.mxu0 0.0
    %1508 = vmatpush1.xpose.msra.mxu0 0.0
    %1509 = vmatprep.subr.mxu0 0.0
    %1510 = vmatpush1.xpose.msra.mxu0 0.0
    %1511 = vmatprep.subr.mxu0 0.0
    %1512 = vmatpush1.xpose.msra.mxu0 0.0
    %1513 = vmatprep.subr.mxu0 0.0
    %1514 = vmatpush1.xpose.msra.mxu0 0.0
    %1515 = vmatprep.subr.mxu0 0.0
    %1516 = vmatpush1.xpose.msra.mxu0 0.0
    %1517 = vmatprep.subr.mxu0 0.0
    %1518 = vmatpush1.xpose.msra.mxu0 0.0
    %1519 = vmatprep.subr.mxu0 0.0
    %1520 = vmatpush1.xpose.msra.mxu0 0.0
    %1521 = vmatprep.subr.mxu0 0.0
    %1522 = vmatpush1.xpose.msra.mxu0 0.0
    %1523 = vmatprep.subr.mxu0 0.0
    %1524 = vmatpush1.xpose.msra.mxu0 0.0
    %1525 = vmatprep.subr.mxu0 0.0
    %1526 = vmatpush1.xpose.msra.mxu0 0.0
    %1527 = vmatprep.subr.mxu0 0.0
    %1528 = vmatpush1.xpose.msra.mxu0 0.0
    %1529 = vmatprep.subr.mxu0 0.0
    %1530 = vmatpush1.xpose.msra.mxu0 0.0
    %1531 = vmatprep.subr.mxu0 0.0
    %1532 = vmatpush1.xpose.msra.mxu0 0.0
    %1533 = vmatprep.subr.mxu0 0.0
    %1534 = vmatpush1.xpose.msra.mxu0 0.0
    %1535 = vmatprep.subr.mxu0 0.0
    %1536 = vmatpush1.xpose.msra.mxu0 0.0
    %1537 = vmatprep.mubr.f32.mxu0 0.0
    %1538 = vmatmul.mubr.f32.gmra.mrb[0].mxu0 %v1469
    %v1539 = vpop.f32.mrb[0].mxu0
    %v1540 = vadd.f32 0.0, %v1539
    %v1541 = vpop.f32.mrb[0].mxu0
    %1542 = vdwg.mxu0
    %v1543 = vsel %vm295, %v1540, -inf
    %1544 = vmax.xlane.f32.xlu0 %v1543
    %v1545 = vpop.xlane.xlu0 %1544
    %v1546 = vsub.f32 %v1540, %v1545
    %v1547 = vmul.f32 %v1546, 1.442695
    %v1548 = vpow.pop %v1547
    %v1549 = vsel %vm295, %v1548, 0.0
    %1550 = vadd.xlane.f32.xlu0 %v1549
    %v1551 = vpop.xlane.xlu0 %1550
    %v1552 = vrcp.pop %v1551
    %v1553 = vmul.f32 %v1548, %v1552
    %1554 = vrot.lane.b32.xlu0 %v287, 40
    %v1555 = vpop.permute.xlu0 %1554
    %v1558 = vsel %vm295, %v1553, 0
    %1560 = vmatprep.subr.mxu0 0.0
    %1561 = vmatpush1.msra.mxu0 %v1555
    %1562 = vmatprep.subr.mxu0 0.0
    %1563 = vmatpush1.msra.mxu0 0.0
    %1564 = vmatprep.subr.mxu0 0.0
    %1565 = vmatpush1.msra.mxu0 0.0
    %1566 = vmatprep.subr.mxu0 0.0
    %1567 = vmatpush1.msra.mxu0 0.0
    %1568 = vmatprep.subr.mxu0 0.0
    %1569 = vmatpush1.msra.mxu0 0.0
    %1570 = vmatprep.subr.mxu0 0.0
    %1571 = vmatpush1.msra.mxu0 0.0
    %1572 = vmatprep.subr.mxu0 0.0
    %1573 = vmatpush1.msra.mxu0 0.0
    %1574 = vmatprep.subr.mxu0 0.0
    %1575 = vmatpush1.msra.mxu0 0.0
    %1576 = vmatprep.subr.mxu0 0.0
    %1577 = vmatpush1.msra.mxu0 0.0
    %1578 = vmatprep.subr.mxu0 0.0
    %1579 = vmatpush1.msra.mxu0 0.0
    %1580 = vmatprep.subr.mxu0 0.0
    %1581 = vmatpush1.msra.mxu0 0.0
    %1582 = vmatprep.subr.mxu0 0.0
    %1583 = vmatpush1.msra.mxu0 0.0
    %1584 = vmatprep.subr.mxu0 0.0
    %1585 = vmatpush1.msra.mxu0 0.0
    %1586 = vmatprep.subr.mxu0 0.0
    %1587 = vmatpush1.msra.mxu0 0.0
    %1588 = vmatprep.subr.mxu0 0.0
    %1589 = vmatpush1.msra.mxu0 0.0
    %1590 = vmatprep.subr.mxu0 0.0
    %1591 = vmatpush1.msra.mxu0 0.0
    %1592 = vmatprep.subr.mxu0 0.0
    %1593 = vmatpush1.msra.mxu0 0.0
    %1594 = vmatprep.subr.mxu0 0.0
    %1595 = vmatpush1.msra.mxu0 0.0
    %1596 = vmatprep.subr.mxu0 0.0
    %1597 = vmatpush1.msra.mxu0 0.0
    %1598 = vmatprep.subr.mxu0 0.0
    %1599 = vmatpush1.msra.mxu0 0.0
    %1600 = vmatprep.subr.mxu0 0.0
    %1601 = vmatpush1.msra.mxu0 0.0
    %1602 = vmatprep.subr.mxu0 0.0
    %1603 = vmatpush1.msra.mxu0 0.0
    %1604 = vmatprep.subr.mxu0 0.0
    %1605 = vmatpush1.msra.mxu0 0.0
    %1606 = vmatprep.subr.mxu0 0.0
    %1607 = vmatpush1.msra.mxu0 0.0
    %1608 = vmatprep.subr.mxu0 0.0
    %1609 = vmatpush1.msra.mxu0 0.0
    %1610 = vmatprep.subr.mxu0 0.0
    %1611 = vmatpush1.msra.mxu0 0.0
    %1612 = vmatprep.subr.mxu0 0.0
    %1613 = vmatpush1.msra.mxu0 0.0
    %1614 = vmatprep.subr.mxu0 0.0
    %1615 = vmatpush1.msra.mxu0 0.0
    %1616 = vmatprep.subr.mxu0 0.0
    %1617 = vmatpush1.msra.mxu0 0.0
    %1618 = vmatprep.subr.mxu0 0.0
    %1619 = vmatpush1.msra.mxu0 0.0
    %1620 = vmatprep.subr.mxu0 0.0
    %1621 = vmatpush1.msra.mxu0 0.0
    %1622 = vmatprep.subr.mxu0 0.0
    %1623 = vmatpush1.msra.mxu0 0.0
    %1624 = vmatprep.mubr.f32.mxu0 0.0
    %1625 = vmatmul.mubr.f32.gmra.mrb[0].mxu0 %v1558
    %v1626 = vpop.f32.mrb[0].mxu0
    %v1627 = vadd.f32 0.0, %v1626
    %v1628 = vpop.f32.mrb[0].mxu0
    %1629 = vdwg.mxu0
    %1631 = vrot.lane.b32.xlu0 %v1297, 8
    %v1632 = vpop.permute.xlu0 %1631
    %1635 = vrot.lane.b32.xlu0 %v1462, 16
    %v1636 = vpop.permute.xlu0 %1635
    %1639 = vrot.lane.b32.xlu0 %v1627, 24
    %v1640 = vpop.permute.xlu0 %1639
    %v1642 = vsel %vm295, %v1132, %v1632
    %v1643 = vsel %vm966, %v1642, %v1636
    %v1644 = vsel %vm968, %v1643, %v1640
    %v1645 = vld [vmem:[#allocation2 + $0x18] sm:$0xff]
    %v1646 = vld [vmem:[#allocation2 + $0x48] sm:$0xff]
    %v1647 = vld [vmem:[#allocation2 + $0x78] sm:$0xff]
    %v1648 = vld [vmem:[#allocation2 + $0xa8] sm:$0xff]
    %v1649 = vld [vmem:[%s5 + $0x3] sm:$0x1]
    %v1651 = vlaneseq
    %v1652 = vshrl.u32 %v1651, 7
    %v1653 = vsub.s32 0, %v1652
    %v1654 = vrot.slane %v1649, %v1653
    %v1657 = vsel %vm210, %v969, 0
    %v1660 = vsel %vm210, %v1644, 0
    %1662 = vmatprep.subr.mxu0 0.0
    %1663 = vmatpush1.msra.mxu0 %v1645
    %1664 = vmatprep.subr.mxu0 0.0
    %1665 = vmatpush1.msra.mxu0 %v1646
    %1666 = vmatprep.subr.mxu0 0.0
    %1667 = vmatpush1.msra.mxu0 %v1647
    %1668 = vmatprep.subr.mxu0 0.0
    %1669 = vmatpush1.msra.mxu0 %v1648
    %1670 = vmatprep.subr.mxu0 0.0
    %1671 = vmatpush1.msra.mxu0 0.0
    %1672 = vmatprep.subr.mxu0 0.0
    %1673 = vmatpush1.msra.mxu0 0.0
    %1674 = vmatprep.subr.mxu0 0.0
    %1675 = vmatpush1.msra.mxu0 0.0
    %1676 = vmatprep.subr.mxu0 0.0
    %1677 = vmatpush1.msra.mxu0 0.0
    %1678 = vmatprep.subr.mxu0 0.0
    %1679 = vmatpush1.msra.mxu0 0.0
    %1680 = vmatprep.subr.mxu0 0.0
    %1681 = vmatpush1.msra.mxu0 0.0
    %1682 = vmatprep.subr.mxu0 0.0
    %1683 = vmatpush1.msra.mxu0 0.0
    %1684 = vmatprep.subr.mxu0 0.0
    %1685 = vmatpush1.msra.mxu0 0.0
    %1686 = vmatprep.subr.mxu0 0.0
    %1687 = vmatpush1.msra.mxu0 0.0
    %1688 = vmatprep.subr.mxu0 0.0
    %1689 = vmatpush1.msra.mxu0 0.0
    %1690 = vmatprep.subr.mxu0 0.0
    %1691 = vmatpush1.msra.mxu0 0.0
    %1692 = vmatprep.subr.mxu0 0.0
    %1693 = vmatpush1.msra.mxu0 0.0
    %1694 = vmatprep.subr.mxu0 0.0
    %1695 = vmatpush1.msra.mxu0 0.0
    %1696 = vmatprep.subr.mxu0 0.0
    %1697 = vmatpush1.msra.mxu0 0.0
    %1698 = vmatprep.subr.mxu0 0.0
    %1699 = vmatpush1.msra.mxu0 0.0
    %1700 = vmatprep.subr.mxu0 0.0
    %1701 = vmatpush1.msra.mxu0 0.0
    %1702 = vmatprep.subr.mxu0 0.0
    %1703 = vmatpush1.msra.mxu0 0.0
    %1704 = vmatprep.subr.mxu0 0.0
    %1705 = vmatpush1.msra.mxu0 0.0
    %1706 = vmatprep.subr.mxu0 0.0
    %1707 = vmatpush1.msra.mxu0 0.0
    %1708 = vmatprep.subr.mxu0 0.0
    %1709 = vmatpush1.msra.mxu0 0.0
    %1710 = vmatprep.subr.mxu0 0.0
    %1711 = vmatpush1.msra.mxu0 0.0
    %1712 = vmatprep.subr.mxu0 0.0
    %1713 = vmatpush1.msra.mxu0 0.0
    %1714 = vmatprep.subr.mxu0 0.0
    %1715 = vmatpush1.msra.mxu0 0.0
    %1716 = vmatprep.subr.mxu0 0.0
    %1717 = vmatpush1.msra.mxu0 0.0
    %1718 = vmatprep.subr.mxu0 0.0
    %1719 = vmatpush1.msra.mxu0 0.0
    %1720 = vmatprep.subr.mxu0 0.0
    %1721 = vmatpush1.msra.mxu0 0.0
    %1722 = vmatprep.subr.mxu0 0.0
    %1723 = vmatpush1.msra.mxu0 0.0
    %1724 = vmatprep.subr.mxu0 0.0
    %1725 = vmatpush1.msra.mxu0 0.0
    %1726 = vmatprep.mubr.f32.mxu0 0.0
    %1727 = vmatmul.mubr.f32.gmra.mrb[0].mxu0 %v1657
    %v1728 = vpop.f32.mrb[0].mxu0
    %v1729 = vadd.f32 %v1654, %v1728
    %v1730 = vpop.f32.mrb[0].mxu0
    %1731 = vmatprep.mubr.f32.mxu0 0.0
    %1732 = vmatmul.mubr.f32.gmra.mrb[0].mxu0 %v1660
    %v1733 = vpop.f32.mrb[0].mxu0
    %v1734 = vadd.f32 %v1654, %v1733
    %v1735 = vpop.f32.mrb[0].mxu0
    %1736 = vdwg.mxu0
    %v1737 = vadd.f32 %v82, %v1729
    %v1738 = vadd.f32 %v105, %v1734
    %v1739 = vld [vmem:[%s5 + $0x7] sm:$0x1]
    %v1740 = vld [vmem:[%s5 + $0x8] sm:$0x1]
    %v1741 = vsel %vm210, %v1737, 0.0
    %1742 = vadd.xlane.f32.xlu0 %v1741
    %v1743 = vpop.xlane.xlu0 %1742
    %v1744 = vsel %vm210, %v1738, 0.0
    %1745 = vadd.xlane.f32.xlu0 %v1744
    %v1746 = vpop.xlane.xlu0 %1745
    %v1747 = vrcp.pop 32.0
    %v1748 = vmul.f32 %v1743, %v1747
    %v1749 = vmul.f32 %v1746, %v1747
    %v1750 = vsub.f32 %v1737, %v1748
    %v1751 = vsub.f32 %v1738, %v1749
    %v1752 = vmul.f32 %v1750, %v1750
    %v1753 = vmul.f32 %v1751, %v1751
    %v1754 = vsel %vm210, %v1752, 0.0
    %1755 = vadd.xlane.f32.xlu0 %v1754
    %v1756 = vpop.xlane.xlu0 %1755
    %v1757 = vsel %vm210, %v1753, 0.0
    %1758 = vadd.xlane.f32.xlu0 %v1757
    %v1759 = vpop.xlane.xlu0 %1758
    %v1760 = vmul.f32 %v1756, %v1747
    %v1761 = vmul.f32 %v1759, %v1747
    %v1762 = vadd.f32 %v1760, 1e-05
    %v1763 = vadd.f32 %v1761, 1e-05
    %v1764 = vrsqrt.pop %v1762
    %v1765 = vrsqrt.pop %v1763
    %v1766 = vmul.f32 %v1750, %v1764
    %v1767 = vmul.f32 %v1751, %v1765
    %v1769 = vlaneseq
    %v1770 = vshrl.u32 %v1769, 7
    %v1771 = vsub.s32 0, %v1770
    %v1772 = vrot.slane %v1739, %v1771
    %v1774 = vmul.f32 %v1766, %v1772
    %v1775 = vmul.f32 %v1767, %v1772
    %v1777 = vlaneseq
    %v1778 = vshrl.u32 %v1777, 7
    %v1779 = vsub.s32 0, %v1778
    %v1780 = vrot.slane %v1740, %v1779
    %v1782 = vadd.f32 %v1774, %v1780
    %v1783 = vadd.f32 %v1775, %v1780
    %v1784 = vld [vmem:[#allocation2 + $0x8] sm:$0xff]
    %v1785 = vld [vmem:[#allocation2 + $0x38] sm:$0xff]
    %v1786 = vld [vmem:[#allocation2 + $0x68] sm:$0xff]
    %v1787 = vld [vmem:[#allocation2 + $0x98] sm:$0xff]
    %v1788 = vld [vmem:[%s5 + $0x1] sm:$0x1]
    %v1790 = vlaneseq
    %v1791 = vshrl.u32 %v1790, 7
    %v1792 = vsub.s32 0, %v1791
    %v1793 = vrot.slane %v1788, %v1792
    %v1795 = vsel %vm210, %v176, 0
    %v1797 = vsel %vm210, %v198, 0
    %1799 = vmatprep.subr.mxu0 0.0
    %1800 = vmatpush1.msra.mxu0 %v1784
    %1801 = vmatprep.subr.mxu0 0.0
    %1802 = vmatpush1.msra.mxu0 %v1785
    %1803 = vmatprep.subr.mxu0 0.0
    %1804 = vmatpush1.msra.mxu0 %v1786
    %1805 = vmatprep.subr.mxu0 0.0
    %1806 = vmatpush1.msra.mxu0 %v1787
    %1807 = vmatprep.subr.mxu0 0.0
    %1808 = vmatpush1.msra.mxu0 0.0
    %1809 = vmatprep.subr.mxu0 0.0
    %1810 = vmatpush1.msra.mxu0 0.0
    %1811 = vmatprep.subr.mxu0 0.0
    %1812 = vmatpush1.msra.mxu0 0.0
    %1813 = vmatprep.subr.mxu0 0.0
    %1814 = vmatpush1.msra.mxu0 0.0
    %1815 = vmatprep.subr.mxu0 0.0
    %1816 = vmatpush1.msra.mxu0 0.0
    %1817 = vmatprep.subr.mxu0 0.0
    %1818 = vmatpush1.msra.mxu0 0.0
    %1819 = vmatprep.subr.mxu0 0.0
    %1820 = vmatpush1.msra.mxu0 0.0
    %1821 = vmatprep.subr.mxu0 0.0
    %1822 = vmatpush1.msra.mxu0 0.0
    %1823 = vmatprep.subr.mxu0 0.0
    %1824 = vmatpush1.msra.mxu0 0.0
    %1825 = vmatprep.subr.mxu0 0.0
    %1826 = vmatpush1.msra.mxu0 0.0
    %1827 = vmatprep.subr.mxu0 0.0
    %1828 = vmatpush1.msra.mxu0 0.0
    %1829 = vmatprep.subr.mxu0 0.0
    %1830 = vmatpush1.msra.mxu0 0.0
    %1831 = vmatprep.subr.mxu0 0.0
    %1832 = vmatpush1.msra.mxu0 0.0
    %1833 = vmatprep.subr.mxu0 0.0
    %1834 = vmatpush1.msra.mxu0 0.0
    %1835 = vmatprep.subr.mxu0 0.0
    %1836 = vmatpush1.msra.mxu0 0.0
    %1837 = vmatprep.subr.mxu0 0.0
    %1838 = vmatpush1.msra.mxu0 0.0
    %1839 = vmatprep.subr.mxu0 0.0
    %1840 = vmatpush1.msra.mxu0 0.0
    %1841 = vmatprep.subr.mxu0 0.0
    %1842 = vmatpush1.msra.mxu0 0.0
    %1843 = vmatprep.subr.mxu0 0.0
    %1844 = vmatpush1.msra.mxu0 0.0
    %1845 = vmatprep.subr.mxu0 0.0
    %1846 = vmatpush1.msra.mxu0 0.0
    %1847 = vmatprep.subr.mxu0 0.0
    %1848 = vmatpush1.msra.mxu0 0.0
    %1849 = vmatprep.subr.mxu0 0.0
    %1850 = vmatpush1.msra.mxu0 0.0
    %1851 = vmatprep.subr.mxu0 0.0
    %1852 = vmatpush1.msra.mxu0 0.0
    %1853 = vmatprep.subr.mxu0 0.0
    %1854 = vmatpush1.msra.mxu0 0.0
    %1855 = vmatprep.subr.mxu0 0.0
    %1856 = vmatpush1.msra.mxu0 0.0
    %1857 = vmatprep.subr.mxu0 0.0
    %1858 = vmatpush1.msra.mxu0 0.0
    %1859 = vmatprep.subr.mxu0 0.0
    %1860 = vmatpush1.msra.mxu0 0.0
    %1861 = vmatprep.subr.mxu0 0.0
    %1862 = vmatpush1.msra.mxu0 0.0
    %1863 = vmatprep.mubr.f32.mxu0 0.0
    %1864 = vmatmul.mubr.f32.gmra.mrb[0].mxu0 %v1795
    %v1865 = vpop.f32.mrb[0].mxu0
    %v1866 = vadd.f32 %v1793, %v1865
    %v1867 = vpop.f32.mrb[0].mxu0
    %1868 = vmatprep.mubr.f32.mxu0 0.0
    %1869 = vmatmul.mubr.f32.gmra.mrb[0].mxu0 %v1797
    %v1870 = vpop.f32.mrb[0].mxu0
    %v1871 = vadd.f32 %v1793, %v1870
    %v1872 = vpop.f32.mrb[0].mxu0
    %1873 = vdwg.mxu0
    %v1874 = vmul.f32 %v1866, 0.35355338
    %v1875 = vmul.f32 %v1871, 0.35355338
    %v1876 = vld [vmem:[#allocation2 + $0x10] sm:$0xff]
    %v1877 = vld [vmem:[#allocation2 + $0x40] sm:$0xff]
    %v1878 = vld [vmem:[#allocation2 + $0x70] sm:$0xff]
    %v1879 = vld [vmem:[#allocation2 + $0xa0] sm:$0xff]
    %v1880 = vld [vmem:[%s5 + $0x2] sm:$0x1]
    %v1882 = vlaneseq
    %v1883 = vshrl.u32 %v1882, 7
    %v1884 = vsub.s32 0, %v1883
    %v1885 = vrot.slane %v1880, %v1884
    %v1888 = vsel %vm210, %v1782, 0
    %v1891 = vsel %vm210, %v1783, 0
    %1893 = vmatprep.subr.mxu0 0.0
    %1894 = vmatpush1.msra.mxu0 %v1876
    %1895 = vmatprep.subr.mxu0 0.0
    %1896 = vmatpush1.msra.mxu0 %v1877
    %1897 = vmatprep.subr.mxu0 0.0
    %1898 = vmatpush1.msra.mxu0 %v1878
    %1899 = vmatprep.subr.mxu0 0.0
    %1900 = vmatpush1.msra.mxu0 %v1879
    %1901 = vmatprep.subr.mxu0 0.0
    %1902 = vmatpush1.msra.mxu0 0.0
    %1903 = vmatprep.subr.mxu0 0.0
    %1904 = vmatpush1.msra.mxu0 0.0
    %1905 = vmatprep.subr.mxu0 0.0
    %1906 = vmatpush1.msra.mxu0 0.0
    %1907 = vmatprep.subr.mxu0 0.0
    %1908 = vmatpush1.msra.mxu0 0.0
    %1909 = vmatprep.subr.mxu0 0.0
    %1910 = vmatpush1.msra.mxu0 0.0
    %1911 = vmatprep.subr.mxu0 0.0
    %1912 = vmatpush1.msra.mxu0 0.0
    %1913 = vmatprep.subr.mxu0 0.0
    %1914 = vmatpush1.msra.mxu0 0.0
    %1915 = vmatprep.subr.mxu0 0.0
    %1916 = vmatpush1.msra.mxu0 0.0
    %1917 = vmatprep.subr.mxu0 0.0
    %1918 = vmatpush1.msra.mxu0 0.0
    %1919 = vmatprep.subr.mxu0 0.0
    %1920 = vmatpush1.msra.mxu0 0.0
    %1921 = vmatprep.subr.mxu0 0.0
    %1922 = vmatpush1.msra.mxu0 0.0
    %1923 = vmatprep.subr.mxu0 0.0
    %1924 = vmatpush1.msra.mxu0 0.0
    %1925 = vmatprep.subr.mxu0 0.0
    %1926 = vmatpush1.msra.mxu0 0.0
    %1927 = vmatprep.subr.mxu0 0.0
    %1928 = vmatpush1.msra.mxu0 0.0
    %1929 = vmatprep.subr.mxu0 0.0
    %1930 = vmatpush1.msra.mxu0 0.0
    %1931 = vmatprep.subr.mxu0 0.0
    %1932 = vmatpush1.msra.mxu0 0.0
    %1933 = vmatprep.subr.mxu0 0.0
    %1934 = vmatpush1.msra.mxu0 0.0
    %1935 = vmatprep.subr.mxu0 0.0
    %1936 = vmatpush1.msra.mxu0 0.0
    %1937 = vmatprep.subr.mxu0 0.0
    %1938 = vmatpush1.msra.mxu0 0.0
    %1939 = vmatprep.subr.mxu0 0.0
    %1940 = vmatpush1.msra.mxu0 0.0
    %1941 = vmatprep.subr.mxu0 0.0
    %1942 = vmatpush1.msra.mxu0 0.0
    %1943 = vmatprep.subr.mxu0 0.0
    %1944 = vmatpush1.msra.mxu0 0.0
    %1945 = vmatprep.subr.mxu0 0.0
    %1946 = vmatpush1.msra.mxu0 0.0
    %1947 = vmatprep.subr.mxu0 0.0
    %1948 = vmatpush1.msra.mxu0 0.0
    %1949 = vmatprep.subr.mxu0 0.0
    %1950 = vmatpush1.msra.mxu0 0.0
    %1951 = vmatprep.subr.mxu0 0.0
    %1952 = vmatpush1.msra.mxu0 0.0
    %1953 = vmatprep.subr.mxu0 0.0
    %1954 = vmatpush1.msra.mxu0 0.0
    %1955 = vmatprep.subr.mxu0 0.0
    %1956 = vmatpush1.msra.mxu0 0.0
    %1957 = vmatprep.mubr.f32.mxu0 0.0
    %1958 = vmatmul.mubr.f32.gmra.mrb[0].mxu0 %v1888
    %v1959 = vpop.f32.mrb[0].mxu0
    %v1960 = vadd.f32 %v1885, %v1959
    %v1961 = vpop.f32.mrb[0].mxu0
    %1962 = vmatprep.mubr.f32.mxu0 0.0
    %1963 = vmatmul.mubr.f32.gmra.mrb[0].mxu0 %v1891
    %v1964 = vpop.f32.mrb[0].mxu0
    %v1965 = vadd.f32 %v1885, %v1964
    %v1966 = vpop.f32.mrb[0].mxu0
    %1967 = vdwg.mxu0
    %v1969 = vsel %vm295, %v1874, 0
    %v1972 = vsel %vm295, %v1960, 0
    %1974 = vmatprep.subr.mxu0 0.0
    %1975 = vmatpush1.xpose.msra.mxu0 %v1972
    %1976 = vmatprep.subr.mxu0 0.0
    %1977 = vmatpush1.xpose.msra.mxu0 0.0
    %1978 = vmatprep.subr.mxu0 0.0
    %1979 = vmatpush1.xpose.msra.mxu0 0.0
    %1980 = vmatprep.subr.mxu0 0.0
    %1981 = vmatpush1.xpose.msra.mxu0 0.0
    %1982 = vmatprep.subr.mxu0 0.0
    %1983 = vmatpush1.xpose.msra.mxu0 0.0
    %1984 = vmatprep.subr.mxu0 0.0
    %1985 = vmatpush1.xpose.msra.mxu0 0.0
    %1986 = vmatprep.subr.mxu0 0.0
    %1987 = vmatpush1.xpose.msra.mxu0 0.0
    %1988 = vmatprep.subr.mxu0 0.0
    %1989 = vmatpush1.xpose.msra.mxu0 0.0
    %1990 = vmatprep.subr.mxu0 0.0
    %1991 = vmatpush1.xpose.msra.mxu0 0.0
    %1992 = vmatprep.subr.mxu0 0.0
    %1993 = vmatpush1.xpose.msra.mxu0 0.0
    %1994 = vmatprep.subr.mxu0 0.0
    %1995 = vmatpush1.xpose.msra.mxu0 0.0
    %1996 = vmatprep.subr.mxu0 0.0
    %1997 = vmatpush1.xpose.msra.mxu0 0.0
    %1998 = vmatprep.subr.mxu0 0.0
    %1999 = vmatpush1.xpose.msra.mxu0 0.0
    %2000 = vmatprep.subr.mxu0 0.0
    %2001 = vmatpush1.xpose.msra.mxu0 0.0
    %2002 = vmatprep.subr.mxu0 0.0
    %2003 = vmatpush1.xpose.msra.mxu0 0.0
    %2004 = vmatprep.subr.mxu0 0.0
    %2005 = vmatpush1.xpose.msra.mxu0 0.0
    %2006 = vmatprep.subr.mxu0 0.0
    %2007 = vmatpush1.xpose.msra.mxu0 0.0
    %2008 = vmatprep.subr.mxu0 0.0
    %2009 = vmatpush1.xpose.msra.mxu0 0.0
    %2010 = vmatprep.subr.mxu0 0.0
    %2011 = vmatpush1.xpose.msra.mxu0 0.0
    %2012 = vmatprep.subr.mxu0 0.0
    %2013 = vmatpush1.xpose.msra.mxu0 0.0
    %2014 = vmatprep.subr.mxu0 0.0
    %2015 = vmatpush1.xpose.msra.mxu0 0.0
    %2016 = vmatprep.subr.mxu0 0.0
    %2017 = vmatpush1.xpose.msra.mxu0 0.0
    %2018 = vmatprep.subr.mxu0 0.0
    %2019 = vmatpush1.xpose.msra.mxu0 0.0
    %2020 = vmatprep.subr.mxu0 0.0
    %2021 = vmatpush1.xpose.msra.mxu0 0.0
    %2022 = vmatprep.subr.mxu0 0.0
    %2023 = vmatpush1.xpose.msra.mxu0 0.0
    %2024 = vmatprep.subr.mxu0 0.0
    %2025 = vmatpush1.xpose.msra.mxu0 0.0
    %2026 = vmatprep.subr.mxu0 0.0
    %2027 = vmatpush1.xpose.msra.mxu0 0.0
    %2028 = vmatprep.subr.mxu0 0.0
    %2029 = vmatpush1.xpose.msra.mxu0 0.0
    %2030 = vmatprep.subr.mxu0 0.0
    %2031 = vmatpush1.xpose.msra.mxu0 0.0
    %2032 = vmatprep.subr.mxu0 0.0
    %2033 = vmatpush1.xpose.msra.mxu0 0.0
    %2034 = vmatprep.subr.mxu0 0.0
    %2035 = vmatpush1.xpose.msra.mxu0 0.0
    %2036 = vmatprep.subr.mxu0 0.0
    %2037 = vmatpush1.xpose.msra.mxu0 0.0
    %2038 = vmatprep.mubr.f32.mxu0 0.0
    %2039 = vmatmul.mubr.f32.gmra.mrb[0].mxu0 %v1969
    %v2040 = vpop.f32.mrb[0].mxu0
    %v2041 = vadd.f32 0.0, %v2040
    %v2042 = vpop.f32.mrb[0].mxu0
    %2043 = vdwg.mxu0
    %v2044 = vsel %vm295, %v2041, -inf
    %2045 = vmax.xlane.f32.xlu0 %v2044
    %v2046 = vpop.xlane.xlu0 %2045
    %v2047 = vsub.f32 %v2041, %v2046
    %v2048 = vmul.f32 %v2047, 1.442695
    %v2049 = vpow.pop %v2048
    %v2050 = vsel %vm295, %v2049, 0.0
    %2051 = vadd.xlane.f32.xlu0 %v2050
    %v2052 = vpop.xlane.xlu0 %2051
    %v2053 = vrcp.pop %v2052
    %v2054 = vmul.f32 %v2049, %v2053
    %2055 = vrot.lane.b32.xlu0 %v1960, 96
    %v2056 = vpop.permute.xlu0 %2055
    %v2059 = vsel %vm295, %v2054, 0
    %2061 = vmatprep.subr.mxu0 0.0
    %2062 = vmatpush1.msra.mxu0 %v2056
    %2063 = vmatprep.subr.mxu0 0.0
    %2064 = vmatpush1.msra.mxu0 0.0
    %2065 = vmatprep.subr.mxu0 0.0
    %2066 = vmatpush1.msra.mxu0 0.0
    %2067 = vmatprep.subr.mxu0 0.0
    %2068 = vmatpush1.msra.mxu0 0.0
    %2069 = vmatprep.subr.mxu0 0.0
    %2070 = vmatpush1.msra.mxu0 0.0
    %2071 = vmatprep.subr.mxu0 0.0
    %2072 = vmatpush1.msra.mxu0 0.0
    %2073 = vmatprep.subr.mxu0 0.0
    %2074 = vmatpush1.msra.mxu0 0.0
    %2075 = vmatprep.subr.mxu0 0.0
    %2076 = vmatpush1.msra.mxu0 0.0
    %2077 = vmatprep.subr.mxu0 0.0
    %2078 = vmatpush1.msra.mxu0 0.0
    %2079 = vmatprep.subr.mxu0 0.0
    %2080 = vmatpush1.msra.mxu0 0.0
    %2081 = vmatprep.subr.mxu0 0.0
    %2082 = vmatpush1.msra.mxu0 0.0
    %2083 = vmatprep.subr.mxu0 0.0
    %2084 = vmatpush1.msra.mxu0 0.0
    %2085 = vmatprep.subr.mxu0 0.0
    %2086 = vmatpush1.msra.mxu0 0.0
    %2087 = vmatprep.subr.mxu0 0.0
    %2088 = vmatpush1.msra.mxu0 0.0
    %2089 = vmatprep.subr.mxu0 0.0
    %2090 = vmatpush1.msra.mxu0 0.0
    %2091 = vmatprep.subr.mxu0 0.0
    %2092 = vmatpush1.msra.mxu0 0.0
    %2093 = vmatprep.subr.mxu0 0.0
    %2094 = vmatpush1.msra.mxu0 0.0
    %2095 = vmatprep.subr.mxu0 0.0
    %2096 = vmatpush1.msra.mxu0 0.0
    %2097 = vmatprep.subr.mxu0 0.0
    %2098 = vmatpush1.msra.mxu0 0.0
    %2099 = vmatprep.subr.mxu0 0.0
    %2100 = vmatpush1.msra.mxu0 0.0
    %2101 = vmatprep.subr.mxu0 0.0
    %2102 = vmatpush1.msra.mxu0 0.0
    %2103 = vmatprep.subr.mxu0 0.0
    %2104 = vmatpush1.msra.mxu0 0.0
    %2105 = vmatprep.subr.mxu0 0.0
    %2106 = vmatpush1.msra.mxu0 0.0
    %2107 = vmatprep.subr.mxu0 0.0
    %2108 = vmatpush1.msra.mxu0 0.0
    %2109 = vmatprep.subr.mxu0 0.0
    %2110 = vmatpush1.msra.mxu0 0.0
    %2111 = vmatprep.subr.mxu0 0.0
    %2112 = vmatpush1.msra.mxu0 0.0
    %2113 = vmatprep.subr.mxu0 0.0
    %2114 = vmatpush1.msra.mxu0 0.0
    %2115 = vmatprep.subr.mxu0 0.0
    %2116 = vmatpush1.msra.mxu0 0.0
    %2117 = vmatprep.subr.mxu0 0.0
    %2118 = vmatpush1.msra.mxu0 0.0
    %2119 = vmatprep.subr.mxu0 0.0
    %2120 = vmatpush1.msra.mxu0 0.0
    %2121 = vmatprep.subr.mxu0 0.0
    %2122 = vmatpush1.msra.mxu0 0.0
    %2123 = vmatprep.subr.mxu0 0.0
    %2124 = vmatpush1.msra.mxu0 0.0
    %2125 = vmatprep.mubr.f32.mxu0 0.0
    %2126 = vmatmul.mubr.f32.gmra.mrb[0].mxu0 %v2059
    %v2127 = vpop.f32.mrb[0].mxu0
    %v2128 = vadd.f32 0.0, %v2127
    %v2129 = vpop.f32.mrb[0].mxu0
    %2130 = vdwg.mxu0
    %2131 = vrot.lane.b32.xlu0 %v1874, 120
    %v2132 = vpop.permute.xlu0 %2131
    %2133 = vrot.lane.b32.xlu0 %v1960, 120
    %v2134 = vpop.permute.xlu0 %2133
    %v2135 = vsel %vm295, %v2132, 0
    %v2137 = vsel %vm295, %v2134, 0
    %2139 = vmatprep.subr.mxu0 0.0
    %2140 = vmatpush1.xpose.msra.mxu0 %v2137
    %2141 = vmatprep.subr.mxu0 0.0
    %2142 = vmatpush1.xpose.msra.mxu0 0.0
    %2143 = vmatprep.subr.mxu0 0.0
    %2144 = vmatpush1.xpose.msra.mxu0 0.0
    %2145 = vmatprep.subr.mxu0 0.0
    %2146 = vmatpush1.xpose.msra.mxu0 0.0
    %2147 = vmatprep.subr.mxu0 0.0
    %2148 = vmatpush1.xpose.msra.mxu0 0.0
    %2149 = vmatprep.subr.mxu0 0.0
    %2150 = vmatpush1.xpose.msra.mxu0 0.0
    %2151 = vmatprep.subr.mxu0 0.0
    %2152 = vmatpush1.xpose.msra.mxu0 0.0
    %2153 = vmatprep.subr.mxu0 0.0
    %2154 = vmatpush1.xpose.msra.mxu0 0.0
    %2155 = vmatprep.subr.mxu0 0.0
    %2156 = vmatpush1.xpose.msra.mxu0 0.0
    %2157 = vmatprep.subr.mxu0 0.0
    %2158 = vmatpush1.xpose.msra.mxu0 0.0
    %2159 = vmatprep.subr.mxu0 0.0
    %2160 = vmatpush1.xpose.msra.mxu0 0.0
    %2161 = vmatprep.subr.mxu0 0.0
    %2162 = vmatpush1.xpose.msra.mxu0 0.0
    %2163 = vmatprep.subr.mxu0 0.0
    %2164 = vmatpush1.xpose.msra.mxu0 0.0
    %2165 = vmatprep.subr.mxu0 0.0
    %2166 = vmatpush1.xpose.msra.mxu0 0.0
    %2167 = vmatprep.subr.mxu0 0.0
    %2168 = vmatpush1.xpose.msra.mxu0 0.0
    %2169 = vmatprep.subr.mxu0 0.0
    %2170 = vmatpush1.xpose.msra.mxu0 0.0
    %2171 = vmatprep.subr.mxu0 0.0
    %2172 = vmatpush1.xpose.msra.mxu0 0.0
    %2173 = vmatprep.subr.mxu0 0.0
    %2174 = vmatpush1.xpose.msra.mxu0 0.0
    %2175 = vmatprep.subr.mxu0 0.0
    %2176 = vmatpush1.xpose.msra.mxu0 0.0
    %2177 = vmatprep.subr.mxu0 0.0
    %2178 = vmatpush1.xpose.msra.mxu0 0.0
    %2179 = vmatprep.subr.mxu0 0.0
    %2180 = vmatpush1.xpose.msra.mxu0 0.0
    %2181 = vmatprep.subr.mxu0 0.0
    %2182 = vmatpush1.xpose.msra.mxu0 0.0
    %2183 = vmatprep.subr.mxu0 0.0
    %2184 = vmatpush1.xpose.msra.mxu0 0.0
    %2185 = vmatprep.subr.mxu0 0.0
    %2186 = vmatpush1.xpose.msra.mxu0 0.0
    %2187 = vmatprep.subr.mxu0 0.0
    %2188 = vmatpush1.xpose.msra.mxu0 0.0
    %2189 = vmatprep.subr.mxu0 0.0
    %2190 = vmatpush1.xpose.msra.mxu0 0.0
    %2191 = vmatprep.subr.mxu0 0.0
    %2192 = vmatpush1.xpose.msra.mxu0 0.0
    %2193 = vmatprep.subr.mxu0 0.0
    %2194 = vmatpush1.xpose.msra.mxu0 0.0
    %2195 = vmatprep.subr.mxu0 0.0
    %2196 = vmatpush1.xpose.msra.mxu0 0.0
    %2197 = vmatprep.subr.mxu0 0.0
    %2198 = vmatpush1.xpose.msra.mxu0 0.0
    %2199 = vmatprep.subr.mxu0 0.0
    %2200 = vmatpush1.xpose.msra.mxu0 0.0
    %2201 = vmatprep.subr.mxu0 0.0
    %2202 = vmatpush1.xpose.msra.mxu0 0.0
    %2203 = vmatprep.mubr.f32.mxu0 0.0
    %2204 = vmatmul.mubr.f32.gmra.mrb[0].mxu0 %v2135
    %v2205 = vpop.f32.mrb[0].mxu0
    %v2206 = vadd.f32 0.0, %v2205
    %v2207 = vpop.f32.mrb[0].mxu0
    %2208 = vdwg.mxu0
    %v2209 = vsel %vm295, %v2206, -inf
    %2210 = vmax.xlane.f32.xlu0 %v2209
    %v2211 = vpop.xlane.xlu0 %2210
    %v2212 = vsub.f32 %v2206, %v2211
    %v2213 = vmul.f32 %v2212, 1.442695
    %v2214 = vpow.pop %v2213
    %v2215 = vsel %vm295, %v2214, 0.0
    %2216 = vadd.xlane.f32.xlu0 %v2215
    %v2217 = vpop.xlane.xlu0 %2216
    %v2218 = vrcp.pop %v2217
    %v2219 = vmul.f32 %v2214, %v2218
    %2220 = vrot.lane.b32.xlu0 %v1960, 88
    %v2221 = vpop.permute.xlu0 %2220
    %v2224 = vsel %vm295, %v2219, 0
    %2226 = vmatprep.subr.mxu0 0.0
    %2227 = vmatpush1.msra.mxu0 %v2221
    %2228 = vmatprep.subr.mxu0 0.0
    %2229 = vmatpush1.msra.mxu0 0.0
    %2230 = vmatprep.subr.mxu0 0.0
    %2231 = vmatpush1.msra.mxu0 0.0
    %2232 = vmatprep.subr.mxu0 0.0
    %2233 = vmatpush1.msra.mxu0 0.0
    %2234 = vmatprep.subr.mxu0 0.0
    %2235 = vmatpush1.msra.mxu0 0.0
    %2236 = vmatprep.subr.mxu0 0.0
    %2237 = vmatpush1.msra.mxu0 0.0
    %2238 = vmatprep.subr.mxu0 0.0
    %2239 = vmatpush1.msra.mxu0 0.0
    %2240 = vmatprep.subr.mxu0 0.0
    %2241 = vmatpush1.msra.mxu0 0.0
    %2242 = vmatprep.subr.mxu0 0.0
    %2243 = vmatpush1.msra.mxu0 0.0
    %2244 = vmatprep.subr.mxu0 0.0
    %2245 = vmatpush1.msra.mxu0 0.0
    %2246 = vmatprep.subr.mxu0 0.0
    %2247 = vmatpush1.msra.mxu0 0.0
    %2248 = vmatprep.subr.mxu0 0.0
    %2249 = vmatpush1.msra.mxu0 0.0
    %2250 = vmatprep.subr.mxu0 0.0
    %2251 = vmatpush1.msra.mxu0 0.0
    %2252 = vmatprep.subr.mxu0 0.0
    %2253 = vmatpush1.msra.mxu0 0.0
    %2254 = vmatprep.subr.mxu0 0.0
    %2255 = vmatpush1.msra.mxu0 0.0
    %2256 = vmatprep.subr.mxu0 0.0
    %2257 = vmatpush1.msra.mxu0 0.0
    %2258 = vmatprep.subr.mxu0 0.0
    %2259 = vmatpush1.msra.mxu0 0.0
    %2260 = vmatprep.subr.mxu0 0.0
    %2261 = vmatpush1.msra.mxu0 0.0
    %2262 = vmatprep.subr.mxu0 0.0
    %2263 = vmatpush1.msra.mxu0 0.0
    %2264 = vmatprep.subr.mxu0 0.0
    %2265 = vmatpush1.msra.mxu0 0.0
    %2266 = vmatprep.subr.mxu0 0.0
    %2267 = vmatpush1.msra.mxu0 0.0
    %2268 = vmatprep.subr.mxu0 0.0
    %2269 = vmatpush1.msra.mxu0 0.0
    %2270 = vmatprep.subr.mxu0 0.0
    %2271 = vmatpush1.msra.mxu0 0.0
    %2272 = vmatprep.subr.mxu0 0.0
    %2273 = vmatpush1.msra.mxu0 0.0
    %2274 = vmatprep.subr.mxu0 0.0
    %2275 = vmatpush1.msra.mxu0 0.0
    %2276 = vmatprep.subr.mxu0 0.0
    %2277 = vmatpush1.msra.mxu0 0.0
    %2278 = vmatprep.subr.mxu0 0.0
    %2279 = vmatpush1.msra.mxu0 0.0
    %2280 = vmatprep.subr.mxu0 0.0
    %2281 = vmatpush1.msra.mxu0 0.0
    %2282 = vmatprep.subr.mxu0 0.0
    %2283 = vmatpush1.msra.mxu0 0.0
    %2284 = vmatprep.subr.mxu0 0.0
    %2285 = vmatpush1.msra.mxu0 0.0
    %2286 = vmatprep.subr.mxu0 0.0
    %2287 = vmatpush1.msra.mxu0 0.0
    %2288 = vmatprep.subr.mxu0 0.0
    %2289 = vmatpush1.msra.mxu0 0.0
    %2290 = vmatprep.mubr.f32.mxu0 0.0
    %2291 = vmatmul.mubr.f32.gmra.mrb[0].mxu0 %v2224
    %v2292 = vpop.f32.mrb[0].mxu0
    %v2293 = vadd.f32 0.0, %v2292
    %v2294 = vpop.f32.mrb[0].mxu0
    %2295 = vdwg.mxu0
    %2296 = vrot.lane.b32.xlu0 %v1874, 112
    %v2297 = vpop.permute.xlu0 %2296
    %2298 = vrot.lane.b32.xlu0 %v1960, 112
    %v2299 = vpop.permute.xlu0 %2298
    %v2300 = vsel %vm295, %v2297, 0
    %v2302 = vsel %vm295, %v2299, 0
    %2304 = vmatprep.subr.mxu0 0.0
    %2305 = vmatpush1.xpose.msra.mxu0 %v2302
    %2306 = vmatprep.subr.mxu0 0.0
    %2307 = vmatpush1.xpose.msra.mxu0 0.0
    %2308 = vmatprep.subr.mxu0 0.0
    %2309 = vmatpush1.xpose.msra.mxu0 0.0
    %2310 = vmatprep.subr.mxu0 0.0
    %2311 = vmatpush1.xpose.msra.mxu0 0.0
    %2312 = vmatprep.subr.mxu0 0.0
    %2313 = vmatpush1.xpose.msra.mxu0 0.0
    %2314 = vmatprep.subr.mxu0 0.0
    %2315 = vmatpush1.xpose.msra.mxu0 0.0
    %2316 = vmatprep.subr.mxu0 0.0
    %2317 = vmatpush1.xpose.msra.mxu0 0.0
    %2318 = vmatprep.subr.mxu0 0.0
    %2319 = vmatpush1.xpose.msra.mxu0 0.0
    %2320 = vmatprep.subr.mxu0 0.0
    %2321 = vmatpush1.xpose.msra.mxu0 0.0
    %2322 = vmatprep.subr.mxu0 0.0
    %2323 = vmatpush1.xpose.msra.mxu0 0.0
    %2324 = vmatprep.subr.mxu0 0.0
    %2325 = vmatpush1.xpose.msra.mxu0 0.0
    %2326 = vmatprep.subr.mxu0 0.0
    %2327 = vmatpush1.xpose.msra.mxu0 0.0
    %2328 = vmatprep.subr.mxu0 0.0
    %2329 = vmatpush1.xpose.msra.mxu0 0.0
    %2330 = vmatprep.subr.mxu0 0.0
    %2331 = vmatpush1.xpose.msra.mxu0 0.0
    %2332 = vmatprep.subr.mxu0 0.0
    %2333 = vmatpush1.xpose.msra.mxu0 0.0
    %2334 = vmatprep.subr.mxu0 0.0
    %2335 = vmatpush1.xpose.msra.mxu0 0.0
    %2336 = vmatprep.subr.mxu0 0.0
    %2337 = vmatpush1.xpose.msra.mxu0 0.0
    %2338 = vmatprep.subr.mxu0 0.0
    %2339 = vmatpush1.xpose.msra.mxu0 0.0
    %2340 = vmatprep.subr.mxu0 0.0
    %2341 = vmatpush1.xpose.msra.mxu0 0.0
    %2342 = vmatprep.subr.mxu0 0.0
    %2343 = vmatpush1.xpose.msra.mxu0 0.0
    %2344 = vmatprep.subr.mxu0 0.0
    %2345 = vmatpush1.xpose.msra.mxu0 0.0
    %2346 = vmatprep.subr.mxu0 0.0
    %2347 = vmatpush1.xpose.msra.mxu0 0.0
    %2348 = vmatprep.subr.mxu0 0.0
    %2349 = vmatpush1.xpose.msra.mxu0 0.0
    %2350 = vmatprep.subr.mxu0 0.0
    %2351 = vmatpush1.xpose.msra.mxu0 0.0
    %2352 = vmatprep.subr.mxu0 0.0
    %2353 = vmatpush1.xpose.msra.mxu0 0.0
    %2354 = vmatprep.subr.mxu0 0.0
    %2355 = vmatpush1.xpose.msra.mxu0 0.0
    %2356 = vmatprep.subr.mxu0 0.0
    %2357 = vmatpush1.xpose.msra.mxu0 0.0
    %2358 = vmatprep.subr.mxu0 0.0
    %2359 = vmatpush1.xpose.msra.mxu0 0.0
    %2360 = vmatprep.subr.mxu0 0.0
    %2361 = vmatpush1.xpose.msra.mxu0 0.0
    %2362 = vmatprep.subr.mxu0 0.0
    %2363 = vmatpush1.xpose.msra.mxu0 0.0
    %2364 = vmatprep.subr.mxu0 0.0
    %2365 = vmatpush1.xpose.msra.mxu0 0.0
    %2366 = vmatprep.subr.mxu0 0.0
    %2367 = vmatpush1.xpose.msra.mxu0 0.0
    %2368 = vmatprep.mubr.f32.mxu0 0.0
    %2369 = vmatmul.mubr.f32.gmra.mrb[0].mxu0 %v2300
    %v2370 = vpop.f32.mrb[0].mxu0
    %v2371 = vadd.f32 0.0, %v2370
    %v2372 = vpop.f32.mrb[0].mxu0
    %2373 = vdwg.mxu0
    %v2374 = vsel %vm295, %v2371, -inf
    %2375 = vmax.xlane.f32.xlu0 %v2374
    %v2376 = vpop.xlane.xlu0 %2375
    %v2377 = vsub.f32 %v2371, %v2376
    %v2378 = vmul.f32 %v2377, 1.442695
    %v2379 = vpow.pop %v2378
    %v2380 = vsel %vm295, %v2379, 0.0
    %2381 = vadd.xlane.f32.xlu0 %v2380
    %v2382 = vpop.xlane.xlu0 %2381
    %v2383 = vrcp.pop %v2382
    %v2384 = vmul.f32 %v2379, %v2383
    %2385 = vrot.lane.b32.xlu0 %v1960, 80
    %v2386 = vpop.permute.xlu0 %2385
    %v2389 = vsel %vm295, %v2384, 0
    %2391 = vmatprep.subr.mxu0 0.0
    %2392 = vmatpush1.msra.mxu0 %v2386
    %2393 = vmatprep.subr.mxu0 0.0
    %2394 = vmatpush1.msra.mxu0 0.0
    %2395 = vmatprep.subr.mxu0 0.0
    %2396 = vmatpush1.msra.mxu0 0.0
    %2397 = vmatprep.subr.mxu0 0.0
    %2398 = vmatpush1.msra.mxu0 0.0
    %2399 = vmatprep.subr.mxu0 0.0
    %2400 = vmatpush1.msra.mxu0 0.0
    %2401 = vmatprep.subr.mxu0 0.0
    %2402 = vmatpush1.msra.mxu0 0.0
    %2403 = vmatprep.subr.mxu0 0.0
    %2404 = vmatpush1.msra.mxu0 0.0
    %2405 = vmatprep.subr.mxu0 0.0
    %2406 = vmatpush1.msra.mxu0 0.0
    %2407 = vmatprep.subr.mxu0 0.0
    %2408 = vmatpush1.msra.mxu0 0.0
    %2409 = vmatprep.subr.mxu0 0.0
    %2410 = vmatpush1.msra.mxu0 0.0
    %2411 = vmatprep.subr.mxu0 0.0
    %2412 = vmatpush1.msra.mxu0 0.0
    %2413 = vmatprep.subr.mxu0 0.0
    %2414 = vmatpush1.msra.mxu0 0.0
    %2415 = vmatprep.subr.mxu0 0.0
    %2416 = vmatpush1.msra.mxu0 0.0
    %2417 = vmatprep.subr.mxu0 0.0
    %2418 = vmatpush1.msra.mxu0 0.0
    %2419 = vmatprep.subr.mxu0 0.0
    %2420 = vmatpush1.msra.mxu0 0.0
    %2421 = vmatprep.subr.mxu0 0.0
    %2422 = vmatpush1.msra.mxu0 0.0
    %2423 = vmatprep.subr.mxu0 0.0
    %2424 = vmatpush1.msra.mxu0 0.0
    %2425 = vmatprep.subr.mxu0 0.0
    %2426 = vmatpush1.msra.mxu0 0.0
    %2427 = vmatprep.subr.mxu0 0.0
    %2428 = vmatpush1.msra.mxu0 0.0
    %2429 = vmatprep.subr.mxu0 0.0
    %2430 = vmatpush1.msra.mxu0 0.0
    %2431 = vmatprep.subr.mxu0 0.0
    %2432 = vmatpush1.msra.mxu0 0.0
    %2433 = vmatprep.subr.mxu0 0.0
    %2434 = vmatpush1.msra.mxu0 0.0
    %2435 = vmatprep.subr.mxu0 0.0
    %2436 = vmatpush1.msra.mxu0 0.0
    %2437 = vmatprep.subr.mxu0 0.0
    %2438 = vmatpush1.msra.mxu0 0.0
    %2439 = vmatprep.subr.mxu0 0.0
    %2440 = vmatpush1.msra.mxu0 0.0
    %2441 = vmatprep.subr.mxu0 0.0
    %2442 = vmatpush1.msra.mxu0 0.0
    %2443 = vmatprep.subr.mxu0 0.0
    %2444 = vmatpush1.msra.mxu0 0.0
    %2445 = vmatprep.subr.mxu0 0.0
    %2446 = vmatpush1.msra.mxu0 0.0
    %2447 = vmatprep.subr.mxu0 0.0
    %2448 = vmatpush1.msra.mxu0 0.0
    %2449 = vmatprep.subr.mxu0 0.0
    %2450 = vmatpush1.msra.mxu0 0.0
    %2451 = vmatprep.subr.mxu0 0.0
    %2452 = vmatpush1.msra.mxu0 0.0
    %2453 = vmatprep.subr.mxu0 0.0
    %2454 = vmatpush1.msra.mxu0 0.0
    %2455 = vmatprep.mubr.f32.mxu0 0.0
    %2456 = vmatmul.mubr.f32.gmra.mrb[0].mxu0 %v2389
    %v2457 = vpop.f32.mrb[0].mxu0
    %v2458 = vadd.f32 0.0, %v2457
    %v2459 = vpop.f32.mrb[0].mxu0
    %2460 = vdwg.mxu0
    %2461 = vrot.lane.b32.xlu0 %v1874, 104
    %v2462 = vpop.permute.xlu0 %2461
    %2463 = vrot.lane.b32.xlu0 %v1960, 104
    %v2464 = vpop.permute.xlu0 %2463
    %v2465 = vsel %vm295, %v2462, 0
    %v2467 = vsel %vm295, %v2464, 0
    %2469 = vmatprep.subr.mxu0 0.0
    %2470 = vmatpush1.xpose.msra.mxu0 %v2467
    %2471 = vmatprep.subr.mxu0 0.0
    %2472 = vmatpush1.xpose.msra.mxu0 0.0
    %2473 = vmatprep.subr.mxu0 0.0
    %2474 = vmatpush1.xpose.msra.mxu0 0.0
    %2475 = vmatprep.subr.mxu0 0.0
    %2476 = vmatpush1.xpose.msra.mxu0 0.0
    %2477 = vmatprep.subr.mxu0 0.0
    %2478 = vmatpush1.xpose.msra.mxu0 0.0
    %2479 = vmatprep.subr.mxu0 0.0
    %2480 = vmatpush1.xpose.msra.mxu0 0.0
    %2481 = vmatprep.subr.mxu0 0.0
    %2482 = vmatpush1.xpose.msra.mxu0 0.0
    %2483 = vmatprep.subr.mxu0 0.0
    %2484 = vmatpush1.xpose.msra.mxu0 0.0
    %2485 = vmatprep.subr.mxu0 0.0
    %2486 = vmatpush1.xpose.msra.mxu0 0.0
    %2487 = vmatprep.subr.mxu0 0.0
    %2488 = vmatpush1.xpose.msra.mxu0 0.0
    %2489 = vmatprep.subr.mxu0 0.0
    %2490 = vmatpush1.xpose.msra.mxu0 0.0
    %2491 = vmatprep.subr.mxu0 0.0
    %2492 = vmatpush1.xpose.msra.mxu0 0.0
    %2493 = vmatprep.subr.mxu0 0.0
    %2494 = vmatpush1.xpose.msra.mxu0 0.0
    %2495 = vmatprep.subr.mxu0 0.0
    %2496 = vmatpush1.xpose.msra.mxu0 0.0
    %2497 = vmatprep.subr.mxu0 0.0
    %2498 = vmatpush1.xpose.msra.mxu0 0.0
    %2499 = vmatprep.subr.mxu0 0.0
    %2500 = vmatpush1.xpose.msra.mxu0 0.0
    %2501 = vmatprep.subr.mxu0 0.0
    %2502 = vmatpush1.xpose.msra.mxu0 0.0
    %2503 = vmatprep.subr.mxu0 0.0
    %2504 = vmatpush1.xpose.msra.mxu0 0.0
    %2505 = vmatprep.subr.mxu0 0.0
    %2506 = vmatpush1.xpose.msra.mxu0 0.0
    %2507 = vmatprep.subr.mxu0 0.0
    %2508 = vmatpush1.xpose.msra.mxu0 0.0
    %2509 = vmatprep.subr.mxu0 0.0
    %2510 = vmatpush1.xpose.msra.mxu0 0.0
    %2511 = vmatprep.subr.mxu0 0.0
    %2512 = vmatpush1.xpose.msra.mxu0 0.0
    %2513 = vmatprep.subr.mxu0 0.0
    %2514 = vmatpush1.xpose.msra.mxu0 0.0
    %2515 = vmatprep.subr.mxu0 0.0
    %2516 = vmatpush1.xpose.msra.mxu0 0.0
    %2517 = vmatprep.subr.mxu0 0.0
    %2518 = vmatpush1.xpose.msra.mxu0 0.0
    %2519 = vmatprep.subr.mxu0 0.0
    %2520 = vmatpush1.xpose.msra.mxu0 0.0
    %2521 = vmatprep.subr.mxu0 0.0
    %2522 = vmatpush1.xpose.msra.mxu0 0.0
    %2523 = vmatprep.subr.mxu0 0.0
    %2524 = vmatpush1.xpose.msra.mxu0 0.0
    %2525 = vmatprep.subr.mxu0 0.0
    %2526 = vmatpush1.xpose.msra.mxu0 0.0
    %2527 = vmatprep.subr.mxu0 0.0
    %2528 = vmatpush1.xpose.msra.mxu0 0.0
    %2529 = vmatprep.subr.mxu0 0.0
    %2530 = vmatpush1.xpose.msra.mxu0 0.0
    %2531 = vmatprep.subr.mxu0 0.0
    %2532 = vmatpush1.xpose.msra.mxu0 0.0
    %2533 = vmatprep.mubr.f32.mxu0 0.0
    %2534 = vmatmul.mubr.f32.gmra.mrb[0].mxu0 %v2465
    %v2535 = vpop.f32.mrb[0].mxu0
    %v2536 = vadd.f32 0.0, %v2535
    %v2537 = vpop.f32.mrb[0].mxu0
    %2538 = vdwg.mxu0
    %v2539 = vsel %vm295, %v2536, -inf
    %2540 = vmax.xlane.f32.xlu0 %v2539
    %v2541 = vpop.xlane.xlu0 %2540
    %v2542 = vsub.f32 %v2536, %v2541
    %v2543 = vmul.f32 %v2542, 1.442695
    %v2544 = vpow.pop %v2543
    %v2545 = vsel %vm295, %v2544, 0.0
    %2546 = vadd.xlane.f32.xlu0 %v2545
    %v2547 = vpop.xlane.xlu0 %2546
    %v2548 = vrcp.pop %v2547
    %v2549 = vmul.f32 %v2544, %v2548
    %2550 = vrot.lane.b32.xlu0 %v1960, 72
    %v2551 = vpop.permute.xlu0 %2550
    %v2554 = vsel %vm295, %v2549, 0
    %2556 = vmatprep.subr.mxu0 0.0
    %2557 = vmatpush1.msra.mxu0 %v2551
    %2558 = vmatprep.subr.mxu0 0.0
    %2559 = vmatpush1.msra.mxu0 0.0
    %2560 = vmatprep.subr.mxu0 0.0
    %2561 = vmatpush1.msra.mxu0 0.0
    %2562 = vmatprep.subr.mxu0 0.0
    %2563 = vmatpush1.msra.mxu0 0.0
    %2564 = vmatprep.subr.mxu0 0.0
    %2565 = vmatpush1.msra.mxu0 0.0
    %2566 = vmatprep.subr.mxu0 0.0
    %2567 = vmatpush1.msra.mxu0 0.0
    %2568 = vmatprep.subr.mxu0 0.0
    %2569 = vmatpush1.msra.mxu0 0.0
    %2570 = vmatprep.subr.mxu0 0.0
    %2571 = vmatpush1.msra.mxu0 0.0
    %2572 = vmatprep.subr.mxu0 0.0
    %2573 = vmatpush1.msra.mxu0 0.0
    %2574 = vmatprep.subr.mxu0 0.0
    %2575 = vmatpush1.msra.mxu0 0.0
    %2576 = vmatprep.subr.mxu0 0.0
    %2577 = vmatpush1.msra.mxu0 0.0
    %2578 = vmatprep.subr.mxu0 0.0
    %2579 = vmatpush1.msra.mxu0 0.0
    %2580 = vmatprep.subr.mxu0 0.0
    %2581 = vmatpush1.msra.mxu0 0.0
    %2582 = vmatprep.subr.mxu0 0.0
    %2583 = vmatpush1.msra.mxu0 0.0
    %2584 = vmatprep.subr.mxu0 0.0
    %2585 = vmatpush1.msra.mxu0 0.0
    %2586 = vmatprep.subr.mxu0 0.0
    %2587 = vmatpush1.msra.mxu0 0.0
    %2588 = vmatprep.subr.mxu0 0.0
    %2589 = vmatpush1.msra.mxu0 0.0
    %2590 = vmatprep.subr.mxu0 0.0
    %2591 = vmatpush1.msra.mxu0 0.0
    %2592 = vmatprep.subr.mxu0 0.0
    %2593 = vmatpush1.msra.mxu0 0.0
    %2594 = vmatprep.subr.mxu0 0.0
    %2595 = vmatpush1.msra.mxu0 0.0
    %2596 = vmatprep.subr.mxu0 0.0
    %2597 = vmatpush1.msra.mxu0 0.0
    %2598 = vmatprep.subr.mxu0 0.0
    %2599 = vmatpush1.msra.mxu0 0.0
    %2600 = vmatprep.subr.mxu0 0.0
    %2601 = vmatpush1.msra.mxu0 0.0
    %2602 = vmatprep.subr.mxu0 0.0
    %2603 = vmatpush1.msra.mxu0 0.0
    %2604 = vmatprep.subr.mxu0 0.0
    %2605 = vmatpush1.msra.mxu0 0.0
    %2606 = vmatprep.subr.mxu0 0.0
    %2607 = vmatpush1.msra.mxu0 0.0
    %2608 = vmatprep.subr.mxu0 0.0
    %2609 = vmatpush1.msra.mxu0 0.0
    %2610 = vmatprep.subr.mxu0 0.0
    %2611 = vmatpush1.msra.mxu0 0.0
    %2612 = vmatprep.subr.mxu0 0.0
    %2613 = vmatpush1.msra.mxu0 0.0
    %2614 = vmatprep.subr.mxu0 0.0
    %2615 = vmatpush1.msra.mxu0 0.0
    %2616 = vmatprep.subr.mxu0 0.0
    %2617 = vmatpush1.msra.mxu0 0.0
    %2618 = vmatprep.subr.mxu0 0.0
    %2619 = vmatpush1.msra.mxu0 0.0
    %2620 = vmatprep.mubr.f32.mxu0 0.0
    %2621 = vmatmul.mubr.f32.gmra.mrb[0].mxu0 %v2554
    %v2622 = vpop.f32.mrb[0].mxu0
    %v2623 = vadd.f32 0.0, %v2622
    %v2624 = vpop.f32.mrb[0].mxu0
    %2625 = vdwg.mxu0
    %2627 = vrot.lane.b32.xlu0 %v2293, 8
    %v2628 = vpop.permute.xlu0 %2627
    %2631 = vrot.lane.b32.xlu0 %v2458, 16
    %v2632 = vpop.permute.xlu0 %2631
    %2635 = vrot.lane.b32.xlu0 %v2623, 24
    %v2636 = vpop.permute.xlu0 %2635
    %v2638 = vsel %vm295, %v2128, %v2628
    %v2639 = vsel %vm966, %v2638, %v2632
    %v2640 = vsel %vm968, %v2639, %v2636
    %v2642 = vsel %vm295, %v1875, 0
    %v2645 = vsel %vm295, %v1965, 0
    %2647 = vmatprep.subr.mxu0 0.0
    %2648 = vmatpush1.xpose.msra.mxu0 %v2645
    %2649 = vmatprep.subr.mxu0 0.0
    %2650 = vmatpush1.xpose.msra.mxu0 0.0
    %2651 = vmatprep.subr.mxu0 0.0
    %2652 = vmatpush1.xpose.msra.mxu0 0.0
    %2653 = vmatprep.subr.mxu0 0.0
    %2654 = vmatpush1.xpose.msra.mxu0 0.0
    %2655 = vmatprep.subr.mxu0 0.0
    %2656 = vmatpush1.xpose.msra.mxu0 0.0
    %2657 = vmatprep.subr.mxu0 0.0
    %2658 = vmatpush1.xpose.msra.mxu0 0.0
    %2659 = vmatprep.subr.mxu0 0.0
    %2660 = vmatpush1.xpose.msra.mxu0 0.0
    %2661 = vmatprep.subr.mxu0 0.0
    %2662 = vmatpush1.xpose.msra.mxu0 0.0
    %2663 = vmatprep.subr.mxu0 0.0
    %2664 = vmatpush1.xpose.msra.mxu0 0.0
    %2665 = vmatprep.subr.mxu0 0.0
    %2666 = vmatpush1.xpose.msra.mxu0 0.0
    %2667 = vmatprep.subr.mxu0 0.0
    %2668 = vmatpush1.xpose.msra.mxu0 0.0
    %2669 = vmatprep.subr.mxu0 0.0
    %2670 = vmatpush1.xpose.msra.mxu0 0.0
    %2671 = vmatprep.subr.mxu0 0.0
    %2672 = vmatpush1.xpose.msra.mxu0 0.0
    %2673 = vmatprep.subr.mxu0 0.0
    %2674 = vmatpush1.xpose.msra.mxu0 0.0
    %2675 = vmatprep.subr.mxu0 0.0
    %2676 = vmatpush1.xpose.msra.mxu0 0.0
    %2677 = vmatprep.subr.mxu0 0.0
    %2678 = vmatpush1.xpose.msra.mxu0 0.0
    %2679 = vmatprep.subr.mxu0 0.0
    %2680 = vmatpush1.xpose.msra.mxu0 0.0
    %2681 = vmatprep.subr.mxu0 0.0
    %2682 = vmatpush1.xpose.msra.mxu0 0.0
    %2683 = vmatprep.subr.mxu0 0.0
    %2684 = vmatpush1.xpose.msra.mxu0 0.0
    %2685 = vmatprep.subr.mxu0 0.0
    %2686 = vmatpush1.xpose.msra.mxu0 0.0
    %2687 = vmatprep.subr.mxu0 0.0
    %2688 = vmatpush1.xpose.msra.mxu0 0.0
    %2689 = vmatprep.subr.mxu0 0.0
    %2690 = vmatpush1.xpose.msra.mxu0 0.0
    %2691 = vmatprep.subr.mxu0 0.0
    %2692 = vmatpush1.xpose.msra.mxu0 0.0
    %2693 = vmatprep.subr.mxu0 0.0
    %2694 = vmatpush1.xpose.msra.mxu0 0.0
    %2695 = vmatprep.subr.mxu0 0.0
    %2696 = vmatpush1.xpose.msra.mxu0 0.0
    %2697 = vmatprep.subr.mxu0 0.0
    %2698 = vmatpush1.xpose.msra.mxu0 0.0
    %2699 = vmatprep.subr.mxu0 0.0
    %2700 = vmatpush1.xpose.msra.mxu0 0.0
    %2701 = vmatprep.subr.mxu0 0.0
    %2702 = vmatpush1.xpose.msra.mxu0 0.0
    %2703 = vmatprep.subr.mxu0 0.0
    %2704 = vmatpush1.xpose.msra.mxu0 0.0
    %2705 = vmatprep.subr.mxu0 0.0
    %2706 = vmatpush1.xpose.msra.mxu0 0.0
    %2707 = vmatprep.subr.mxu0 0.0
    %2708 = vmatpush1.xpose.msra.mxu0 0.0
    %2709 = vmatprep.subr.mxu0 0.0
    %2710 = vmatpush1.xpose.msra.mxu0 0.0
    %2711 = vmatprep.mubr.f32.mxu0 0.0
    %2712 = vmatmul.mubr.f32.gmra.mrb[0].mxu0 %v2642
    %v2713 = vpop.f32.mrb[0].mxu0
    %v2714 = vadd.f32 0.0, %v2713
    %v2715 = vpop.f32.mrb[0].mxu0
    %2716 = vdwg.mxu0
    %v2717 = vsel %vm295, %v2714, -inf
    %2718 = vmax.xlane.f32.xlu0 %v2717
    %v2719 = vpop.xlane.xlu0 %2718
    %v2720 = vsub.f32 %v2714, %v2719
    %v2721 = vmul.f32 %v2720, 1.442695
    %v2722 = vpow.pop %v2721
    %v2723 = vsel %vm295, %v2722, 0.0
    %2724 = vadd.xlane.f32.xlu0 %v2723
    %v2725 = vpop.xlane.xlu0 %2724
    %v2726 = vrcp.pop %v2725
    %v2727 = vmul.f32 %v2722, %v2726
    %2728 = vrot.lane.b32.xlu0 %v1965, 96
    %v2729 = vpop.permute.xlu0 %2728
    %v2732 = vsel %vm295, %v2727, 0
    %2734 = vmatprep.subr.mxu0 0.0
    %2735 = vmatpush1.msra.mxu0 %v2729
    %2736 = vmatprep.subr.mxu0 0.0
    %2737 = vmatpush1.msra.mxu0 0.0
    %2738 = vmatprep.subr.mxu0 0.0
    %2739 = vmatpush1.msra.mxu0 0.0
    %2740 = vmatprep.subr.mxu0 0.0
    %2741 = vmatpush1.msra.mxu0 0.0
    %2742 = vmatprep.subr.mxu0 0.0
    %2743 = vmatpush1.msra.mxu0 0.0
    %2744 = vmatprep.subr.mxu0 0.0
    %2745 = vmatpush1.msra.mxu0 0.0
    %2746 = vmatprep.subr.mxu0 0.0
    %2747 = vmatpush1.msra.mxu0 0.0
    %2748 = vmatprep.subr.mxu0 0.0
    %2749 = vmatpush1.msra.mxu0 0.0
    %2750 = vmatprep.subr.mxu0 0.0
    %2751 = vmatpush1.msra.mxu0 0.0
    %2752 = vmatprep.subr.mxu0 0.0
    %2753 = vmatpush1.msra.mxu0 0.0
    %2754 = vmatprep.subr.mxu0 0.0
    %2755 = vmatpush1.msra.mxu0 0.0
    %2756 = vmatprep.subr.mxu0 0.0
    %2757 = vmatpush1.msra.mxu0 0.0
    %2758 = vmatprep.subr.mxu0 0.0
    %2759 = vmatpush1.msra.mxu0 0.0
    %2760 = vmatprep.subr.mxu0 0.0
    %2761 = vmatpush1.msra.mxu0 0.0
    %2762 = vmatprep.subr.mxu0 0.0
    %2763 = vmatpush1.msra.mxu0 0.0
    %2764 = vmatprep.subr.mxu0 0.0
    %2765 = vmatpush1.msra.mxu0 0.0
    %2766 = vmatprep.subr.mxu0 0.0
    %2767 = vmatpush1.msra.mxu0 0.0
    %2768 = vmatprep.subr.mxu0 0.0
    %2769 = vmatpush1.msra.mxu0 0.0
    %2770 = vmatprep.subr.mxu0 0.0
    %2771 = vmatpush1.msra.mxu0 0.0
    %2772 = vmatprep.subr.mxu0 0.0
    %2773 = vmatpush1.msra.mxu0 0.0
    %2774 = vmatprep.subr.mxu0 0.0
    %2775 = vmatpush1.msra.mxu0 0.0
    %2776 = vmatprep.subr.mxu0 0.0
    %2777 = vmatpush1.msra.mxu0 0.0
    %2778 = vmatprep.subr.mxu0 0.0
    %2779 = vmatpush1.msra.mxu0 0.0
    %2780 = vmatprep.subr.mxu0 0.0
    %2781 = vmatpush1.msra.mxu0 0.0
    %2782 = vmatprep.subr.mxu0 0.0
    %2783 = vmatpush1.msra.mxu0 0.0
    %2784 = vmatprep.subr.mxu0 0.0
    %2785 = vmatpush1.msra.mxu0 0.0
    %2786 = vmatprep.subr.mxu0 0.0
    %2787 = vmatpush1.msra.mxu0 0.0
    %2788 = vmatprep.subr.mxu0 0.0
    %2789 = vmatpush1.msra.mxu0 0.0
    %2790 = vmatprep.subr.mxu0 0.0
    %2791 = vmatpush1.msra.mxu0 0.0
    %2792 = vmatprep.subr.mxu0 0.0
    %2793 = vmatpush1.msra.mxu0 0.0
    %2794 = vmatprep.subr.mxu0 0.0
    %2795 = vmatpush1.msra.mxu0 0.0
    %2796 = vmatprep.subr.mxu0 0.0
    %2797 = vmatpush1.msra.mxu0 0.0
    %2798 = vmatprep.mubr.f32.mxu0 0.0
    %2799 = vmatmul.mubr.f32.gmra.mrb[0].mxu0 %v2732
    %v2800 = vpop.f32.mrb[0].mxu0
    %v2801 = vadd.f32 0.0, %v2800
    %v2802 = vpop.f32.mrb[0].mxu0
    %2803 = vdwg.mxu0
    %2804 = vrot.lane.b32.xlu0 %v1875, 120
    %v2805 = vpop.permute.xlu0 %2804
    %2806 = vrot.lane.b32.xlu0 %v1965, 120
    %v2807 = vpop.permute.xlu0 %2806
    %v2808 = vsel %vm295, %v2805, 0
    %v2810 = vsel %vm295, %v2807, 0
    %2812 = vmatprep.subr.mxu0 0.0
    %2813 = vmatpush1.xpose.msra.mxu0 %v2810
    %2814 = vmatprep.subr.mxu0 0.0
    %2815 = vmatpush1.xpose.msra.mxu0 0.0
    %2816 = vmatprep.subr.mxu0 0.0
    %2817 = vmatpush1.xpose.msra.mxu0 0.0
    %2818 = vmatprep.subr.mxu0 0.0
    %2819 = vmatpush1.xpose.msra.mxu0 0.0
    %2820 = vmatprep.subr.mxu0 0.0
    %2821 = vmatpush1.xpose.msra.mxu0 0.0
    %2822 = vmatprep.subr.mxu0 0.0
    %2823 = vmatpush1.xpose.msra.mxu0 0.0
    %2824 = vmatprep.subr.mxu0 0.0
    %2825 = vmatpush1.xpose.msra.mxu0 0.0
    %2826 = vmatprep.subr.mxu0 0.0
    %2827 = vmatpush1.xpose.msra.mxu0 0.0
    %2828 = vmatprep.subr.mxu0 0.0
    %2829 = vmatpush1.xpose.msra.mxu0 0.0
    %2830 = vmatprep.subr.mxu0 0.0
    %2831 = vmatpush1.xpose.msra.mxu0 0.0
    %2832 = vmatprep.subr.mxu0 0.0
    %2833 = vmatpush1.xpose.msra.mxu0 0.0
    %2834 = vmatprep.subr.mxu0 0.0
    %2835 = vmatpush1.xpose.msra.mxu0 0.0
    %2836 = vmatprep.subr.mxu0 0.0
    %2837 = vmatpush1.xpose.msra.mxu0 0.0
    %2838 = vmatprep.subr.mxu0 0.0
    %2839 = vmatpush1.xpose.msra.mxu0 0.0
    %2840 = vmatprep.subr.mxu0 0.0
    %2841 = vmatpush1.xpose.msra.mxu0 0.0
    %2842 = vmatprep.subr.mxu0 0.0
    %2843 = vmatpush1.xpose.msra.mxu0 0.0
    %2844 = vmatprep.subr.mxu0 0.0
    %2845 = vmatpush1.xpose.msra.mxu0 0.0
    %2846 = vmatprep.subr.mxu0 0.0
    %2847 = vmatpush1.xpose.msra.mxu0 0.0
    %2848 = vmatprep.subr.mxu0 0.0
    %2849 = vmatpush1.xpose.msra.mxu0 0.0
    %2850 = vmatprep.subr.mxu0 0.0
    %2851 = vmatpush1.xpose.msra.mxu0 0.0
    %2852 = vmatprep.subr.mxu0 0.0
    %2853 = vmatpush1.xpose.msra.mxu0 0.0
    %2854 = vmatprep.subr.mxu0 0.0
    %2855 = vmatpush1.xpose.msra.mxu0 0.0
    %2856 = vmatprep.subr.mxu0 0.0
    %2857 = vmatpush1.xpose.msra.mxu0 0.0
    %2858 = vmatprep.subr.mxu0 0.0
    %2859 = vmatpush1.xpose.msra.mxu0 0.0
    %2860 = vmatprep.subr.mxu0 0.0
    %2861 = vmatpush1.xpose.msra.mxu0 0.0
    %2862 = vmatprep.subr.mxu0 0.0
    %2863 = vmatpush1.xpose.msra.mxu0 0.0
    %2864 = vmatprep.subr.mxu0 0.0
    %2865 = vmatpush1.xpose.msra.mxu0 0.0
    %2866 = vmatprep.subr.mxu0 0.0
    %2867 = vmatpush1.xpose.msra.mxu0 0.0
    %2868 = vmatprep.subr.mxu0 0.0
    %2869 = vmatpush1.xpose.msra.mxu0 0.0
    %2870 = vmatprep.subr.mxu0 0.0
    %2871 = vmatpush1.xpose.msra.mxu0 0.0
    %2872 = vmatprep.subr.mxu0 0.0
    %2873 = vmatpush1.xpose.msra.mxu0 0.0
    %2874 = vmatprep.subr.mxu0 0.0
    %2875 = vmatpush1.xpose.msra.mxu0 0.0
    %2876 = vmatprep.mubr.f32.mxu0 0.0
    %2877 = vmatmul.mubr.f32.gmra.mrb[0].mxu0 %v2808
    %v2878 = vpop.f32.mrb[0].mxu0
    %v2879 = vadd.f32 0.0, %v2878
    %v2880 = vpop.f32.mrb[0].mxu0
    %2881 = vdwg.mxu0
    %v2882 = vsel %vm295, %v2879, -inf
    %2883 = vmax.xlane.f32.xlu0 %v2882
    %v2884 = vpop.xlane.xlu0 %2883
    %v2885 = vsub.f32 %v2879, %v2884
    %v2886 = vmul.f32 %v2885, 1.442695
    %v2887 = vpow.pop %v2886
    %v2888 = vsel %vm295, %v2887, 0.0
    %2889 = vadd.xlane.f32.xlu0 %v2888
    %v2890 = vpop.xlane.xlu0 %2889
    %v2891 = vrcp.pop %v2890
    %v2892 = vmul.f32 %v2887, %v2891
    %2893 = vrot.lane.b32.xlu0 %v1965, 88
    %v2894 = vpop.permute.xlu0 %2893
    %v2897 = vsel %vm295, %v2892, 0
    %2899 = vmatprep.subr.mxu0 0.0
    %2900 = vmatpush1.msra.mxu0 %v2894
    %2901 = vmatprep.subr.mxu0 0.0
    %2902 = vmatpush1.msra.mxu0 0.0
    %2903 = vmatprep.subr.mxu0 0.0
    %2904 = vmatpush1.msra.mxu0 0.0
    %2905 = vmatprep.subr.mxu0 0.0
    %2906 = vmatpush1.msra.mxu0 0.0
    %2907 = vmatprep.subr.mxu0 0.0
    %2908 = vmatpush1.msra.mxu0 0.0
    %2909 = vmatprep.subr.mxu0 0.0
    %2910 = vmatpush1.msra.mxu0 0.0
    %2911 = vmatprep.subr.mxu0 0.0
    %2912 = vmatpush1.msra.mxu0 0.0
    %2913 = vmatprep.subr.mxu0 0.0
    %2914 = vmatpush1.msra.mxu0 0.0
    %2915 = vmatprep.subr.mxu0 0.0
    %2916 = vmatpush1.msra.mxu0 0.0
    %2917 = vmatprep.subr.mxu0 0.0
    %2918 = vmatpush1.msra.mxu0 0.0
    %2919 = vmatprep.subr.mxu0 0.0
    %2920 = vmatpush1.msra.mxu0 0.0
    %2921 = vmatprep.subr.mxu0 0.0
    %2922 = vmatpush1.msra.mxu0 0.0
    %2923 = vmatprep.subr.mxu0 0.0
    %2924 = vmatpush1.msra.mxu0 0.0
    %2925 = vmatprep.subr.mxu0 0.0
    %2926 = vmatpush1.msra.mxu0 0.0
    %2927 = vmatprep.subr.mxu0 0.0
    %2928 = vmatpush1.msra.mxu0 0.0
    %2929 = vmatprep.subr.mxu0 0.0
    %2930 = vmatpush1.msra.mxu0 0.0
    %2931 = vmatprep.subr.mxu0 0.0
    %2932 = vmatpush1.msra.mxu0 0.0
    %2933 = vmatprep.subr.mxu0 0.0
    %2934 = vmatpush1.msra.mxu0 0.0
    %2935 = vmatprep.subr.mxu0 0.0
    %2936 = vmatpush1.msra.mxu0 0.0
    %2937 = vmatprep.subr.mxu0 0.0
    %2938 = vmatpush1.msra.mxu0 0.0
    %2939 = vmatprep.subr.mxu0 0.0
    %2940 = vmatpush1.msra.mxu0 0.0
    %2941 = vmatprep.subr.mxu0 0.0
    %2942 = vmatpush1.msra.mxu0 0.0
    %2943 = vmatprep.subr.mxu0 0.0
    %2944 = vmatpush1.msra.mxu0 0.0
    %2945 = vmatprep.subr.mxu0 0.0
    %2946 = vmatpush1.msra.mxu0 0.0
    %2947 = vmatprep.subr.mxu0 0.0
    %2948 = vmatpush1.msra.mxu0 0.0
    %2949 = vmatprep.subr.mxu0 0.0
    %2950 = vmatpush1.msra.mxu0 0.0
    %2951 = vmatprep.subr.mxu0 0.0
    %2952 = vmatpush1.msra.mxu0 0.0
    %2953 = vmatprep.subr.mxu0 0.0
    %2954 = vmatpush1.msra.mxu0 0.0
    %2955 = vmatprep.subr.mxu0 0.0
    %2956 = vmatpush1.msra.mxu0 0.0
    %2957 = vmatprep.subr.mxu0 0.0
    %2958 = vmatpush1.msra.mxu0 0.0
    %2959 = vmatprep.subr.mxu0 0.0
    %2960 = vmatpush1.msra.mxu0 0.0
    %2961 = vmatprep.subr.mxu0 0.0
    %2962 = vmatpush1.msra.mxu0 0.0
    %2963 = vmatprep.mubr.f32.mxu0 0.0
    %2964 = vmatmul.mubr.f32.gmra.mrb[0].mxu0 %v2897
    %v2965 = vpop.f32.mrb[0].mxu0
    %v2966 = vadd.f32 0.0, %v2965
    %v2967 = vpop.f32.mrb[0].mxu0
    %2968 = vdwg.mxu0
    %2969 = vrot.lane.b32.xlu0 %v1875, 112
    %v2970 = vpop.permute.xlu0 %2969
    %2971 = vrot.lane.b32.xlu0 %v1965, 112
    %v2972 = vpop.permute.xlu0 %2971
    %v2973 = vsel %vm295, %v2970, 0
    %v2975 = vsel %vm295, %v2972, 0
    %2977 = vmatprep.subr.mxu0 0.0
    %2978 = vmatpush1.xpose.msra.mxu0 %v2975
    %2979 = vmatprep.subr.mxu0 0.0
    %2980 = vmatpush1.xpose.msra.mxu0 0.0
    %2981 = vmatprep.subr.mxu0 0.0
    %2982 = vmatpush1.xpose.msra.mxu0 0.0
    %2983 = vmatprep.subr.mxu0 0.0
    %2984 = vmatpush1.xpose.msra.mxu0 0.0
    %2985 = vmatprep.subr.mxu0 0.0
    %2986 = vmatpush1.xpose.msra.mxu0 0.0
    %2987 = vmatprep.subr.mxu0 0.0
    %2988 = vmatpush1.xpose.msra.mxu0 0.0
    %2989 = vmatprep.subr.mxu0 0.0
    %2990 = vmatpush1.xpose.msra.mxu0 0.0
    %2991 = vmatprep.subr.mxu0 0.0
    %2992 = vmatpush1.xpose.msra.mxu0 0.0
    %2993 = vmatprep.subr.mxu0 0.0
    %2994 = vmatpush1.xpose.msra.mxu0 0.0
    %2995 = vmatprep.subr.mxu0 0.0
    %2996 = vmatpush1.xpose.msra.mxu0 0.0
    %2997 = vmatprep.subr.mxu0 0.0
    %2998 = vmatpush1.xpose.msra.mxu0 0.0
    %2999 = vmatprep.subr.mxu0 0.0
    %3000 = vmatpush1.xpose.msra.mxu0 0.0
    %3001 = vmatprep.subr.mxu0 0.0
    %3002 = vmatpush1.xpose.msra.mxu0 0.0
    %3003 = vmatprep.subr.mxu0 0.0
    %3004 = vmatpush1.xpose.msra.mxu0 0.0
    %3005 = vmatprep.subr.mxu0 0.0
    %3006 = vmatpush1.xpose.msra.mxu0 0.0
    %3007 = vmatprep.subr.mxu0 0.0
    %3008 = vmatpush1.xpose.msra.mxu0 0.0
    %3009 = vmatprep.subr.mxu0 0.0
    %3010 = vmatpush1.xpose.msra.mxu0 0.0
    %3011 = vmatprep.subr.mxu0 0.0
    %3012 = vmatpush1.xpose.msra.mxu0 0.0
    %3013 = vmatprep.subr.mxu0 0.0
    %3014 = vmatpush1.xpose.msra.mxu0 0.0
    %3015 = vmatprep.subr.mxu0 0.0
    %3016 = vmatpush1.xpose.msra.mxu0 0.0
    %3017 = vmatprep.subr.mxu0 0.0
    %3018 = vmatpush1.xpose.msra.mxu0 0.0
    %3019 = vmatprep.subr.mxu0 0.0
    %3020 = vmatpush1.xpose.msra.mxu0 0.0
    %3021 = vmatprep.subr.mxu0 0.0
    %3022 = vmatpush1.xpose.msra.mxu0 0.0
    %3023 = vmatprep.subr.mxu0 0.0
    %3024 = vmatpush1.xpose.msra.mxu0 0.0
    %3025 = vmatprep.subr.mxu0 0.0
    %3026 = vmatpush1.xpose.msra.mxu0 0.0
    %3027 = vmatprep.subr.mxu0 0.0
    %3028 = vmatpush1.xpose.msra.mxu0 0.0
    %3029 = vmatprep.subr.mxu0 0.0
    %3030 = vmatpush1.xpose.msra.mxu0 0.0
    %3031 = vmatprep.subr.mxu0 0.0
    %3032 = vmatpush1.xpose.msra.mxu0 0.0
    %3033 = vmatprep.subr.mxu0 0.0
    %3034 = vmatpush1.xpose.msra.mxu0 0.0
    %3035 = vmatprep.subr.mxu0 0.0
    %3036 = vmatpush1.xpose.msra.mxu0 0.0
    %3037 = vmatprep.subr.mxu0 0.0
    %3038 = vmatpush1.xpose.msra.mxu0 0.0
    %3039 = vmatprep.subr.mxu0 0.0
    %3040 = vmatpush1.xpose.msra.mxu0 0.0
    %3041 = vmatprep.mubr.f32.mxu0 0.0
    %3042 = vmatmul.mubr.f32.gmra.mrb[0].mxu0 %v2973
    %v3043 = vpop.f32.mrb[0].mxu0
    %v3044 = vadd.f32 0.0, %v3043
    %v3045 = vpop.f32.mrb[0].mxu0
    %3046 = vdwg.mxu0
    %v3047 = vsel %vm295, %v3044, -inf
    %3048 = vmax.xlane.f32.xlu0 %v3047
    %v3049 = vpop.xlane.xlu0 %3048
    %v3050 = vsub.f32 %v3044, %v3049
    %v3051 = vmul.f32 %v3050, 1.442695
    %v3052 = vpow.pop %v3051
    %v3053 = vsel %vm295, %v3052, 0.0
    %3054 = vadd.xlane.f32.xlu0 %v3053
    %v3055 = vpop.xlane.xlu0 %3054
    %v3056 = vrcp.pop %v3055
    %v3057 = vmul.f32 %v3052, %v3056
    %3058 = vrot.lane.b32.xlu0 %v1965, 80
    %v3059 = vpop.permute.xlu0 %3058
    %v3062 = vsel %vm295, %v3057, 0
    %3064 = vmatprep.subr.mxu0 0.0
    %3065 = vmatpush1.msra.mxu0 %v3059
    %3066 = vmatprep.subr.mxu0 0.0
    %3067 = vmatpush1.msra.mxu0 0.0
    %3068 = vmatprep.subr.mxu0 0.0
    %3069 = vmatpush1.msra.mxu0 0.0
    %3070 = vmatprep.subr.mxu0 0.0
    %3071 = vmatpush1.msra.mxu0 0.0
    %3072 = vmatprep.subr.mxu0 0.0
    %3073 = vmatpush1.msra.mxu0 0.0
    %3074 = vmatprep.subr.mxu0 0.0
    %3075 = vmatpush1.msra.mxu0 0.0
    %3076 = vmatprep.subr.mxu0 0.0
    %3077 = vmatpush1.msra.mxu0 0.0
    %3078 = vmatprep.subr.mxu0 0.0
    %3079 = vmatpush1.msra.mxu0 0.0
    %3080 = vmatprep.subr.mxu0 0.0
    %3081 = vmatpush1.msra.mxu0 0.0
    %3082 = vmatprep.subr.mxu0 0.0
    %3083 = vmatpush1.msra.mxu0 0.0
    %3084 = vmatprep.subr.mxu0 0.0
    %3085 = vmatpush1.msra.mxu0 0.0
    %3086 = vmatprep.subr.mxu0 0.0
    %3087 = vmatpush1.msra.mxu0 0.0
    %3088 = vmatprep.subr.mxu0 0.0
    %3089 = vmatpush1.msra.mxu0 0.0
    %3090 = vmatprep.subr.mxu0 0.0
    %3091 = vmatpush1.msra.mxu0 0.0
    %3092 = vmatprep.subr.mxu0 0.0
    %3093 = vmatpush1.msra.mxu0 0.0
    %3094 = vmatprep.subr.mxu0 0.0
    %3095 = vmatpush1.msra.mxu0 0.0
    %3096 = vmatprep.subr.mxu0 0.0
    %3097 = vmatpush1.msra.mxu0 0.0
    %3098 = vmatprep.subr.mxu0 0.0
    %3099 = vmatpush1.msra.mxu0 0.0
    %3100 = vmatprep.subr.mxu0 0.0
    %3101 = vmatpush1.msra.mxu0 0.0
    %3102 = vmatprep.subr.mxu0 0.0
    %3103 = vmatpush1.msra.mxu0 0.0
    %3104 = vmatprep.subr.mxu0 0.0
    %3105 = vmatpush1.msra.mxu0 0.0
    %3106 = vmatprep.subr.mxu0 0.0
    %3107 = vmatpush1.msra.mxu0 0.0
    %3108 = vmatprep.subr.mxu0 0.0
    %3109 = vmatpush1.msra.mxu0 0.0
    %3110 = vmatprep.subr.mxu0 0.0
    %3111 = vmatpush1.msra.mxu0 0.0
    %3112 = vmatprep.subr.mxu0 0.0
    %3113 = vmatpush1.msra.mxu0 0.0
    %3114 = vmatprep.subr.mxu0 0.0
    %3115 = vmatpush1.msra.mxu0 0.0
    %3116 = vmatprep.subr.mxu0 0.0
    %3117 = vmatpush1.msra.mxu0 0.0
    %3118 = vmatprep.subr.mxu0 0.0
    %3119 = vmatpush1.msra.mxu0 0.0
    %3120 = vmatprep.subr.mxu0 0.0
    %3121 = vmatpush1.msra.mxu0 0.0
    %3122 = vmatprep.subr.mxu0 0.0
    %3123 = vmatpush1.msra.mxu0 0.0
    %3124 = vmatprep.subr.mxu0 0.0
    %3125 = vmatpush1.msra.mxu0 0.0
    %3126 = vmatprep.subr.mxu0 0.0
    %3127 = vmatpush1.msra.mxu0 0.0
    %3128 = vmatprep.mubr.f32.mxu0 0.0
    %3129 = vmatmul.mubr.f32.gmra.mrb[0].mxu0 %v3062
    %v3130 = vpop.f32.mrb[0].mxu0
    %v3131 = vadd.f32 0.0, %v3130
    %v3132 = vpop.f32.mrb[0].mxu0
    %3133 = vdwg.mxu0
    %3134 = vrot.lane.b32.xlu0 %v1875, 104
    %v3135 = vpop.permute.xlu0 %3134
    %3136 = vrot.lane.b32.xlu0 %v1965, 104
    %v3137 = vpop.permute.xlu0 %3136
    %v3138 = vsel %vm295, %v3135, 0
    %v3140 = vsel %vm295, %v3137, 0
    %3142 = vmatprep.subr.mxu0 0.0
    %3143 = vmatpush1.xpose.msra.mxu0 %v3140
    %3144 = vmatprep.subr.mxu0 0.0
    %3145 = vmatpush1.xpose.msra.mxu0 0.0
    %3146 = vmatprep.subr.mxu0 0.0
    %3147 = vmatpush1.xpose.msra.mxu0 0.0
    %3148 = vmatprep.subr.mxu0 0.0
    %3149 = vmatpush1.xpose.msra.mxu0 0.0
    %3150 = vmatprep.subr.mxu0 0.0
    %3151 = vmatpush1.xpose.msra.mxu0 0.0
    %3152 = vmatprep.subr.mxu0 0.0
    %3153 = vmatpush1.xpose.msra.mxu0 0.0
    %3154 = vmatprep.subr.mxu0 0.0
    %3155 = vmatpush1.xpose.msra.mxu0 0.0
    %3156 = vmatprep.subr.mxu0 0.0
    %3157 = vmatpush1.xpose.msra.mxu0 0.0
    %3158 = vmatprep.subr.mxu0 0.0
    %3159 = vmatpush1.xpose.msra.mxu0 0.0
    %3160 = vmatprep.subr.mxu0 0.0
    %3161 = vmatpush1.xpose.msra.mxu0 0.0
    %3162 = vmatprep.subr.mxu0 0.0
    %3163 = vmatpush1.xpose.msra.mxu0 0.0
    %3164 = vmatprep.subr.mxu0 0.0
    %3165 = vmatpush1.xpose.msra.mxu0 0.0
    %3166 = vmatprep.subr.mxu0 0.0
    %3167 = vmatpush1.xpose.msra.mxu0 0.0
    %3168 = vmatprep.subr.mxu0 0.0
    %3169 = vmatpush1.xpose.msra.mxu0 0.0
    %3170 = vmatprep.subr.mxu0 0.0
    %3171 = vmatpush1.xpose.msra.mxu0 0.0
    %3172 = vmatprep.subr.mxu0 0.0
    %3173 = vmatpush1.xpose.msra.mxu0 0.0
    %3174 = vmatprep.subr.mxu0 0.0
    %3175 = vmatpush1.xpose.msra.mxu0 0.0
    %3176 = vmatprep.subr.mxu0 0.0
    %3177 = vmatpush1.xpose.msra.mxu0 0.0
    %3178 = vmatprep.subr.mxu0 0.0
    %3179 = vmatpush1.xpose.msra.mxu0 0.0
    %3180 = vmatprep.subr.mxu0 0.0
    %3181 = vmatpush1.xpose.msra.mxu0 0.0
    %3182 = vmatprep.subr.mxu0 0.0
    %3183 = vmatpush1.xpose.msra.mxu0 0.0
    %3184 = vmatprep.subr.mxu0 0.0
    %3185 = vmatpush1.xpose.msra.mxu0 0.0
    %3186 = vmatprep.subr.mxu0 0.0
    %3187 = vmatpush1.xpose.msra.mxu0 0.0
    %3188 = vmatprep.subr.mxu0 0.0
    %3189 = vmatpush1.xpose.msra.mxu0 0.0
    %3190 = vmatprep.subr.mxu0 0.0
    %3191 = vmatpush1.xpose.msra.mxu0 0.0
    %3192 = vmatprep.subr.mxu0 0.0
    %3193 = vmatpush1.xpose.msra.mxu0 0.0
    %3194 = vmatprep.subr.mxu0 0.0
    %3195 = vmatpush1.xpose.msra.mxu0 0.0
    %3196 = vmatprep.subr.mxu0 0.0
    %3197 = vmatpush1.xpose.msra.mxu0 0.0
    %3198 = vmatprep.subr.mxu0 0.0
    %3199 = vmatpush1.xpose.msra.mxu0 0.0
    %3200 = vmatprep.subr.mxu0 0.0
    %3201 = vmatpush1.xpose.msra.mxu0 0.0
    %3202 = vmatprep.subr.mxu0 0.0
    %3203 = vmatpush1.xpose.msra.mxu0 0.0
    %3204 = vmatprep.subr.mxu0 0.0
    %3205 = vmatpush1.xpose.msra.mxu0 0.0
    %3206 = vmatprep.mubr.f32.mxu0 0.0
    %3207 = vmatmul.mubr.f32.gmra.mrb[0].mxu0 %v3138
    %v3208 = vpop.f32.mrb[0].mxu0
    %v3209 = vadd.f32 0.0, %v3208
    %v3210 = vpop.f32.mrb[0].mxu0
    %3211 = vdwg.mxu0
    %v3212 = vsel %vm295, %v3209, -inf
    %3213 = vmax.xlane.f32.xlu0 %v3212
    %v3214 = vpop.xlane.xlu0 %3213
    %v3215 = vsub.f32 %v3209, %v3214
    %v3216 = vmul.f32 %v3215, 1.442695
    %v3217 = vpow.pop %v3216
    %v3218 = vsel %vm295, %v3217, 0.0
    %3219 = vadd.xlane.f32.xlu0 %v3218
    %v3220 = vpop.xlane.xlu0 %3219
    %v3221 = vrcp.pop %v3220
    %v3222 = vmul.f32 %v3217, %v3221
    %3223 = vrot.lane.b32.xlu0 %v1965, 72
    %v3224 = vpop.permute.xlu0 %3223
    %v3227 = vsel %vm295, %v3222, 0
    %3229 = vmatprep.subr.mxu0 0.0
    %3230 = vmatpush1.msra.mxu0 %v3224
    %3231 = vmatprep.subr.mxu0 0.0
    %3232 = vmatpush1.msra.mxu0 0.0
    %3233 = vmatprep.subr.mxu0 0.0
    %3234 = vmatpush1.msra.mxu0 0.0
    %3235 = vmatprep.subr.mxu0 0.0
    %3236 = vmatpush1.msra.mxu0 0.0
    %3237 = vmatprep.subr.mxu0 0.0
    %3238 = vmatpush1.msra.mxu0 0.0
    %3239 = vmatprep.subr.mxu0 0.0
    %3240 = vmatpush1.msra.mxu0 0.0
    %3241 = vmatprep.subr.mxu0 0.0
    %3242 = vmatpush1.msra.mxu0 0.0
    %3243 = vmatprep.subr.mxu0 0.0
    %3244 = vmatpush1.msra.mxu0 0.0
    %3245 = vmatprep.subr.mxu0 0.0
    %3246 = vmatpush1.msra.mxu0 0.0
    %3247 = vmatprep.subr.mxu0 0.0
    %3248 = vmatpush1.msra.mxu0 0.0
    %3249 = vmatprep.subr.mxu0 0.0
    %3250 = vmatpush1.msra.mxu0 0.0
    %3251 = vmatprep.subr.mxu0 0.0
    %3252 = vmatpush1.msra.mxu0 0.0
    %3253 = vmatprep.subr.mxu0 0.0
    %3254 = vmatpush1.msra.mxu0 0.0
    %3255 = vmatprep.subr.mxu0 0.0
    %3256 = vmatpush1.msra.mxu0 0.0
    %3257 = vmatprep.subr.mxu0 0.0
    %3258 = vmatpush1.msra.mxu0 0.0
    %3259 = vmatprep.subr.mxu0 0.0
    %3260 = vmatpush1.msra.mxu0 0.0
    %3261 = vmatprep.subr.mxu0 0.0
    %3262 = vmatpush1.msra.mxu0 0.0
    %3263 = vmatprep.subr.mxu0 0.0
    %3264 = vmatpush1.msra.mxu0 0.0
    %3265 = vmatprep.subr.mxu0 0.0
    %3266 = vmatpush1.msra.mxu0 0.0
    %3267 = vmatprep.subr.mxu0 0.0
    %3268 = vmatpush1.msra.mxu0 0.0
    %3269 = vmatprep.subr.mxu0 0.0
    %3270 = vmatpush1.msra.mxu0 0.0
    %3271 = vmatprep.subr.mxu0 0.0
    %3272 = vmatpush1.msra.mxu0 0.0
    %3273 = vmatprep.subr.mxu0 0.0
    %3274 = vmatpush1.msra.mxu0 0.0
    %3275 = vmatprep.subr.mxu0 0.0
    %3276 = vmatpush1.msra.mxu0 0.0
    %3277 = vmatprep.subr.mxu0 0.0
    %3278 = vmatpush1.msra.mxu0 0.0
    %3279 = vmatprep.subr.mxu0 0.0
    %3280 = vmatpush1.msra.mxu0 0.0
    %3281 = vmatprep.subr.mxu0 0.0
    %3282 = vmatpush1.msra.mxu0 0.0
    %3283 = vmatprep.subr.mxu0 0.0
    %3284 = vmatpush1.msra.mxu0 0.0
    %3285 = vmatprep.subr.mxu0 0.0
    %3286 = vmatpush1.msra.mxu0 0.0
    %3287 = vmatprep.subr.mxu0 0.0
    %3288 = vmatpush1.msra.mxu0 0.0
    %3289 = vmatprep.subr.mxu0 0.0
    %3290 = vmatpush1.msra.mxu0 0.0
    %3291 = vmatprep.subr.mxu0 0.0
    %3292 = vmatpush1.msra.mxu0 0.0
    %3293 = vmatprep.mubr.f32.mxu0 0.0
    %3294 = vmatmul.mubr.f32.gmra.mrb[0].mxu0 %v3227
    %v3295 = vpop.f32.mrb[0].mxu0
    %v3296 = vadd.f32 0.0, %v3295
    %v3297 = vpop.f32.mrb[0].mxu0
    %3298 = vdwg.mxu0
    %3300 = vrot.lane.b32.xlu0 %v2966, 8
    %v3301 = vpop.permute.xlu0 %3300
    %3304 = vrot.lane.b32.xlu0 %v3131, 16
    %v3305 = vpop.permute.xlu0 %3304
    %3308 = vrot.lane.b32.xlu0 %v3296, 24
    %v3309 = vpop.permute.xlu0 %3308
    %v3311 = vsel %vm295, %v2801, %v3301
    %v3312 = vsel %vm966, %v3311, %v3305
    %v3313 = vsel %vm968, %v3312, %v3309
    %v3314 = vld [vmem:[#allocation2 + $0x20] sm:$0xff]
    %v3315 = vld [vmem:[#allocation2 + $0x50] sm:$0xff]
    %v3316 = vld [vmem:[#allocation2 + $0x80] sm:$0xff]
    %v3317 = vld [vmem:[#allocation2 + $0xb0] sm:$0xff]
    %v3318 = vld [vmem:[%s5 + $0x4] sm:$0x1]
    %v3320 = vlaneseq
    %v3321 = vshrl.u32 %v3320, 7
    %v3322 = vsub.s32 0, %v3321
    %v3323 = vrot.slane %v3318, %v3322
    %v3326 = vsel %vm210, %v2640, 0
    %v3329 = vsel %vm210, %v3313, 0
    %3331 = vmatprep.subr.mxu0 0.0
    %3332 = vmatpush1.msra.mxu0 %v3314
    %3333 = vmatprep.subr.mxu0 0.0
    %3334 = vmatpush1.msra.mxu0 %v3315
    %3335 = vmatprep.subr.mxu0 0.0
    %3336 = vmatpush1.msra.mxu0 %v3316
    %3337 = vmatprep.subr.mxu0 0.0
    %3338 = vmatpush1.msra.mxu0 %v3317
    %3339 = vmatprep.subr.mxu0 0.0
    %3340 = vmatpush1.msra.mxu0 0.0
    %3341 = vmatprep.subr.mxu0 0.0
    %3342 = vmatpush1.msra.mxu0 0.0
    %3343 = vmatprep.subr.mxu0 0.0
    %3344 = vmatpush1.msra.mxu0 0.0
    %3345 = vmatprep.subr.mxu0 0.0
    %3346 = vmatpush1.msra.mxu0 0.0
    %3347 = vmatprep.subr.mxu0 0.0
    %3348 = vmatpush1.msra.mxu0 0.0
    %3349 = vmatprep.subr.mxu0 0.0
    %3350 = vmatpush1.msra.mxu0 0.0
    %3351 = vmatprep.subr.mxu0 0.0
    %3352 = vmatpush1.msra.mxu0 0.0
    %3353 = vmatprep.subr.mxu0 0.0
    %3354 = vmatpush1.msra.mxu0 0.0
    %3355 = vmatprep.subr.mxu0 0.0
    %3356 = vmatpush1.msra.mxu0 0.0
    %3357 = vmatprep.subr.mxu0 0.0
    %3358 = vmatpush1.msra.mxu0 0.0
    %3359 = vmatprep.subr.mxu0 0.0
    %3360 = vmatpush1.msra.mxu0 0.0
    %3361 = vmatprep.subr.mxu0 0.0
    %3362 = vmatpush1.msra.mxu0 0.0
    %3363 = vmatprep.subr.mxu0 0.0
    %3364 = vmatpush1.msra.mxu0 0.0
    %3365 = vmatprep.subr.mxu0 0.0
    %3366 = vmatpush1.msra.mxu0 0.0
    %3367 = vmatprep.subr.mxu0 0.0
    %3368 = vmatpush1.msra.mxu0 0.0
    %3369 = vmatprep.subr.mxu0 0.0
    %3370 = vmatpush1.msra.mxu0 0.0
    %3371 = vmatprep.subr.mxu0 0.0
    %3372 = vmatpush1.msra.mxu0 0.0
    %3373 = vmatprep.subr.mxu0 0.0
    %3374 = vmatpush1.msra.mxu0 0.0
    %3375 = vmatprep.subr.mxu0 0.0
    %3376 = vmatpush1.msra.mxu0 0.0
    %3377 = vmatprep.subr.mxu0 0.0
    %3378 = vmatpush1.msra.mxu0 0.0
    %3379 = vmatprep.subr.mxu0 0.0
    %3380 = vmatpush1.msra.mxu0 0.0
    %3381 = vmatprep.subr.mxu0 0.0
    %3382 = vmatpush1.msra.mxu0 0.0
    %3383 = vmatprep.subr.mxu0 0.0
    %3384 = vmatpush1.msra.mxu0 0.0
    %3385 = vmatprep.subr.mxu0 0.0
    %3386 = vmatpush1.msra.mxu0 0.0
    %3387 = vmatprep.subr.mxu0 0.0
    %3388 = vmatpush1.msra.mxu0 0.0
    %3389 = vmatprep.subr.mxu0 0.0
    %3390 = vmatpush1.msra.mxu0 0.0
    %3391 = vmatprep.subr.mxu0 0.0
    %3392 = vmatpush1.msra.mxu0 0.0
    %3393 = vmatprep.subr.mxu0 0.0
    %3394 = vmatpush1.msra.mxu0 0.0
    %3395 = vmatprep.mubr.f32.mxu0 0.0
    %3396 = vmatmul.mubr.f32.gmra.mrb[0].mxu0 %v3326
    %v3397 = vpop.f32.mrb[0].mxu0
    %v3398 = vadd.f32 %v3323, %v3397
    %v3399 = vpop.f32.mrb[0].mxu0
    %3400 = vmatprep.mubr.f32.mxu0 0.0
    %3401 = vmatmul.mubr.f32.gmra.mrb[0].mxu0 %v3329
    %v3402 = vpop.f32.mrb[0].mxu0
    %v3403 = vadd.f32 %v3323, %v3402
    %v3404 = vpop.f32.mrb[0].mxu0
    %3405 = vdwg.mxu0
    %v3406 = vadd.f32 %v1782, %v3398
    %v3407 = vadd.f32 %v1783, %v3403
    %v3408 = vld [vmem:[%s5 + $0x9] sm:$0x1]
    %v3409 = vld [vmem:[%s5 + $0xa] sm:$0x1]
    %v3410 = vsel %vm210, %v3406, 0.0
    %3411 = vadd.xlane.f32.xlu0 %v3410
    %v3412 = vpop.xlane.xlu0 %3411
    %v3413 = vsel %vm210, %v3407, 0.0
    %3414 = vadd.xlane.f32.xlu0 %v3413
    %v3415 = vpop.xlane.xlu0 %3414
    %v3416 = vmul.f32 %v3412, %v1747
    %v3417 = vmul.f32 %v3415, %v1747
    %v3418 = vsub.f32 %v3406, %v3416
    %v3419 = vsub.f32 %v3407, %v3417
    %v3420 = vmul.f32 %v3418, %v3418
    %v3421 = vmul.f32 %v3419, %v3419
    %v3422 = vsel %vm210, %v3420, 0.0
    %3423 = vadd.xlane.f32.xlu0 %v3422
    %v3424 = vpop.xlane.xlu0 %3423
    %v3425 = vsel %vm210, %v3421, 0.0
    %3426 = vadd.xlane.f32.xlu0 %v3425
    %v3427 = vpop.xlane.xlu0 %3426
    %v3428 = vmul.f32 %v3424, %v1747
    %v3429 = vmul.f32 %v3427, %v1747
    %v3430 = vadd.f32 %v3428, 1e-05
    %v3431 = vadd.f32 %v3429, 1e-05
    %v3432 = vrsqrt.pop %v3430
    %v3433 = vrsqrt.pop %v3431
    %v3434 = vmul.f32 %v3418, %v3432
    %v3435 = vmul.f32 %v3419, %v3433
    %v3437 = vlaneseq
    %v3438 = vshrl.u32 %v3437, 7
    %v3439 = vsub.s32 0, %v3438
    %v3440 = vrot.slane %v3408, %v3439
    %v3442 = vmul.f32 %v3434, %v3440
    %v3443 = vmul.f32 %v3435, %v3440
    %v3445 = vlaneseq
    %v3446 = vshrl.u32 %v3445, 7
    %v3447 = vsub.s32 0, %v3446
    %v3448 = vrot.slane %v3409, %v3447
    %v3450 = vadd.f32 %v3442, %v3448
    %v3451 = vadd.f32 %v3443, %v3448
    %v3452 = vld [vmem:[#allocation2 + $0x28] sm:$0xff]
    %v3453 = vld [vmem:[#allocation2 + $0x58] sm:$0xff]
    %v3454 = vld [vmem:[#allocation2 + $0x88] sm:$0xff]
    %v3455 = vld [vmem:[#allocation2 + $0xb8] sm:$0xff]
    %v3456 = vld [vmem:[%s5 + $0x5] sm:$0x1]
    %v3458 = vlaneseq
    %v3459 = vshrl.u32 %v3458, 7
    %v3460 = vsub.s32 0, %v3459
    %v3461 = vrot.slane %v3456, %v3460
    %v3464 = vsel %vm210, %v3450, 0
    %v3467 = vsel %vm210, %v3451, 0
    %3469 = vmatprep.subr.mxu0 0.0
    %3470 = vmatpush1.msra.mxu0 %v3452
    %3471 = vmatprep.subr.mxu0 0.0
    %3472 = vmatpush1.msra.mxu0 %v3453
    %3473 = vmatprep.subr.mxu0 0.0
    %3474 = vmatpush1.msra.mxu0 %v3454
    %3475 = vmatprep.subr.mxu0 0.0
    %3476 = vmatpush1.msra.mxu0 %v3455
    %3477 = vmatprep.subr.mxu0 0.0
    %3478 = vmatpush1.msra.mxu0 0.0
    %3479 = vmatprep.subr.mxu0 0.0
    %3480 = vmatpush1.msra.mxu0 0.0
    %3481 = vmatprep.subr.mxu0 0.0
    %3482 = vmatpush1.msra.mxu0 0.0
    %3483 = vmatprep.subr.mxu0 0.0
    %3484 = vmatpush1.msra.mxu0 0.0
    %3485 = vmatprep.subr.mxu0 0.0
    %3486 = vmatpush1.msra.mxu0 0.0
    %3487 = vmatprep.subr.mxu0 0.0
    %3488 = vmatpush1.msra.mxu0 0.0
    %3489 = vmatprep.subr.mxu0 0.0
    %3490 = vmatpush1.msra.mxu0 0.0
    %3491 = vmatprep.subr.mxu0 0.0
    %3492 = vmatpush1.msra.mxu0 0.0
    %3493 = vmatprep.subr.mxu0 0.0
    %3494 = vmatpush1.msra.mxu0 0.0
    %3495 = vmatprep.subr.mxu0 0.0
    %3496 = vmatpush1.msra.mxu0 0.0
    %3497 = vmatprep.subr.mxu0 0.0
    %3498 = vmatpush1.msra.mxu0 0.0
    %3499 = vmatprep.subr.mxu0 0.0
    %3500 = vmatpush1.msra.mxu0 0.0
    %3501 = vmatprep.subr.mxu0 0.0
    %3502 = vmatpush1.msra.mxu0 0.0
    %3503 = vmatprep.subr.mxu0 0.0
    %3504 = vmatpush1.msra.mxu0 0.0
    %3505 = vmatprep.subr.mxu0 0.0
    %3506 = vmatpush1.msra.mxu0 0.0
    %3507 = vmatprep.subr.mxu0 0.0
    %3508 = vmatpush1.msra.mxu0 0.0
    %3509 = vmatprep.subr.mxu0 0.0
    %3510 = vmatpush1.msra.mxu0 0.0
    %3511 = vmatprep.subr.mxu0 0.0
    %3512 = vmatpush1.msra.mxu0 0.0
    %3513 = vmatprep.subr.mxu0 0.0
    %3514 = vmatpush1.msra.mxu0 0.0
    %3515 = vmatprep.subr.mxu0 0.0
    %3516 = vmatpush1.msra.mxu0 0.0
    %3517 = vmatprep.subr.mxu0 0.0
    %3518 = vmatpush1.msra.mxu0 0.0
    %3519 = vmatprep.subr.mxu0 0.0
    %3520 = vmatpush1.msra.mxu0 0.0
    %3521 = vmatprep.subr.mxu0 0.0
    %3522 = vmatpush1.msra.mxu0 0.0
    %3523 = vmatprep.subr.mxu0 0.0
    %3524 = vmatpush1.msra.mxu0 0.0
    %3525 = vmatprep.subr.mxu0 0.0
    %3526 = vmatpush1.msra.mxu0 0.0
    %3527 = vmatprep.subr.mxu0 0.0
    %3528 = vmatpush1.msra.mxu0 0.0
    %3529 = vmatprep.subr.mxu0 0.0
    %3530 = vmatpush1.msra.mxu0 0.0
    %3531 = vmatprep.subr.mxu0 0.0
    %3532 = vmatpush1.msra.mxu0 0.0
    %3533 = vmatprep.mubr.f32.mxu0 0.0
    %3534 = vmatmul.mubr.f32.gmra.mrb[0].mxu0 %v3464
    %v3535 = vpop.f32.mrb[0].mxu0
    %v3536 = vadd.f32 %v3461, %v3535
    %v3537 = vpop.f32.mrb[0].mxu0
    %3538 = vmatprep.mubr.f32.mxu0 0.0
    %3539 = vmatmul.mubr.f32.gmra.mrb[0].mxu0 %v3467
    %v3540 = vpop.f32.mrb[0].mxu0
    %v3541 = vadd.f32 %v3461, %v3540
    %v3542 = vpop.f32.mrb[0].mxu0
    %3543 = vdwg.mxu0
    %v3544 = vmul.f32 %v3536, 0.5
    %v3545 = vmul.f32 %v3541, 0.5
    %v3546 = vmul.f32 %v3536, %v3536
    %v3547 = vmul.f32 %v3541, %v3541
    %v3548 = vmul.f32 %v3546, %v3536
    %v3549 = vmul.f32 %v3547, %v3541
    %v3550 = vmul.f32 %v3548, 0.044715
    %v3551 = vmul.f32 %v3549, 0.044715
    %v3552 = vadd.f32 %v3536, %v3550
    %v3553 = vadd.f32 %v3541, %v3551
    %v3554 = vmul.f32 %v3552, 0.7978846
    %v3555 = vmul.f32 %v3553, 0.7978846
    %v3556 = vtanh.pop %v3554
    %v3557 = vtanh.pop %v3555
    %v3558 = vadd.f32 %v3556, 1.0
    %v3559 = vadd.f32 %v3557, 1.0
    %v3560 = vmul.f32 %v3544, %v3558
    %v3561 = vmul.f32 %v3545, %v3559
    %v3562 = vld [vmem:[%s4] sm:$0xff]
    %v3563 = vld [vmem:[%s4 + $0x8] sm:$0xff]
    %v3564 = vld [vmem:[%s4 + $0x10] sm:$0xff]
    %v3565 = vld [vmem:[%s4 + $0x18] sm:$0xff]
    %v3566 = vld [vmem:[%s4 + $0x20] sm:$0xff]
    %v3567 = vld [vmem:[%s4 + $0x28] sm:$0xff]
    %v3568 = vld [vmem:[%s4 + $0x30] sm:$0xff]
    %v3569 = vld [vmem:[%s4 + $0x38] sm:$0xff]
    %v3570 = vld [vmem:[%s5 + $0x6] sm:$0x1]
    %v3572 = vlaneseq
    %v3573 = vshrl.u32 %v3572, 7
    %v3574 = vsub.s32 0, %v3573
    %v3575 = vrot.slane %v3570, %v3574
    %vm3577 = vcmask 523264
    %v3579 = vsel %vm3577, %v3560, 0
    %v3582 = vsel %vm3577, %v3561, 0
    %3584 = vmatprep.subr.mxu0 0.0
    %3585 = vmatpush1.msra.mxu0 %v3562
    %3586 = vmatprep.subr.mxu0 0.0
    %3587 = vmatpush1.msra.mxu0 %v3563
    %3588 = vmatprep.subr.mxu0 0.0
    %3589 = vmatpush1.msra.mxu0 %v3564
    %3590 = vmatprep.subr.mxu0 0.0
    %3591 = vmatpush1.msra.mxu0 %v3565
    %3592 = vmatprep.subr.mxu0 0.0
    %3593 = vmatpush1.msra.mxu0 %v3566
    %3594 = vmatprep.subr.mxu0 0.0
    %3595 = vmatpush1.msra.mxu0 %v3567
    %3596 = vmatprep.subr.mxu0 0.0
    %3597 = vmatpush1.msra.mxu0 %v3568
    %3598 = vmatprep.subr.mxu0 0.0
    %3599 = vmatpush1.msra.mxu0 %v3569
    %3600 = vmatprep.subr.mxu0 0.0
    %3601 = vmatpush1.msra.mxu0 0.0
    %3602 = vmatprep.subr.mxu0 0.0
    %3603 = vmatpush1.msra.mxu0 0.0
    %3604 = vmatprep.subr.mxu0 0.0
    %3605 = vmatpush1.msra.mxu0 0.0
    %3606 = vmatprep.subr.mxu0 0.0
    %3607 = vmatpush1.msra.mxu0 0.0
    %3608 = vmatprep.subr.mxu0 0.0
    %3609 = vmatpush1.msra.mxu0 0.0
    %3610 = vmatprep.subr.mxu0 0.0
    %3611 = vmatpush1.msra.mxu0 0.0
    %3612 = vmatprep.subr.mxu0 0.0
    %3613 = vmatpush1.msra.mxu0 0.0
    %3614 = vmatprep.subr.mxu0 0.0
    %3615 = vmatpush1.msra.mxu0 0.0
    %3616 = vmatprep.subr.mxu0 0.0
    %3617 = vmatpush1.msra.mxu0 0.0
    %3618 = vmatprep.subr.mxu0 0.0
    %3619 = vmatpush1.msra.mxu0 0.0
    %3620 = vmatprep.subr.mxu0 0.0
    %3621 = vmatpush1.msra.mxu0 0.0
    %3622 = vmatprep.subr.mxu0 0.0
    %3623 = vmatpush1.msra.mxu0 0.0
    %3624 = vmatprep.subr.mxu0 0.0
    %3625 = vmatpush1.msra.mxu0 0.0
    %3626 = vmatprep.subr.mxu0 0.0
    %3627 = vmatpush1.msra.mxu0 0.0
    %3628 = vmatprep.subr.mxu0 0.0
    %3629 = vmatpush1.msra.mxu0 0.0
    %3630 = vmatprep.subr.mxu0 0.0
    %3631 = vmatpush1.msra.mxu0 0.0
    %3632 = vmatprep.subr.mxu0 0.0
    %3633 = vmatpush1.msra.mxu0 0.0
    %3634 = vmatprep.subr.mxu0 0.0
    %3635 = vmatpush1.msra.mxu0 0.0
    %3636 = vmatprep.subr.mxu0 0.0
    %3637 = vmatpush1.msra.mxu0 0.0
    %3638 = vmatprep.subr.mxu0 0.0
    %3639 = vmatpush1.msra.mxu0 0.0
    %3640 = vmatprep.subr.mxu0 0.0
    %3641 = vmatpush1.msra.mxu0 0.0
    %3642 = vmatprep.subr.mxu0 0.0
    %3643 = vmatpush1.msra.mxu0 0.0
    %3644 = vmatprep.subr.mxu0 0.0
    %3645 = vmatpush1.msra.mxu0 0.0
    %3646 = vmatprep.subr.mxu0 0.0
    %3647 = vmatpush1.msra.mxu0 0.0
    %3648 = vmatprep.mubr.f32.mxu0 0.0
    %3649 = vmatmul.mubr.f32.gmra.mrb[0].mxu0 %v3579
    %v3650 = vpop.f32.mrb[0].mxu0
    %v3651 = vadd.f32 %v3575, %v3650
    %v3652 = vpop.f32.mrb[0].mxu0
    %3653 = vmatprep.mubr.f32.mxu0 0.0
    %3654 = vmatmul.mubr.f32.gmra.mrb[0].mxu0 %v3582
    %v3655 = vpop.f32.mrb[0].mxu0
    %v3656 = vadd.f32 %v3575, %v3655
    %v3657 = vpop.f32.mrb[0].mxu0
    %3658 = vdwg.mxu0
    %v3659 = vadd.f32 %v3450, %v3651
    %v3660 = vadd.f32 %v3451, %v3656
    %v3661 = vld [vmem:[%s5 + $0xb] sm:$0x1]
    %v3662 = vld [vmem:[%s5 + $0xc] sm:$0x1]
    %v3663 = vsel %vm210, %v3659, 0.0
    %3664 = vadd.xlane.f32.xlu0 %v3663
    %v3665 = vpop.xlane.xlu0 %3664
    %v3666 = vsel %vm210, %v3660, 0.0
    %3667 = vadd.xlane.f32.xlu0 %v3666
    %v3668 = vpop.xlane.xlu0 %3667
    %v3669 = vmul.f32 %v3665, %v1747
    %v3670 = vmul.f32 %v3668, %v1747
    %v3671 = vsub.f32 %v3659, %v3669
    %v3672 = vsub.f32 %v3660, %v3670
    %v3673 = vmul.f32 %v3671, %v3671
    %v3674 = vmul.f32 %v3672, %v3672
    %v3675 = vsel %vm210, %v3673, 0.0
    %3676 = vadd.xlane.f32.xlu0 %v3675
    %v3677 = vpop.xlane.xlu0 %3676
    %v3678 = vsel %vm210, %v3674, 0.0
    %3679 = vadd.xlane.f32.xlu0 %v3678
    %v3680 = vpop.xlane.xlu0 %3679
    %v3681 = vmul.f32 %v3677, %v1747
    %v3682 = vmul.f32 %v3680, %v1747
    %v3683 = vadd.f32 %v3681, 1e-05
    %v3684 = vadd.f32 %v3682, 1e-05
    %v3685 = vrsqrt.pop %v3683
    %v3686 = vrsqrt.pop %v3684
    %v3687 = vmul.f32 %v3671, %v3685
    %v3688 = vmul.f32 %v3672, %v3686
    %v3690 = vlaneseq
    %v3691 = vshrl.u32 %v3690, 7
    %v3692 = vsub.s32 0, %v3691
    %v3693 = vrot.slane %v3661, %v3692
    %v3695 = vmul.f32 %v3687, %v3693
    %v3696 = vmul.f32 %v3688, %v3693
    %v3698 = vlaneseq
    %v3699 = vshrl.u32 %v3698, 7
    %v3700 = vsub.s32 0, %v3699
    %v3701 = vrot.slane %v3662, %v3700
    %v3703 = vadd.f32 %v3695, %v3701
    %v3704 = vadd.f32 %v3696, %v3701
    %v3706 = vcombine.high %v3703, %v3703
    %v3708 = vunpack.c.l.s4 1966171168
    %v3709 = vunpack.c.0.s8 %v3708
    %v3710 = vlaneseq
    %v3711 = vshrl.u32 %v3710, 7
    %v3712 = vsub.s32 %v3709, %v3711
    %v3713 = vrot.slane %v3703, %v3712
    %v3715 = vunpack.c.l.s4 1966171168
    %v3716 = vunpack.c.0.s8 %v3715
    %v3717 = vlaneseq
    %v3718 = vshrl.u32 %v3717, 7
    %v3719 = vsub.s32 %v3716, %v3718
    %v3720 = vrot.slane %v3706, %v3719
    %v3721 = vcombine.high %v3713, %v3713
    %v3722 = vcombine.high %v3720, %v3720
    %v3724 = vunpack.c.l.s4 1966171168
    %v3725 = vunpack.c.0.s8 %v3724
    %v3726 = vlaneseq
    %v3727 = vshrl.u32 %v3726, 7
    %v3728 = vsub.s32 %v3725, %v3727
    %v3729 = vrot.slane %v3713, %v3728
    %v3731 = vunpack.c.l.s4 1966171168
    %v3732 = vunpack.c.0.s8 %v3731
    %v3733 = vlaneseq
    %v3734 = vshrl.u32 %v3733, 7
    %v3735 = vsub.s32 %v3732, %v3734
    %v3736 = vrot.slane %v3720, %v3735
    %v3738 = vunpack.c.l.s4 1966171168
    %v3739 = vunpack.c.0.s8 %v3738
    %v3740 = vlaneseq
    %v3741 = vshrl.u32 %v3740, 7
    %v3742 = vsub.s32 %v3739, %v3741
    %v3743 = vrot.slane %v3721, %v3742
    %v3745 = vunpack.c.l.s4 1966171168
    %v3746 = vunpack.c.0.s8 %v3745
    %v3747 = vlaneseq
    %v3748 = vshrl.u32 %v3747, 7
    %v3749 = vsub.s32 %v3746, %v3748
    %v3750 = vrot.slane %v3722, %v3749
    %v3751 = vcombine.high %v3729, %v3729
    %v3752 = vcombine.high %v3736, %v3736
    %v3753 = vcombine.high %v3743, %v3743
    %v3754 = vcombine.high %v3750, %v3750
    %vm3763 = vcmask 253952
    %3764 = vst.msk [vmem:[#allocation5] sm:$0x1] %vm3763, %v3729
    %3765 = vst.msk [vmem:[#allocation5 + $0x2] sm:$0x1] %vm3763, %v3743
    %3766 = vst.msk [vmem:[#allocation5 + $0x4] sm:$0x1] %vm3763, %v3751
    %3767 = vst.msk [vmem:[#allocation5 + $0x6] sm:$0x1] %vm3763, %v3753
    %3768 = vst.msk [vmem:[#allocation5 + $0x8] sm:$0x1] %vm3763, %v3736
    %3769 = vst.msk [vmem:[#allocation5 + $0xa] sm:$0x1] %vm3763, %v3750
    %3770 = vst.msk [vmem:[#allocation5 + $0xc] sm:$0x1] %vm3763, %v3752
    %3771 = vst.msk [vmem:[#allocation5 + $0xe] sm:$0x1] %vm3763, %v3754
    %v3773 = vcombine.high %v3704, %v3704
    %v3775 = vunpack.c.l.s4 1966171168
    %v3776 = vunpack.c.0.s8 %v3775
    %v3777 = vlaneseq
    %v3778 = vshrl.u32 %v3777, 7
    %v3779 = vsub.s32 %v3776, %v3778
    %v3780 = vrot.slane %v3704, %v3779
    %v3782 = vunpack.c.l.s4 1966171168
    %v3783 = vunpack.c.0.s8 %v3782
    %v3784 = vlaneseq
    %v3785 = vshrl.u32 %v3784, 7
    %v3786 = vsub.s32 %v3783, %v3785
    %v3787 = vrot.slane %v3773, %v3786
    %v3788 = vcombine.high %v3780, %v3780
    %v3789 = vcombine.high %v3787, %v3787
    %v3791 = vunpack.c.l.s4 1966171168
    %v3792 = vunpack.c.0.s8 %v3791
    %v3793 = vlaneseq
    %v3794 = vshrl.u32 %v3793, 7
    %v3795 = vsub.s32 %v3792, %v3794
    %v3796 = vrot.slane %v3780, %v3795
    %v3798 = vunpack.c.l.s4 1966171168
    %v3799 = vunpack.c.0.s8 %v3798
    %v3800 = vlaneseq
    %v3801 = vshrl.u32 %v3800, 7
    %v3802 = vsub.s32 %v3799, %v3801
    %v3803 = vrot.slane %v3787, %v3802
    %v3805 = vunpack.c.l.s4 1966171168
    %v3806 = vunpack.c.0.s8 %v3805
    %v3807 = vlaneseq
    %v3808 = vshrl.u32 %v3807, 7
    %v3809 = vsub.s32 %v3806, %v3808
    %v3810 = vrot.slane %v3788, %v3809
    %v3812 = vunpack.c.l.s4 1966171168
    %v3813 = vunpack.c.0.s8 %v3812
    %v3814 = vlaneseq
    %v3815 = vshrl.u32 %v3814, 7
    %v3816 = vsub.s32 %v3813, %v3815
    %v3817 = vrot.slane %v3789, %v3816
    %v3818 = vcombine.high %v3796, %v3796
    %v3819 = vcombine.high %v3803, %v3803
    %v3820 = vcombine.high %v3810, %v3810
    %v3821 = vcombine.high %v3817, %v3817
    %3830 = vst.msk [vmem:[#allocation5 + $0x1] sm:$0x1] %vm3763, %v3796
    %3831 = vst.msk [vmem:[#allocation5 + $0x3] sm:$0x1] %vm3763, %v3810
    %3832 = vst.msk [vmem:[#allocation5 + $0x5] sm:$0x1] %vm3763, %v3818
    %3833 = vst.msk [vmem:[#allocation5 + $0x7] sm:$0x1] %vm3763, %v3820
    %3834 = vst.msk [vmem:[#allocation5 + $0x9] sm:$0x1] %vm3763, %v3803
    %3835 = vst.msk [vmem:[#allocation5 + $0xb] sm:$0x1] %vm3763, %v3817
    %3836 = vst.msk [vmem:[#allocation5 + $0xd] sm:$0x1] %vm3763, %v3819
    %3837 = vst.msk [vmem:[#allocation5 + $0xf] sm:$0x1] %vm3763, %v3821
    // Predicated region
    $region30: #{tpu_custom_call.1} parent=1 // pred_check
      _
    $region31: #{tpu_custom_call.1} parent=1 // pred_check_branch
      %3839 = sbr.rel (0) target = $region33
    $region32: #{tpu_custom_call.1} parent=1 // pred_region
      %s3841 = ssub.s32 256, 256
      %3842 = vsyncadd [#allocation4], %s3841
      %s3843 = sshll.u32 [#allocation5], 4
      %s3844 = int_to_ptr.vmem [resolvable:$true] %s3843
      %3849 = dma.vmem_to_hbm [thread:$0]  %s3844, 256, %s6, [#allocation4], 32, 32, 2
    $region33: #{tpu_custom_call.1} parent=1 // pred_fallthru
      _
    // Predicated region
    $region34: #{tpu_custom_call.1} parent=1 // pred_check
      _
    $region35: #{tpu_custom_call.1} parent=1 // pred_check_branch
      %3851 = sbr.rel (0) target = $region37
    $region36: #{tpu_custom_call.1} parent=1 // pred_region
      %3852 = dma.done [#allocation4], 256
    $region37: #{tpu_custom_call.1} parent=1 // pred_fallthru
      _
    %3853 = vsyncpa [#allocation3], 1
    %3854 = vsyncpa [#allocation4], 1

</llo_original>
